<compile_context>
chip_gen: v7x
topology: tpu7x:2x2x1
jax: 0.10.0
libtpu: 0.0.40
codegen_flags: <defaults>
</compile_context>

<pallas_src>
import functools
import math

import jax
import jax.numpy as jnp
from jax.experimental import pallas as pl
from jax.experimental.pallas import tpu as pltpu


def _round_up(x: int, m: int) -> int:
    return (x + m - 1) // m * m


def _pick_row_tile(m: int, period=None):
    """Largest row tile (multiple of 8) that divides m (and `period`, if given),
    preferring >= 2 row blocks so both v7x TensorCores get work."""
    for t in (512, 256, 128, 64, 32, 16, 8):
        if m % t == 0 and (period is None or period % t == 0) and m // t >= 2:
            return t
    if period is None or period == m:
        return m          # single full-extent block (block == full dim is allowed)
    return None           # cannot satisfy the periodicity constraint


def _pick_col_tile(n: int, cap: int):
    if n <= cap:
        return n          # full-extent block: no padding needed
    for t in (cap, 512, 256, 128):
        if t <= cap and n % t == 0:
            return t
    return 128            # padding fallback (not hit at the shapes used here)


# --------------------------------------------------------------------------
# Fused LayerNorm over the channel axis, optionally emitting a second output
# with the (row-periodic) positional embedding added.
# --------------------------------------------------------------------------
def _layernorm_kernel(*refs, eps: float, has_pos: bool):
    if has_pos:
        x_ref, pos_ref, g_ref, b_ref, o_ref, o2_ref = refs
    else:
        x_ref, g_ref, b_ref, o_ref = refs
    x = x_ref[...].astype(jnp.float32)
    mu = jnp.mean(x, axis=-1, keepdims=True)
    d = x - mu
    var = jnp.mean(d * d, axis=-1, keepdims=True)
    y = d * jax.lax.rsqrt(var + eps)                       # EUP rsqrt + VPU mul
    y = y * g_ref[...].astype(jnp.float32) + b_ref[...].astype(jnp.float32)
    o_ref[...] = y.astype(o_ref.dtype)
    if has_pos:
        o2_ref[...] = (y + pos_ref[...].astype(jnp.float32)).astype(o2_ref.dtype)


def layernorm(x2d, gamma, beta, pos=None, seq_len=None, eps=1e-5):
    """LayerNorm over the last axis of x2d: (M, C).

    If `pos` (seq_len, C) is given, rows of x2d must be batch-major with period
    seq_len; returns (LN(x), LN(x) + pos) with the pos-add fused into the kernel.
    """
    M, C = x2d.shape
    g2, b2 = gamma.reshape(1, C), beta.reshape(1, C)

    tm = _pick_row_tile(M, seq_len if pos is not None else None)
    if pos is not None and tm is None:
        # Fallback: periodic fusion impossible for this L; do the add as XLA glue.
        y = layernorm(x2d, gamma, beta, eps=eps)
        qk = (y.reshape(-1, seq_len, C) + pos[None]).reshape(M, C)
        return y, qk

    grid = (M // tm,)
    args = [x2d]
    in_specs = [pl.BlockSpec((tm, C), lambda i: (i, 0))]
    if pos is not None:
        n_pos_blocks = seq_len // tm
        pos_map = (lambda i: (0, 0)) if n_pos_blocks == 1 else (
            lambda i: (i % n_pos_blocks, 0))
        args.append(pos)
        in_specs.append(pl.BlockSpec((tm, C), pos_map))
    args += [g2, b2]
    in_specs += [pl.BlockSpec((1, C), lambda i: (0, 0)),       # resident weights
                 pl.BlockSpec((1, C), lambda i: (0, 0))]

    if pos is not None:
        out_shape = (jax.ShapeDtypeStruct((M, C), x2d.dtype),
                     jax.ShapeDtypeStruct((M, C), x2d.dtype))
        out_specs = [pl.BlockSpec((tm, C), lambda i: (i, 0)),
                     pl.BlockSpec((tm, C), lambda i: (i, 0))]
    else:
        out_shape = jax.ShapeDtypeStruct((M, C), x2d.dtype)
        out_specs = pl.BlockSpec((tm, C), lambda i: (i, 0))

    kernel = functools.partial(_layernorm_kernel, eps=eps, has_pos=pos is not None)
    return pl.pallas_call(
        kernel,
        out_shape=out_shape,
        grid_spec=pltpu.PrefetchScalarGridSpec(
            num_scalar_prefetch=0, grid=grid,
            in_specs=in_specs, out_specs=out_specs),
        compiler_params=pltpu.CompilerParams(dimension_semantics=("parallel",)),
    )(*args)


# --------------------------------------------------------------------------
# Tiled matmul (bf16 MXU, f32 accumulator) with fused bias / ReLU /
# channel-LayerNorm / residual epilogue.
# --------------------------------------------------------------------------
def _matmul_kernel(*refs, nk: int, activation, has_residual: bool,
                   has_ln: bool, ln_eps: float):
    it = iter(refs)
    x_ref, w_ref, b_ref = next(it), next(it), next(it)
    g_ref = bln_ref = res_ref = None
    if has_ln:
        g_ref, bln_ref = next(it), next(it)
    if has_residual:
        res_ref = next(it)
    o_ref, acc_ref = next(it), next(it)

    k = pl.program_id(2)

    @pl.when(k == 0)
    def _():
        acc_ref[...] = jnp.zeros_like(acc_ref)

    acc_ref[...] += jnp.dot(x_ref[...].astype(w_ref.dtype), w_ref[...],
                            preferred_element_type=jnp.float32)

    @pl.when(k == nk - 1)
    def _():
        y = acc_ref[...] + b_ref[...].astype(jnp.float32)
        if activation == "relu":
            y = jnp.maximum(y, 0.0)
        if has_ln:                               # LayerNorm over the N (channel) axis
            mu = jnp.mean(y, axis=-1, keepdims=True)
            d = y - mu
            var = jnp.mean(d * d, axis=-1, keepdims=True)
            y = d * jax.lax.rsqrt(var + ln_eps)
            y = (y * g_ref[...].astype(jnp.float32)
                 + bln_ref[...].astype(jnp.float32))
        if has_residual:
            y = y + res_ref[...].astype(jnp.float32)
        o_ref[...] = y.astype(o_ref.dtype)


def linear(x, w, b, residual=None, activation=None, ln_params=None, ln_eps=1e-5):
    """y = [residual +] [LN]( act(x @ w + b) ), all fused in one kernel.

    x: (M, K) activations (cast to w.dtype for the MXU inside the kernel).
    w: (K, N) weights (pass bf16 for bf16 MXU matmuls with f32 accumulation).
    ln_params: optional (gamma, beta) -> LayerNorm over the full N axis applied
               before the residual add (N must fit in a single output tile).
    """
    M, K = x.shape
    K2, N = w.shape
    assert K == K2

    tm = _pick_row_tile(M)
    tn = N if ln_params is not None else _pick_col_tile(N, 512)
    tk = _pick_col_tile(K, 1024)
    Mp, Kp, Np = _round_up(M, tm), _round_up(K, tk), _round_up(N, tn)
    if ln_params is not None:
        assert Np == N and tn == N, "LN epilogue needs the full channel axis in one tile"

    # Padding fallback (not hit for the aligned shapes used here).
    xp = x if (Mp == M and Kp == K) else jnp.pad(x, ((0, Mp - M), (0, Kp - K)))
    wp = w if (Kp == K and Np == N) else jnp.pad(w, ((0, Kp - K), (0, Np - N)))
    bp = (b if Np == N else jnp.pad(b, (0, Np - N))).reshape(1, Np)

    nk = Kp // tk
    args = [xp, wp, bp]
    in_specs = [
        pl.BlockSpec((tm, tk), lambda i, j, k: (i, k)),
        pl.BlockSpec((tk, tn), lambda i, j, k: (k, j)),
        pl.BlockSpec((1, tn), lambda i, j, k: (0, j)),
    ]
    if ln_params is not None:
        g, bln = ln_params
        args += [g.reshape(1, N), bln.reshape(1, N)]
        in_specs += [pl.BlockSpec((1, tn), lambda i, j, k: (0, j)),
                     pl.BlockSpec((1, tn), lambda i, j, k: (0, j))]
    if residual is not None:
        rp = residual if (Mp == M and Np == N) else jnp.pad(
            residual, ((0, Mp - M), (0, Np - N)))
        args.append(rp)
        in_specs.append(pl.BlockSpec((tm, tn), lambda i, j, k: (i, j)))

    kernel = functools.partial(
        _matmul_kernel, nk=nk, activation=activation,
        has_residual=residual is not None, has_ln=ln_params is not None,
        ln_eps=ln_eps)
    out = pl.pallas_call(
        kernel,
        out_shape=jax.ShapeDtypeStruct((Mp, Np), x.dtype),
        grid_spec=pltpu.PrefetchScalarGridSpec(
            num_scalar_prefetch=0,
            grid=(Mp // tm, Np // tn, nk),
            in_specs=in_specs,
            out_specs=pl.BlockSpec((tm, tn), lambda i, j, k: (i, j)),
            scratch_shapes=[pltpu.VMEM((tm, tn), jnp.float32)]),
        compiler_params=pltpu.CompilerParams(
            dimension_semantics=("parallel", "parallel", "arbitrary")),
    )(*args)
    if Mp != M or Np != N:
        out = out[:M, :N]
    return out


# --------------------------------------------------------------------------
# Softmax attention; all heads of one batch element per grid step.
# --------------------------------------------------------------------------
def _attn_kernel(q_ref, k_ref, v_ref, o_ref, *, scale: float, mxu_dtype):
    q = (q_ref[...].astype(jnp.float32) * scale).astype(mxu_dtype)  # scale Q, not S
    kk = k_ref[...].astype(mxu_dtype)
    v = v_ref[...].astype(mxu_dtype)
    # (H, L, D) x (H, M, D) -> (H, L, M): contract last dims, no K transpose.
    s = jax.lax.dot_general(q, kk, (((2,), (2,)), ((0,), (0,))),
                            preferred_element_type=jnp.float32)
    m = jnp.max(s, axis=-1, keepdims=True)
    p = jnp.exp(s - m)
    l = jnp.sum(p, axis=-1, keepdims=True)
    o = jax.lax.dot_general(p.astype(mxu_dtype), v, (((2,), (1,)), ((0,), (0,))),
                            preferred_element_type=jnp.float32)
    o_ref[...] = (o * pl.reciprocal(l, approx=True)).astype(o_ref.dtype)


def attention(q, k, v, scale, heads_per_step, mxu_dtype=jnp.bfloat16):
    """q, k, v: (B*nhead, L, Dh) -> (B*nhead, L, Dh)."""
    BH, L, Dh = q.shape
    assert BH % heads_per_step == 0
    hb = heads_per_step
    spec = lambda: pl.BlockSpec((hb, L, Dh), lambda i: (i, 0, 0))
    kernel = functools.partial(_attn_kernel, scale=scale, mxu_dtype=mxu_dtype)
    return pl.pallas_call(
        kernel,
        out_shape=jax.ShapeDtypeStruct((BH, L, Dh), q.dtype),
        grid_spec=pltpu.PrefetchScalarGridSpec(
            num_scalar_prefetch=0, grid=(BH // hb,),
            in_specs=[spec(), spec(), spec()], out_specs=spec()),
        compiler_params=pltpu.CompilerParams(dimension_semantics=("parallel",)),
    )(q, k, v)


# --------------------------------------------------------------------------
# 2D sinusoidal positional encoding (faithful port of TransformerDecoder.pos2d).
# --------------------------------------------------------------------------
def pos2d(d_model, height, width):
    if d_model % 4 != 0:
        raise ValueError("d_model must be divisible by 4, got %d" % d_model)
    half = d_model // 2
    div_term = jnp.exp(jnp.arange(0.0, half, 2.0) * -(math.log(10000.0) / half))
    pos_w = jnp.arange(0.0, width)[:, None]
    pos_h = jnp.arange(0.0, height)[:, None]
    pe = jnp.zeros((d_model, height, width), dtype=jnp.float32)
    shape = (half // 2, height, width)
    sw = jnp.sin(pos_w * div_term).T[:, None, :]
    cw = jnp.cos(pos_w * div_term).T[:, None, :]
    sh = jnp.sin(pos_h * div_term).T[:, :, None]
    ch = jnp.cos(pos_h * div_term).T[:, :, None]
    pe = pe.at[0:half:2].set(jnp.broadcast_to(sw, shape))
    pe = pe.at[1:half:2].set(jnp.broadcast_to(cw, shape))
    pe = pe.at[half::2].set(jnp.broadcast_to(sh, shape))
    pe = pe.at[half + 1::2].set(jnp.broadcast_to(ch, shape))
    return pe.reshape(d_model, 1, height * width).transpose(2, 1, 0)  # (HW, 1, C)


# --------------------------------------------------------------------------
# Decoder forward (Pallas-backed).
# --------------------------------------------------------------------------
def _prepare_layer_params(params, mxu_dtype=jnp.bfloat16):
    """One-time packing: fuse Wq|Wk into a lane-dense (C, 2C) weight and cast all
    matmul weights to the MXU dtype (bf16: faster MXU + half the weight DMA)."""
    prepped = []
    for p in params["layers"]:
        prepped.append(dict(
            norm1_w=p["norm1_w"], norm1_b=p["norm1_b"],
            norm2_w=p["norm2_w"], norm2_b=p["norm2_b"],
            sa_norm_w=p["sa_norm_w"], sa_norm_b=p["sa_norm_b"],
            wqk=jnp.concatenate([p["wq"], p["wk"]], axis=1).astype(mxu_dtype),
            bqk=jnp.concatenate([p["bq"], p["bk"]]),
            wv=p["wv"].astype(mxu_dtype), bv=p["bv"],
            wo=p["wo"].astype(mxu_dtype), bo=p["bo"],
            w1=p["w1"].astype(mxu_dtype), b1=p["b1"],
            w2=p["w2"].astype(mxu_dtype), b2=p["b2"],
        ))
    return prepped


def decoder_layer_forward(x2d, pos_flat, p, B, L, C, nhead):
    M = B * L
    Dh = C // nhead

    # LN1 with the positional-embedding add fused (dual output: vis2, vis2+pos).
    vis2, qk = layernorm(x2d, p["norm1_w"], p["norm1_b"], pos=pos_flat, seq_len=L)

    # Fused Q|K projection (one lane-dense matmul) + V projection.
    qkp = linear(qk, p["wqk"], p["bqk"])                     # (M, 2C)
    v = linear(vis2, p["wv"], p["bv"])                       # (M, C)
    q, k = qkp[:, :C], qkp[:, C:]

    def to_heads(t):
        return t.reshape(B, L, nhead, Dh).transpose(0, 2, 1, 3).reshape(
            B * nhead, L, Dh)

    oh = attention(to_heads(q), to_heads(k), to_heads(v),
                   scale=1.0 / math.sqrt(Dh), heads_per_step=nhead)
    attn = oh.reshape(B, nhead, L, Dh).transpose(0, 2, 1, 3).reshape(M, C)

    # vis = vis + LN_sa(out_proj(attn))  (dropout1 == identity); LN + residual
    # are fused into the out-projection epilogue.
    x2d = linear(attn, p["wo"], p["bo"], residual=x2d,
                 ln_params=(p["sa_norm_w"], p["sa_norm_b"]))

    # FFN: ReLU fused into linear1, residual fused into linear2 (dropout2 == id).
    h = layernorm(x2d, p["norm2_w"], p["norm2_b"])
    h = linear(h, p["w1"], p["b1"], activation="relu")
    x2d = linear(h, p["w2"], p["b2"], residual=x2d)
    return x2d


def transformer_decoder_forward(vis, params, nhead=8):
    B, C, H, W = vis.shape
    L = H * W
    pos_flat = pos2d(C, H, W)[:, 0, :]                       # (L, C)
    # Batch-major token layout (B*L, C): row = b*L + l, so pos is row-periodic.
    x2d = vis.reshape(B, C, L).transpose(0, 2, 1).reshape(B * L, C)
    for p in _prepare_layer_params(params):
        x2d = decoder_layer_forward(x2d, pos_flat, p, B, L, C, nhead)
    out = layernorm(x2d, params["norm_w"], params["norm_b"])
    return out.reshape(B, L, C).transpose(0, 2, 1)           # (B, C, H*W)


# --------------------------------------------------------------------------
# Parameter init + pure-JAX reference (same precision policy as the kernels).
# --------------------------------------------------------------------------
def init_params(key, num_layers, d_model, dim_feedforward):
    layers = []
    s = 0.02
    C, F = d_model, dim_feedforward
    for lk in jax.random.split(key, num_layers):
        k = jax.random.split(lk, 8)
        layers.append(dict(
            norm1_w=jnp.ones((C,), jnp.float32), norm1_b=jnp.zeros((C,), jnp.float32),
            norm2_w=jnp.ones((C,), jnp.float32), norm2_b=jnp.zeros((C,), jnp.float32),
            sa_norm_w=jnp.ones((C,), jnp.float32), sa_norm_b=jnp.zeros((C,), jnp.float32),
            wq=jax.random.normal(k[0], (C, C), jnp.float32) * s, bq=jnp.zeros((C,), jnp.float32),
            wk=jax.random.normal(k[1], (C, C), jnp.float32) * s, bk=jnp.zeros((C,), jnp.float32),
            wv=jax.random.normal(k[2], (C, C), jnp.float32) * s, bv=jnp.zeros((C,), jnp.float32),
            wo=jax.random.normal(k[3], (C, C), jnp.float32) * s, bo=jnp.zeros((C,), jnp.float32),
            w1=jax.random.normal(k[4], (C, F), jnp.float32) * s,
            b1=jax.random.normal(k[5], (F,), jnp.float32) * s,
            w2=jax.random.normal(k[6], (F, C), jnp.float32) * s,
            b2=jax.random.normal(k[7], (C,), jnp.float32) * s,
        ))
    return dict(layers=layers,
                norm_w=jnp.ones((d_model,), jnp.float32),
                norm_b=jnp.zeros((d_model,), jnp.float32))


def reference_forward(vis, params, nhead=8, bf16_matmuls=True):
    """Pure-JAX reference with the same matmul precision policy as the kernels
    (bf16 MXU inputs, f32 accumulation) when bf16_matmuls=True."""
    hp = jax.lax.Precision.HIGHEST
    f32 = jnp.float32

    def rnd(t):
        return t.astype(jnp.bfloat16).astype(f32) if bf16_matmuls else t

    def mm(a, b):
        return jnp.dot(rnd(a), rnd(b), precision=hp)

    def ln(t, w, b, eps=1e-5):
        mu = jnp.mean(t, -1, keepdims=True)
        var = jnp.mean((t - mu) ** 2, -1, keepdims=True)
        return (t - mu) * jax.lax.rsqrt(var + eps) * w + b

    B, C, H, W = vis.shape
    L = H * W
    pos = pos2d(C, H, W)[:, 0, :]                            # (L, C)
    x = vis.reshape(B, C, L).transpose(0, 2, 1)              # (B, L, C)
    Dh = C // nhead
    scale = 1.0 / math.sqrt(Dh)

    for p in params["layers"]:
        x2 = ln(x, p["norm1_w"], p["norm1_b"])
        qk = x2 + pos[None, :, :]
        q = mm(qk.reshape(B * L, C), p["wq"]) + p["bq"]
        k = mm(qk.reshape(B * L, C), p["wk"]) + p["bk"]
        v = mm(x2.reshape(B * L, C), p["wv"]) + p["bv"]

        def heads(t):
            return t.reshape(B, L, nhead, Dh).transpose(0, 2, 1, 3)

        qh, kh, vh = heads(q), heads(k), heads(v)            # (B, h, L, Dh)
        s = jnp.einsum("bhld,bhmd->bhlm", rnd(qh * scale), rnd(kh), precision=hp)
        m = jnp.max(s, -1, keepdims=True)
        pnum = jnp.exp(s - m)
        denom = jnp.sum(pnum, -1, keepdims=True)
        o = jnp.einsum("bhlm,bhmd->bhld", rnd(pnum), rnd(vh), precision=hp) / denom
        attn = o.transpose(0, 2, 1, 3).reshape(B * L, C)
        attn = mm(attn, p["wo"]) + p["bo"]
        x = x + ln(attn.reshape(B, L, C), p["sa_norm_w"], p["sa_norm_b"])
        h = ln(x, p["norm2_w"], p["norm2_b"])
        h = jnp.maximum(mm(h.reshape(B * L, C), p["w1"]) + p["b1"], 0.0)
        ff = mm(h, p["w2"]) + p["b2"]
        x = x + ff.reshape(B, L, C)
    out = ln(x, params["norm_w"], params["norm_b"])
    return out.transpose(0, 2, 1)                            # (B, C, H*W)


if __name__ == "__main__":
    key = jax.random.PRNGKey(0)
    kx, kp = jax.random.split(key)

    # Small shapes consistent with the module: d_model divisible by nhead=8 and 4.
    B, C, H, W = 2, 64, 4, 4
    nhead, dim_feedforward, num_layers = 8, 128, 2

    vis = jax.random.normal(kx, (B, C, H, W), dtype=jnp.float32)
    params = init_params(kp, num_layers, C, dim_feedforward)

    fwd = jax.jit(functools.partial(transformer_decoder_forward, nhead=nhead))
    y = jax.block_until_ready(fwd(vis, params))
    assert y.shape == (B, C, H * W)

    ref = reference_forward(vis, params, nhead=nhead, bf16_matmuls=True)
    max_err = float(jnp.max(jnp.abs(y - ref)))
    assert jnp.allclose(y, ref, atol=1e-2, rtol=1e-2), max_err

    print("KERNEL_OK")
</pallas_src>

<mosaic_0001>
module attributes {stable_mosaic.version = 11 : i64} {
  func.func @_layernorm_kernel(%arg0: i32, %arg1: memref<16x64xf32, #tpu.memory_space<vmem>>, %arg2: memref<16x64xf32, #tpu.memory_space<vmem>>, %arg3: memref<1x64xf32, #tpu.memory_space<vmem>>, %arg4: memref<1x64xf32, #tpu.memory_space<vmem>>, %arg5: memref<16x64xf32, #tpu.memory_space<vmem>>, %arg6: memref<16x64xf32, #tpu.memory_space<vmem>>) attributes {dimension_semantics = [#tpu.dimension_semantics<parallel>], iteration_bounds = array<i64: 2>, scalar_prefetch = 0 : i64, scratch_operands = 0 : i64, tpu.core_type = #tpu.core_type<tc>, window_params = [{transform_indices = @transform_0, window_bounds = array<i64: 16, 64>}, {pipeline_mode = #tpu.pipeline_mode<synchronous>, transform_indices = @transform_1, window_bounds = array<i64: 16, 64>}, {pipeline_mode = #tpu.pipeline_mode<synchronous>, transform_indices = @transform_2, window_bounds = array<i64: 1, 64>}, {pipeline_mode = #tpu.pipeline_mode<synchronous>, transform_indices = @transform_3, window_bounds = array<i64: 1, 64>}, {transform_indices = @transform_4, window_bounds = array<i64: 16, 64>}, {transform_indices = @transform_5, window_bounds = array<i64: 16, 64>}]} {
    %c0 = arith.constant 0 : index
    %c0_0 = arith.constant 0 : index
    %0 = vector.load %arg1[%c0, %c0_0] : memref<16x64xf32, #tpu.memory_space<vmem>>, vector<16x64xf32>
    %cst = arith.constant dense<0.000000e+00> : vector<16xf32>
    %1 = vector.multi_reduction <add>, %0, %cst [1] : vector<16x64xf32> to vector<16xf32>
    %2 = vector.shape_cast %1 : vector<16xf32> to vector<16x1xf32>
    %cst_1 = arith.constant 6.400000e+01 : f32
    %3 = vector.broadcast %cst_1 : f32 to vector<16x1xf32>
    %4 = arith.divf %2, %3 : vector<16x1xf32>
    %5 = vector.broadcast %4 : vector<16x1xf32> to vector<16x64xf32>
    %6 = arith.subf %0, %5 : vector<16x64xf32>
    %7 = arith.mulf %6, %6 : vector<16x64xf32>
    %cst_2 = arith.constant dense<0.000000e+00> : vector<16xf32>
    %8 = vector.multi_reduction <add>, %7, %cst_2 [1] : vector<16x64xf32> to vector<16xf32>
    %9 = vector.shape_cast %8 : vector<16xf32> to vector<16x1xf32>
    %cst_3 = arith.constant 6.400000e+01 : f32
    %10 = vector.broadcast %cst_3 : f32 to vector<16x1xf32>
    %11 = arith.divf %9, %10 : vector<16x1xf32>
    %cst_4 = arith.constant 9.99999974E-6 : f32
    %12 = vector.broadcast %cst_4 : f32 to vector<16x1xf32>
    %13 = arith.addf %11, %12 : vector<16x1xf32>
    %14 = math.rsqrt %13 : vector<16x1xf32>
    %15 = vector.broadcast %14 : vector<16x1xf32> to vector<16x64xf32>
    %16 = arith.mulf %6, %15 : vector<16x64xf32>
    %c0_5 = arith.constant 0 : index
    %c0_6 = arith.constant 0 : index
    %17 = vector.load %arg3[%c0_5, %c0_6] : memref<1x64xf32, #tpu.memory_space<vmem>>, vector<1x64xf32>
    %18 = vector.broadcast %17 : vector<1x64xf32> to vector<16x64xf32>
    %19 = arith.mulf %16, %18 : vector<16x64xf32>
    %c0_7 = arith.constant 0 : index
    %c0_8 = arith.constant 0 : index
    %20 = vector.load %arg4[%c0_7, %c0_8] : memref<1x64xf32, #tpu.memory_space<vmem>>, vector<1x64xf32>
    %21 = vector.broadcast %20 : vector<1x64xf32> to vector<16x64xf32>
    %22 = arith.addf %19, %21 : vector<16x64xf32>
    %c0_9 = arith.constant 0 : index
    %c0_10 = arith.constant 0 : index
    %23 = vector.load %arg5[%c0_9, %c0_10] : memref<16x64xf32, #tpu.memory_space<vmem>>, vector<16x64xf32>
    tpu.vector_store %arg5[%c0_9, %c0_10], %22 {strides = array<i32>} : memref<16x64xf32, #tpu.memory_space<vmem>>, vector<16x64xf32>,
    %c0_11 = arith.constant 0 : index
    %c0_12 = arith.constant 0 : index
    %24 = vector.load %arg2[%c0_11, %c0_12] : memref<16x64xf32, #tpu.memory_space<vmem>>, vector<16x64xf32>
    %25 = arith.addf %22, %24 : vector<16x64xf32>
    %c0_13 = arith.constant 0 : index
    %c0_14 = arith.constant 0 : index
    %26 = vector.load %arg6[%c0_13, %c0_14] : memref<16x64xf32, #tpu.memory_space<vmem>>, vector<16x64xf32>
    tpu.vector_store %arg6[%c0_13, %c0_14], %25 {strides = array<i32>} : memref<16x64xf32, #tpu.memory_space<vmem>>, vector<16x64xf32>,
    return
  }
  func.func @transform_0(%arg0: i32) -> (i32, i32) {
    %c0_i32 = arith.constant 0 : i32
    %c0_i32_0 = arith.constant 0 : i32
    return %arg0, %c0_i32 : i32, i32
  }
  func.func @transform_1(%arg0: i32) -> (i32, i32) {
    %c0_i32 = arith.constant 0 : i32
    %c0_i32_0 = arith.constant 0 : i32
    %c0_i32_1 = arith.constant 0 : i32
    return %c0_i32, %c0_i32_0 : i32, i32
  }
  func.func @transform_2(%arg0: i32) -> (i32, i32) {
    %c0_i32 = arith.constant 0 : i32
    %c0_i32_0 = arith.constant 0 : i32
    %c0_i32_1 = arith.constant 0 : i32
    return %c0_i32, %c0_i32_0 : i32, i32
  }
  func.func @transform_3(%arg0: i32) -> (i32, i32) {
    %c0_i32 = arith.constant 0 : i32
    %c0_i32_0 = arith.constant 0 : i32
    %c0_i32_1 = arith.constant 0 : i32
    return %c0_i32, %c0_i32_0 : i32, i32
  }
  func.func @transform_4(%arg0: i32) -> (i32, i32) {
    %c0_i32 = arith.constant 0 : i32
    %c0_i32_0 = arith.constant 0 : i32
    return %arg0, %c0_i32 : i32, i32
  }
  func.func @transform_5(%arg0: i32) -> (i32, i32) {
    %c0_i32 = arith.constant 0 : i32
    %c0_i32_0 = arith.constant 0 : i32
    return %arg0, %c0_i32 : i32, i32
  }
}

module attributes {stable_mosaic.version = 11 : i64} {
  func.func @_matmul_kernel(%arg0: i32, %arg1: i32, %arg2: i32, %arg3: memref<16x64xf32, #tpu.memory_space<vmem>>, %arg4: memref<64x128xbf16, #tpu.memory_space<vmem>>, %arg5: memref<1x128xf32, #tpu.memory_space<vmem>>, %arg6: memref<16x128xf32, #tpu.memory_space<vmem>>, %arg7: memref<16x128xf32, #tpu.memory_space<vmem>>) attributes {dimension_semantics = [#tpu.dimension_semantics<parallel>, #tpu.dimension_semantics<parallel>, #tpu.dimension_semantics<arbitrary>], iteration_bounds = array<i64: 2, 1, 1>, scalar_prefetch = 0 : i64, scratch_operands = 1 : i64, tpu.core_type = #tpu.core_type<tc>, window_params = [{transform_indices = @transform_0, window_bounds = array<i64: 16, 64>}, {transform_indices = @transform_1, window_bounds = array<i64: 64, 128>}, {transform_indices = @transform_2, window_bounds = array<i64: 1, 128>}, {transform_indices = @transform_3, window_bounds = array<i64: 16, 128>}]} {
    %c0_i32 = arith.constant 0 : i32
    %0 = arith.cmpi eq, %arg2, %c0_i32 : i32
    %1 = arith.extui %0 : i1 to i32
    %c0_i32_0 = arith.constant 0 : i32
    %2 = arith.cmpi ne, %1, %c0_i32_0 : i32
    scf.if %2 {
      %cst_10 = arith.constant 0.000000e+00 : f32
      %13 = vector.broadcast %cst_10 : f32 to vector<16x128xf32>
      %c0_11 = arith.constant 0 : index
      %c0_12 = arith.constant 0 : index
      %14 = vector.load %arg7[%c0_11, %c0_12] : memref<16x128xf32, #tpu.memory_space<vmem>>, vector<16x128xf32>
      tpu.vector_store %arg7[%c0_11, %c0_12], %13 {strides = array<i32>} : memref<16x128xf32, #tpu.memory_space<vmem>>, vector<16x128xf32>,
    } else {
    }
    %c0 = arith.constant 0 : index
    %c0_1 = arith.constant 0 : index
    %3 = vector.load %arg7[%c0, %c0_1] : memref<16x128xf32, #tpu.memory_space<vmem>>, vector<16x128xf32>
    %c0_2 = arith.constant 0 : index
    %c0_3 = arith.constant 0 : index
    %4 = vector.load %arg3[%c0_2, %c0_3] : memref<16x64xf32, #tpu.memory_space<vmem>>, vector<16x64xf32>
    %5 = arith.truncf %4 : vector<16x64xf32> to vector<16x64xbf16>
    %c0_4 = arith.constant 0 : index
    %c0_5 = arith.constant 0 : index
    %6 = vector.load %arg4[%c0_4, %c0_5] : memref<64x128xbf16, #tpu.memory_space<vmem>>, vector<64x128xbf16>
    %cst = arith.constant dense<0.000000e+00> : vector<16x128xf32>
    %7 = tpu.matmul %5, %6, %cst {dimension_numbers = #tpu.dot_dimension_numbers<[1], [0], [0], [1], [0, 0, 1, 1], [], []>} : vector<16x64xbf16>, vector<64x128xbf16>, vector<16x128xf32> -> vector<16x128xf32>
    %8 = arith.addf %3, %7 : vector<16x128xf32>
    %c0_6 = arith.constant 0 : index
    %c0_7 = arith.constant 0 : index
    %9 = vector.load %arg7[%c0_6, %c0_7] : memref<16x128xf32, #tpu.memory_space<vmem>>, vector<16x128xf32>
    tpu.vector_store %arg7[%c0_6, %c0_7], %8 {strides = array<i32>} : memref<16x128xf32, #tpu.memory_space<vmem>>, vector<16x128xf32>,
    %c0_i32_8 = arith.constant 0 : i32
    %10 = arith.cmpi eq, %arg2, %c0_i32_8 : i32
    %11 = arith.extui %10 : i1 to i32
    %c0_i32_9 = arith.constant 0 : i32
    %12 = arith.cmpi ne, %11, %c0_i32_9 : i32
    scf.if %12 {
      %c0_10 = arith.constant 0 : index
      %c0_11 = arith.constant 0 : index
      %13 = vector.load %arg7[%c0_10, %c0_11] : memref<16x128xf32, #tpu.memory_space<vmem>>, vector<16x128xf32>
      %c0_12 = arith.constant 0 : index
      %c0_13 = arith.constant 0 : index
      %14 = vector.load %arg5[%c0_12, %c0_13] : memref<1x128xf32, #tpu.memory_space<vmem>>, vector<1x128xf32>
      %15 = vector.broadcast %14 : vector<1x128xf32> to vector<16x128xf32>
      %16 = arith.addf %13, %15 : vector<16x128xf32>
      %c0_14 = arith.constant 0 : index
      %c0_15 = arith.constant 0 : index
      %17 = vector.load %arg6[%c0_14, %c0_15] : memref<16x128xf32, #tpu.memory_space<vmem>>, vector<16x128xf32>
      tpu.vector_store %arg6[%c0_14, %c0_15], %16 {strides = array<i32>} : memref<16x128xf32, #tpu.memory_space<vmem>>, vector<16x128xf32>,
    } else {
    }
    return
  }
  func.func @transform_0(%arg0: i32, %arg1: i32, %arg2: i32) -> (i32, i32) {
    %c0_i32 = arith.constant 0 : i32
    return %arg0, %arg2 : i32, i32
  }
  func.func @transform_1(%arg0: i32, %arg1: i32, %arg2: i32) -> (i32, i32) {
    %c0_i32 = arith.constant 0 : i32
    return %arg2, %arg1 : i32, i32
  }
  func.func @transform_2(%arg0: i32, %arg1: i32, %arg2: i32) -> (i32, i32) {
    %c0_i32 = arith.constant 0 : i32
    %c0_i32_0 = arith.constant 0 : i32
    return %c0_i32, %arg1 : i32, i32
  }
  func.func @transform_3(%arg0: i32, %arg1: i32, %arg2: i32) -> (i32, i32) {
    %c0_i32 = arith.constant 0 : i32
    return %arg0, %arg1 : i32, i32
  }
}

module attributes {stable_mosaic.version = 11 : i64} {
  func.func @_matmul_kernel(%arg0: i32, %arg1: i32, %arg2: i32, %arg3: memref<16x64xf32, #tpu.memory_space<vmem>>, %arg4: memref<64x64xbf16, #tpu.memory_space<vmem>>, %arg5: memref<1x64xf32, #tpu.memory_space<vmem>>, %arg6: memref<16x64xf32, #tpu.memory_space<vmem>>, %arg7: memref<16x64xf32, #tpu.memory_space<vmem>>) attributes {dimension_semantics = [#tpu.dimension_semantics<parallel>, #tpu.dimension_semantics<parallel>, #tpu.dimension_semantics<arbitrary>], iteration_bounds = array<i64: 2, 1, 1>, scalar_prefetch = 0 : i64, scratch_operands = 1 : i64, tpu.core_type = #tpu.core_type<tc>, window_params = [{transform_indices = @transform_0, window_bounds = array<i64: 16, 64>}, {transform_indices = @transform_1, window_bounds = array<i64: 64, 64>}, {transform_indices = @transform_2, window_bounds = array<i64: 1, 64>}, {transform_indices = @transform_3, window_bounds = array<i64: 16, 64>}]} {
    %c0_i32 = arith.constant 0 : i32
    %0 = arith.cmpi eq, %arg2, %c0_i32 : i32
    %1 = arith.extui %0 : i1 to i32
    %c0_i32_0 = arith.constant 0 : i32
    %2 = arith.cmpi ne, %1, %c0_i32_0 : i32
    scf.if %2 {
      %cst_10 = arith.constant 0.000000e+00 : f32
      %13 = vector.broadcast %cst_10 : f32 to vector<16x64xf32>
      %c0_11 = arith.constant 0 : index
      %c0_12 = arith.constant 0 : index
      %14 = vector.load %arg7[%c0_11, %c0_12] : memref<16x64xf32, #tpu.memory_space<vmem>>, vector<16x64xf32>
      tpu.vector_store %arg7[%c0_11, %c0_12], %13 {strides = array<i32>} : memref<16x64xf32, #tpu.memory_space<vmem>>, vector<16x64xf32>,
    } else {
    }
    %c0 = arith.constant 0 : index
    %c0_1 = arith.constant 0 : index
    %3 = vector.load %arg7[%c0, %c0_1] : memref<16x64xf32, #tpu.memory_space<vmem>>, vector<16x64xf32>
    %c0_2 = arith.constant 0 : index
    %c0_3 = arith.constant 0 : index
    %4 = vector.load %arg3[%c0_2, %c0_3] : memref<16x64xf32, #tpu.memory_space<vmem>>, vector<16x64xf32>
    %5 = arith.truncf %4 : vector<16x64xf32> to vector<16x64xbf16>
    %c0_4 = arith.constant 0 : index
    %c0_5 = arith.constant 0 : index
    %6 = vector.load %arg4[%c0_4, %c0_5] : memref<64x64xbf16, #tpu.memory_space<vmem>>, vector<64x64xbf16>
    %cst = arith.constant dense<0.000000e+00> : vector<16x64xf32>
    %7 = tpu.matmul %5, %6, %cst {dimension_numbers = #tpu.dot_dimension_numbers<[1], [0], [0], [1], [0, 0, 1, 1], [], []>} : vector<16x64xbf16>, vector<64x64xbf16>, vector<16x64xf32> -> vector<16x64xf32>
    %8 = arith.addf %3, %7 : vector<16x64xf32>
    %c0_6 = arith.constant 0 : index
    %c0_7 = arith.constant 0 : index
    %9 = vector.load %arg7[%c0_6, %c0_7] : memref<16x64xf32, #tpu.memory_space<vmem>>, vector<16x64xf32>
    tpu.vector_store %arg7[%c0_6, %c0_7], %8 {strides = array<i32>} : memref<16x64xf32, #tpu.memory_space<vmem>>, vector<16x64xf32>,
    %c0_i32_8 = arith.constant 0 : i32
    %10 = arith.cmpi eq, %arg2, %c0_i32_8 : i32
    %11 = arith.extui %10 : i1 to i32
    %c0_i32_9 = arith.constant 0 : i32
    %12 = arith.cmpi ne, %11, %c0_i32_9 : i32
    scf.if %12 {
      %c0_10 = arith.constant 0 : index
      %c0_11 = arith.constant 0 : index
      %13 = vector.load %arg7[%c0_10, %c0_11] : memref<16x64xf32, #tpu.memory_space<vmem>>, vector<16x64xf32>
      %c0_12 = arith.constant 0 : index
      %c0_13 = arith.constant 0 : index
      %14 = vector.load %arg5[%c0_12, %c0_13] : memref<1x64xf32, #tpu.memory_space<vmem>>, vector<1x64xf32>
      %15 = vector.broadcast %14 : vector<1x64xf32> to vector<16x64xf32>
      %16 = arith.addf %13, %15 : vector<16x64xf32>
      %c0_14 = arith.constant 0 : index
      %c0_15 = arith.constant 0 : index
      %17 = vector.load %arg6[%c0_14, %c0_15] : memref<16x64xf32, #tpu.memory_space<vmem>>, vector<16x64xf32>
      tpu.vector_store %arg6[%c0_14, %c0_15], %16 {strides = array<i32>} : memref<16x64xf32, #tpu.memory_space<vmem>>, vector<16x64xf32>,
    } else {
    }
    return
  }
  func.func @transform_0(%arg0: i32, %arg1: i32, %arg2: i32) -> (i32, i32) {
    %c0_i32 = arith.constant 0 : i32
    return %arg0, %arg2 : i32, i32
  }
  func.func @transform_1(%arg0: i32, %arg1: i32, %arg2: i32) -> (i32, i32) {
    %c0_i32 = arith.constant 0 : i32
    return %arg2, %arg1 : i32, i32
  }
  func.func @transform_2(%arg0: i32, %arg1: i32, %arg2: i32) -> (i32, i32) {
    %c0_i32 = arith.constant 0 : i32
    %c0_i32_0 = arith.constant 0 : i32
    return %c0_i32, %arg1 : i32, i32
  }
  func.func @transform_3(%arg0: i32, %arg1: i32, %arg2: i32) -> (i32, i32) {
    %c0_i32 = arith.constant 0 : i32
    return %arg0, %arg1 : i32, i32
  }
}

module attributes {stable_mosaic.version = 11 : i64} {
  func.func @_attn_kernel(%arg0: i32, %arg1: memref<8x16x8xf32, #tpu.memory_space<vmem>>, %arg2: memref<8x16x8xf32, #tpu.memory_space<vmem>>, %arg3: memref<8x16x8xf32, #tpu.memory_space<vmem>>, %arg4: memref<8x16x8xf32, #tpu.memory_space<vmem>>) attributes {dimension_semantics = [#tpu.dimension_semantics<parallel>], iteration_bounds = array<i64: 2>, scalar_prefetch = 0 : i64, scratch_operands = 0 : i64, tpu.core_type = #tpu.core_type<tc>, window_params = [{transform_indices = @transform_0, window_bounds = array<i64: 8, 16, 8>}, {transform_indices = @transform_1, window_bounds = array<i64: 8, 16, 8>}, {transform_indices = @transform_2, window_bounds = array<i64: 8, 16, 8>}, {transform_indices = @transform_3, window_bounds = array<i64: 8, 16, 8>}]} {
    %c0 = arith.constant 0 : index
    %c0_0 = arith.constant 0 : index
    %c0_1 = arith.constant 0 : index
    %0 = vector.load %arg1[%c0, %c0_0, %c0_1] : memref<8x16x8xf32, #tpu.memory_space<vmem>>, vector<8x16x8xf32>
    %cst = arith.constant 0.353553385 : f32
    %1 = vector.broadcast %cst : f32 to vector<8x16x8xf32>
    %2 = arith.mulf %0, %1 : vector<8x16x8xf32>
    %3 = arith.truncf %2 : vector<8x16x8xf32> to vector<8x16x8xbf16>
    %c0_2 = arith.constant 0 : index
    %c0_3 = arith.constant 0 : index
    %c0_4 = arith.constant 0 : index
    %4 = vector.load %arg2[%c0_2, %c0_3, %c0_4] : memref<8x16x8xf32, #tpu.memory_space<vmem>>, vector<8x16x8xf32>
    %5 = arith.truncf %4 : vector<8x16x8xf32> to vector<8x16x8xbf16>
    %c0_5 = arith.constant 0 : index
    %c0_6 = arith.constant 0 : index
    %c0_7 = arith.constant 0 : index
    %6 = vector.load %arg3[%c0_5, %c0_6, %c0_7] : memref<8x16x8xf32, #tpu.memory_space<vmem>>, vector<8x16x8xf32>
    %7 = arith.truncf %6 : vector<8x16x8xf32> to vector<8x16x8xbf16>
    %cst_8 = arith.constant dense<0.000000e+00> : vector<8x16x16xf32>
    %8 = tpu.matmul %3, %5, %cst_8 {dimension_numbers = #tpu.dot_dimension_numbers<[2], [2], [1], [1], [0, 0, 0, 1, 1, 1], [0], [0]>} : vector<8x16x8xbf16>, vector<8x16x8xbf16>, vector<8x16x16xf32> -> vector<8x16x16xf32>
    %cst_9 = arith.constant dense<0xFF800000> : vector<8x16xf32>
    %9 = vector.multi_reduction <maximumf>, %8, %cst_9 [2] : vector<8x16x16xf32> to vector<8x16xf32>
    %10 = vector.shape_cast %9 : vector<8x16xf32> to vector<8x16x1xf32>
    %11 = vector.broadcast %10 : vector<8x16x1xf32> to vector<8x16x16xf32>
    %12 = arith.subf %8, %11 : vector<8x16x16xf32>
    %13 = math.exp %12 : vector<8x16x16xf32>
    %cst_10 = arith.constant dense<0.000000e+00> : vector<8x16xf32>
    %14 = vector.multi_reduction <add>, %13, %cst_10 [2] : vector<8x16x16xf32> to vector<8x16xf32>
    %15 = vector.shape_cast %14 : vector<8x16xf32> to vector<8x16x1xf32>
    %16 = arith.truncf %13 : vector<8x16x16xf32> to vector<8x16x16xbf16>
    %cst_11 = arith.constant dense<0.000000e+00> : vector<8x16x8xf32>
    %17 = tpu.matmul %16, %7, %cst_11 {dimension_numbers = #tpu.dot_dimension_numbers<[2], [1], [1], [2], [0, 0, 0, 1, 1, 2], [0], [0]>} : vector<8x16x16xbf16>, vector<8x16x8xbf16>, vector<8x16x8xf32> -> vector<8x16x8xf32>
    %18 = tpu.reciprocal %15 {approx = true} : vector<8x16x1xf32> -> vector<8x16x1xf32>
    %19 = vector.broadcast %18 : vector<8x16x1xf32> to vector<8x16x8xf32>
    %20 = arith.mulf %17, %19 : vector<8x16x8xf32>
    %c0_12 = arith.constant 0 : index
    %c0_13 = arith.constant 0 : index
    %c0_14 = arith.constant 0 : index
    %21 = vector.load %arg4[%c0_12, %c0_13, %c0_14] : memref<8x16x8xf32, #tpu.memory_space<vmem>>, vector<8x16x8xf32>
    tpu.vector_store %arg4[%c0_12, %c0_13, %c0_14], %20 {strides = array<i32>} : memref<8x16x8xf32, #tpu.memory_space<vmem>>, vector<8x16x8xf32>,
    return
  }
  func.func @transform_0(%arg0: i32) -> (i32, i32, i32) {
    %c0_i32 = arith.constant 0 : i32
    %c0_i32_0 = arith.constant 0 : i32
    %c0_i32_1 = arith.constant 0 : i32
    return %arg0, %c0_i32, %c0_i32_0 : i32, i32, i32
  }
  func.func @transform_1(%arg0: i32) -> (i32, i32, i32) {
    %c0_i32 = arith.constant 0 : i32
    %c0_i32_0 = arith.constant 0 : i32
    %c0_i32_1 = arith.constant 0 : i32
    return %arg0, %c0_i32, %c0_i32_0 : i32, i32, i32
  }
  func.func @transform_2(%arg0: i32) -> (i32, i32, i32) {
    %c0_i32 = arith.constant 0 : i32
    %c0_i32_0 = arith.constant 0 : i32
    %c0_i32_1 = arith.constant 0 : i32
    return %arg0, %c0_i32, %c0_i32_0 : i32, i32, i32
  }
  func.func @transform_3(%arg0: i32) -> (i32, i32, i32) {
    %c0_i32 = arith.constant 0 : i32
    %c0_i32_0 = arith.constant 0 : i32
    %c0_i32_1 = arith.constant 0 : i32
    return %arg0, %c0_i32, %c0_i32_0 : i32, i32, i32
  }
}

module attributes {stable_mosaic.version = 11 : i64} {
  func.func @_matmul_kernel(%arg0: i32, %arg1: i32, %arg2: i32, %arg3: memref<16x64xf32, #tpu.memory_space<vmem>>, %arg4: memref<64x64xbf16, #tpu.memory_space<vmem>>, %arg5: memref<1x64xf32, #tpu.memory_space<vmem>>, %arg6: memref<1x64xf32, #tpu.memory_space<vmem>>, %arg7: memref<1x64xf32, #tpu.memory_space<vmem>>, %arg8: memref<16x64xf32, #tpu.memory_space<vmem>>, %arg9: memref<16x64xf32, #tpu.memory_space<vmem>>, %arg10: memref<16x64xf32, #tpu.memory_space<vmem>>) attributes {dimension_semantics = [#tpu.dimension_semantics<parallel>, #tpu.dimension_semantics<parallel>, #tpu.dimension_semantics<arbitrary>], iteration_bounds = array<i64: 2, 1, 1>, scalar_prefetch = 0 : i64, scratch_operands = 1 : i64, tpu.core_type = #tpu.core_type<tc>, window_params = [{transform_indices = @transform_0, window_bounds = array<i64: 16, 64>}, {transform_indices = @transform_1, window_bounds = array<i64: 64, 64>}, {transform_indices = @transform_2, window_bounds = array<i64: 1, 64>}, {transform_indices = @transform_3, window_bounds = array<i64: 1, 64>}, {transform_indices = @transform_4, window_bounds = array<i64: 1, 64>}, {transform_indices = @transform_5, window_bounds = array<i64: 16, 64>}, {transform_indices = @transform_6, window_bounds = array<i64: 16, 64>}]} {
    %c0_i32 = arith.constant 0 : i32
    %0 = arith.cmpi eq, %arg2, %c0_i32 : i32
    %1 = arith.extui %0 : i1 to i32
    %c0_i32_0 = arith.constant 0 : i32
    %2 = arith.cmpi ne, %1, %c0_i32_0 : i32
    scf.if %2 {
      %cst_10 = arith.constant 0.000000e+00 : f32
      %13 = vector.broadcast %cst_10 : f32 to vector<16x64xf32>
      %c0_11 = arith.constant 0 : index
      %c0_12 = arith.constant 0 : index
      %14 = vector.load %arg10[%c0_11, %c0_12] : memref<16x64xf32, #tpu.memory_space<vmem>>, vector<16x64xf32>
      tpu.vector_store %arg10[%c0_11, %c0_12], %13 {strides = array<i32>} : memref<16x64xf32, #tpu.memory_space<vmem>>, vector<16x64xf32>,
    } else {
    }
    %c0 = arith.constant 0 : index
    %c0_1 = arith.constant 0 : index
    %3 = vector.load %arg10[%c0, %c0_1] : memref<16x64xf32, #tpu.memory_space<vmem>>, vector<16x64xf32>
    %c0_2 = arith.constant 0 : index
    %c0_3 = arith.constant 0 : index
    %4 = vector.load %arg3[%c0_2, %c0_3] : memref<16x64xf32, #tpu.memory_space<vmem>>, vector<16x64xf32>
    %5 = arith.truncf %4 : vector<16x64xf32> to vector<16x64xbf16>
    %c0_4 = arith.constant 0 : index
    %c0_5 = arith.constant 0 : index
    %6 = vector.load %arg4[%c0_4, %c0_5] : memref<64x64xbf16, #tpu.memory_space<vmem>>, vector<64x64xbf16>
    %cst = arith.constant dense<0.000000e+00> : vector<16x64xf32>
    %7 = tpu.matmul %5, %6, %cst {dimension_numbers = #tpu.dot_dimension_numbers<[1], [0], [0], [1], [0, 0, 1, 1], [], []>} : vector<16x64xbf16>, vector<64x64xbf16>, vector<16x64xf32> -> vector<16x64xf32>
    %8 = arith.addf %3, %7 : vector<16x64xf32>
    %c0_6 = arith.constant 0 : index
    %c0_7 = arith.constant 0 : index
    %9 = vector.load %arg10[%c0_6, %c0_7] : memref<16x64xf32, #tpu.memory_space<vmem>>, vector<16x64xf32>
    tpu.vector_store %arg10[%c0_6, %c0_7], %8 {strides = array<i32>} : memref<16x64xf32, #tpu.memory_space<vmem>>, vector<16x64xf32>,
    %c0_i32_8 = arith.constant 0 : i32
    %10 = arith.cmpi eq, %arg2, %c0_i32_8 : i32
    %11 = arith.extui %10 : i1 to i32
    %c0_i32_9 = arith.constant 0 : i32
    %12 = arith.cmpi ne, %11, %c0_i32_9 : i32
    scf.if %12 {
      %c0_10 = arith.constant 0 : index
      %c0_11 = arith.constant 0 : index
      %13 = vector.load %arg10[%c0_10, %c0_11] : memref<16x64xf32, #tpu.memory_space<vmem>>, vector<16x64xf32>
      %c0_12 = arith.constant 0 : index
      %c0_13 = arith.constant 0 : index
      %14 = vector.load %arg5[%c0_12, %c0_13] : memref<1x64xf32, #tpu.memory_space<vmem>>, vector<1x64xf32>
      %15 = vector.broadcast %14 : vector<1x64xf32> to vector<16x64xf32>
      %16 = arith.addf %13, %15 : vector<16x64xf32>
      %cst_14 = arith.constant dense<0.000000e+00> : vector<16xf32>
      %17 = vector.multi_reduction <add>, %16, %cst_14 [1] : vector<16x64xf32> to vector<16xf32>
      %18 = vector.shape_cast %17 : vector<16xf32> to vector<16x1xf32>
      %cst_15 = arith.constant 6.400000e+01 : f32
      %19 = vector.broadcast %cst_15 : f32 to vector<16x1xf32>
      %20 = arith.divf %18, %19 : vector<16x1xf32>
      %21 = vector.broadcast %20 : vector<16x1xf32> to vector<16x64xf32>
      %22 = arith.subf %16, %21 : vector<16x64xf32>
      %23 = arith.mulf %22, %22 : vector<16x64xf32>
      %cst_16 = arith.constant dense<0.000000e+00> : vector<16xf32>
      %24 = vector.multi_reduction <add>, %23, %cst_16 [1] : vector<16x64xf32> to vector<16xf32>
      %25 = vector.shape_cast %24 : vector<16xf32> to vector<16x1xf32>
      %cst_17 = arith.constant 6.400000e+01 : f32
      %26 = vector.broadcast %cst_17 : f32 to vector<16x1xf32>
      %27 = arith.divf %25, %26 : vector<16x1xf32>
      %cst_18 = arith.constant 9.99999974E-6 : f32
      %28 = vector.broadcast %cst_18 : f32 to vector<16x1xf32>
      %29 = arith.addf %27, %28 : vector<16x1xf32>
      %30 = math.rsqrt %29 : vector<16x1xf32>
      %31 = vector.broadcast %30 : vector<16x1xf32> to vector<16x64xf32>
      %32 = arith.mulf %22, %31 : vector<16x64xf32>
      %c0_19 = arith.constant 0 : index
      %c0_20 = arith.constant 0 : index
      %33 = vector.load %arg6[%c0_19, %c0_20] : memref<1x64xf32, #tpu.memory_space<vmem>>, vector<1x64xf32>
      %34 = vector.broadcast %33 : vector<1x64xf32> to vector<16x64xf32>
      %35 = arith.mulf %32, %34 : vector<16x64xf32>
      %c0_21 = arith.constant 0 : index
      %c0_22 = arith.constant 0 : index
      %36 = vector.load %arg7[%c0_21, %c0_22] : memref<1x64xf32, #tpu.memory_space<vmem>>, vector<1x64xf32>
      %37 = vector.broadcast %36 : vector<1x64xf32> to vector<16x64xf32>
      %38 = arith.addf %35, %37 : vector<16x64xf32>
      %c0_23 = arith.constant 0 : index
      %c0_24 = arith.constant 0 : index
      %39 = vector.load %arg8[%c0_23, %c0_24] : memref<16x64xf32, #tpu.memory_space<vmem>>, vector<16x64xf32>
      %40 = arith.addf %38, %39 : vector<16x64xf32>
      %c0_25 = arith.constant 0 : index
      %c0_26 = arith.constant 0 : index
      %41 = vector.load %arg9[%c0_25, %c0_26] : memref<16x64xf32, #tpu.memory_space<vmem>>, vector<16x64xf32>
      tpu.vector_store %arg9[%c0_25, %c0_26], %40 {strides = array<i32>} : memref<16x64xf32, #tpu.memory_space<vmem>>, vector<16x64xf32>,
    } else {
    }
    return
  }
  func.func @transform_0(%arg0: i32, %arg1: i32, %arg2: i32) -> (i32, i32) {
    %c0_i32 = arith.constant 0 : i32
    return %arg0, %arg2 : i32, i32
  }
  func.func @transform_1(%arg0: i32, %arg1: i32, %arg2: i32) -> (i32, i32) {
    %c0_i32 = arith.constant 0 : i32
    return %arg2, %arg1 : i32, i32
  }
  func.func @transform_2(%arg0: i32, %arg1: i32, %arg2: i32) -> (i32, i32) {
    %c0_i32 = arith.constant 0 : i32
    %c0_i32_0 = arith.constant 0 : i32
    return %c0_i32, %arg1 : i32, i32
  }
  func.func @transform_3(%arg0: i32, %arg1: i32, %arg2: i32) -> (i32, i32) {
    %c0_i32 = arith.constant 0 : i32
    %c0_i32_0 = arith.constant 0 : i32
    return %c0_i32, %arg1 : i32, i32
  }
  func.func @transform_4(%arg0: i32, %arg1: i32, %arg2: i32) -> (i32, i32) {
    %c0_i32 = arith.constant 0 : i32
    %c0_i32_0 = arith.constant 0 : i32
    return %c0_i32, %arg1 : i32, i32
  }
  func.func @transform_5(%arg0: i32, %arg1: i32, %arg2: i32) -> (i32, i32) {
    %c0_i32 = arith.constant 0 : i32
    return %arg0, %arg1 : i32, i32
  }
  func.func @transform_6(%arg0: i32, %arg1: i32, %arg2: i32) -> (i32, i32) {
    %c0_i32 = arith.constant 0 : i32
    return %arg0, %arg1 : i32, i32
  }
}

module attributes {stable_mosaic.version = 11 : i64} {
  func.func @_layernorm_kernel(%arg0: i32, %arg1: memref<16x64xf32, #tpu.memory_space<vmem>>, %arg2: memref<1x64xf32, #tpu.memory_space<vmem>>, %arg3: memref<1x64xf32, #tpu.memory_space<vmem>>, %arg4: memref<16x64xf32, #tpu.memory_space<vmem>>) attributes {dimension_semantics = [#tpu.dimension_semantics<parallel>], iteration_bounds = array<i64: 2>, scalar_prefetch = 0 : i64, scratch_operands = 0 : i64, tpu.core_type = #tpu.core_type<tc>, window_params = [{transform_indices = @transform_0, window_bounds = array<i64: 16, 64>}, {pipeline_mode = #tpu.pipeline_mode<synchronous>, transform_indices = @transform_1, window_bounds = array<i64: 1, 64>}, {pipeline_mode = #tpu.pipeline_mode<synchronous>, transform_indices = @transform_2, window_bounds = array<i64: 1, 64>}, {transform_indices = @transform_3, window_bounds = array<i64: 16, 64>}]} {
    %c0 = arith.constant 0 : index
    %c0_0 = arith.constant 0 : index
    %0 = vector.load %arg1[%c0, %c0_0] : memref<16x64xf32, #tpu.memory_space<vmem>>, vector<16x64xf32>
    %cst = arith.constant dense<0.000000e+00> : vector<16xf32>
    %1 = vector.multi_reduction <add>, %0, %cst [1] : vector<16x64xf32> to vector<16xf32>
    %2 = vector.shape_cast %1 : vector<16xf32> to vector<16x1xf32>
    %cst_1 = arith.constant 6.400000e+01 : f32
    %3 = vector.broadcast %cst_1 : f32 to vector<16x1xf32>
    %4 = arith.divf %2, %3 : vector<16x1xf32>
    %5 = vector.broadcast %4 : vector<16x1xf32> to vector<16x64xf32>
    %6 = arith.subf %0, %5 : vector<16x64xf32>
    %7 = arith.mulf %6, %6 : vector<16x64xf32>
    %cst_2 = arith.constant dense<0.000000e+00> : vector<16xf32>
    %8 = vector.multi_reduction <add>, %7, %cst_2 [1] : vector<16x64xf32> to vector<16xf32>
    %9 = vector.shape_cast %8 : vector<16xf32> to vector<16x1xf32>
    %cst_3 = arith.constant 6.400000e+01 : f32
    %10 = vector.broadcast %cst_3 : f32 to vector<16x1xf32>
    %11 = arith.divf %9, %10 : vector<16x1xf32>
    %cst_4 = arith.constant 9.99999974E-6 : f32
    %12 = vector.broadcast %cst_4 : f32 to vector<16x1xf32>
    %13 = arith.addf %11, %12 : vector<16x1xf32>
    %14 = math.rsqrt %13 : vector<16x1xf32>
    %15 = vector.broadcast %14 : vector<16x1xf32> to vector<16x64xf32>
    %16 = arith.mulf %6, %15 : vector<16x64xf32>
    %c0_5 = arith.constant 0 : index
    %c0_6 = arith.constant 0 : index
    %17 = vector.load %arg2[%c0_5, %c0_6] : memref<1x64xf32, #tpu.memory_space<vmem>>, vector<1x64xf32>
    %18 = vector.broadcast %17 : vector<1x64xf32> to vector<16x64xf32>
    %19 = arith.mulf %16, %18 : vector<16x64xf32>
    %c0_7 = arith.constant 0 : index
    %c0_8 = arith.constant 0 : index
    %20 = vector.load %arg3[%c0_7, %c0_8] : memref<1x64xf32, #tpu.memory_space<vmem>>, vector<1x64xf32>
    %21 = vector.broadcast %20 : vector<1x64xf32> to vector<16x64xf32>
    %22 = arith.addf %19, %21 : vector<16x64xf32>
    %c0_9 = arith.constant 0 : index
    %c0_10 = arith.constant 0 : index
    %23 = vector.load %arg4[%c0_9, %c0_10] : memref<16x64xf32, #tpu.memory_space<vmem>>, vector<16x64xf32>
    tpu.vector_store %arg4[%c0_9, %c0_10], %22 {strides = array<i32>} : memref<16x64xf32, #tpu.memory_space<vmem>>, vector<16x64xf32>,
    return
  }
  func.func @transform_0(%arg0: i32) -> (i32, i32) {
    %c0_i32 = arith.constant 0 : i32
    %c0_i32_0 = arith.constant 0 : i32
    return %arg0, %c0_i32 : i32, i32
  }
  func.func @transform_1(%arg0: i32) -> (i32, i32) {
    %c0_i32 = arith.constant 0 : i32
    %c0_i32_0 = arith.constant 0 : i32
    %c0_i32_1 = arith.constant 0 : i32
    return %c0_i32, %c0_i32_0 : i32, i32
  }
  func.func @transform_2(%arg0: i32) -> (i32, i32) {
    %c0_i32 = arith.constant 0 : i32
    %c0_i32_0 = arith.constant 0 : i32
    %c0_i32_1 = arith.constant 0 : i32
    return %c0_i32, %c0_i32_0 : i32, i32
  }
  func.func @transform_3(%arg0: i32) -> (i32, i32) {
    %c0_i32 = arith.constant 0 : i32
    %c0_i32_0 = arith.constant 0 : i32
    return %arg0, %c0_i32 : i32, i32
  }
}

module attributes {stable_mosaic.version = 11 : i64} {
  func.func @_matmul_kernel(%arg0: i32, %arg1: i32, %arg2: i32, %arg3: memref<16x64xf32, #tpu.memory_space<vmem>>, %arg4: memref<64x128xbf16, #tpu.memory_space<vmem>>, %arg5: memref<1x128xf32, #tpu.memory_space<vmem>>, %arg6: memref<16x128xf32, #tpu.memory_space<vmem>>, %arg7: memref<16x128xf32, #tpu.memory_space<vmem>>) attributes {dimension_semantics = [#tpu.dimension_semantics<parallel>, #tpu.dimension_semantics<parallel>, #tpu.dimension_semantics<arbitrary>], iteration_bounds = array<i64: 2, 1, 1>, scalar_prefetch = 0 : i64, scratch_operands = 1 : i64, tpu.core_type = #tpu.core_type<tc>, window_params = [{transform_indices = @transform_0, window_bounds = array<i64: 16, 64>}, {transform_indices = @transform_1, window_bounds = array<i64: 64, 128>}, {transform_indices = @transform_2, window_bounds = array<i64: 1, 128>}, {transform_indices = @transform_3, window_bounds = array<i64: 16, 128>}]} {
    %c0_i32 = arith.constant 0 : i32
    %0 = arith.cmpi eq, %arg2, %c0_i32 : i32
    %1 = arith.extui %0 : i1 to i32
    %c0_i32_0 = arith.constant 0 : i32
    %2 = arith.cmpi ne, %1, %c0_i32_0 : i32
    scf.if %2 {
      %cst_10 = arith.constant 0.000000e+00 : f32
      %13 = vector.broadcast %cst_10 : f32 to vector<16x128xf32>
      %c0_11 = arith.constant 0 : index
      %c0_12 = arith.constant 0 : index
      %14 = vector.load %arg7[%c0_11, %c0_12] : memref<16x128xf32, #tpu.memory_space<vmem>>, vector<16x128xf32>
      tpu.vector_store %arg7[%c0_11, %c0_12], %13 {strides = array<i32>} : memref<16x128xf32, #tpu.memory_space<vmem>>, vector<16x128xf32>,
    } else {
    }
    %c0 = arith.constant 0 : index
    %c0_1 = arith.constant 0 : index
    %3 = vector.load %arg7[%c0, %c0_1] : memref<16x128xf32, #tpu.memory_space<vmem>>, vector<16x128xf32>
    %c0_2 = arith.constant 0 : index
    %c0_3 = arith.constant 0 : index
    %4 = vector.load %arg3[%c0_2, %c0_3] : memref<16x64xf32, #tpu.memory_space<vmem>>, vector<16x64xf32>
    %5 = arith.truncf %4 : vector<16x64xf32> to vector<16x64xbf16>
    %c0_4 = arith.constant 0 : index
    %c0_5 = arith.constant 0 : index
    %6 = vector.load %arg4[%c0_4, %c0_5] : memref<64x128xbf16, #tpu.memory_space<vmem>>, vector<64x128xbf16>
    %cst = arith.constant dense<0.000000e+00> : vector<16x128xf32>
    %7 = tpu.matmul %5, %6, %cst {dimension_numbers = #tpu.dot_dimension_numbers<[1], [0], [0], [1], [0, 0, 1, 1], [], []>} : vector<16x64xbf16>, vector<64x128xbf16>, vector<16x128xf32> -> vector<16x128xf32>
    %8 = arith.addf %3, %7 : vector<16x128xf32>
    %c0_6 = arith.constant 0 : index
    %c0_7 = arith.constant 0 : index
    %9 = vector.load %arg7[%c0_6, %c0_7] : memref<16x128xf32, #tpu.memory_space<vmem>>, vector<16x128xf32>
    tpu.vector_store %arg7[%c0_6, %c0_7], %8 {strides = array<i32>} : memref<16x128xf32, #tpu.memory_space<vmem>>, vector<16x128xf32>,
    %c0_i32_8 = arith.constant 0 : i32
    %10 = arith.cmpi eq, %arg2, %c0_i32_8 : i32
    %11 = arith.extui %10 : i1 to i32
    %c0_i32_9 = arith.constant 0 : i32
    %12 = arith.cmpi ne, %11, %c0_i32_9 : i32
    scf.if %12 {
      %c0_10 = arith.constant 0 : index
      %c0_11 = arith.constant 0 : index
      %13 = vector.load %arg7[%c0_10, %c0_11] : memref<16x128xf32, #tpu.memory_space<vmem>>, vector<16x128xf32>
      %c0_12 = arith.constant 0 : index
      %c0_13 = arith.constant 0 : index
      %14 = vector.load %arg5[%c0_12, %c0_13] : memref<1x128xf32, #tpu.memory_space<vmem>>, vector<1x128xf32>
      %15 = vector.broadcast %14 : vector<1x128xf32> to vector<16x128xf32>
      %16 = arith.addf %13, %15 : vector<16x128xf32>
      %cst_14 = arith.constant 0.000000e+00 : f32
      %17 = vector.broadcast %cst_14 : f32 to vector<16x128xf32>
      %18 = arith.maximumf %16, %17 : vector<16x128xf32>
      %c0_15 = arith.constant 0 : index
      %c0_16 = arith.constant 0 : index
      %19 = vector.load %arg6[%c0_15, %c0_16] : memref<16x128xf32, #tpu.memory_space<vmem>>, vector<16x128xf32>
      tpu.vector_store %arg6[%c0_15, %c0_16], %18 {strides = array<i32>} : memref<16x128xf32, #tpu.memory_space<vmem>>, vector<16x128xf32>,
    } else {
    }
    return
  }
  func.func @transform_0(%arg0: i32, %arg1: i32, %arg2: i32) -> (i32, i32) {
    %c0_i32 = arith.constant 0 : i32
    return %arg0, %arg2 : i32, i32
  }
  func.func @transform_1(%arg0: i32, %arg1: i32, %arg2: i32) -> (i32, i32) {
    %c0_i32 = arith.constant 0 : i32
    return %arg2, %arg1 : i32, i32
  }
  func.func @transform_2(%arg0: i32, %arg1: i32, %arg2: i32) -> (i32, i32) {
    %c0_i32 = arith.constant 0 : i32
    %c0_i32_0 = arith.constant 0 : i32
    return %c0_i32, %arg1 : i32, i32
  }
  func.func @transform_3(%arg0: i32, %arg1: i32, %arg2: i32) -> (i32, i32) {
    %c0_i32 = arith.constant 0 : i32
    return %arg0, %arg1 : i32, i32
  }
}

module attributes {stable_mosaic.version = 11 : i64} {
  func.func @_matmul_kernel(%arg0: i32, %arg1: i32, %arg2: i32, %arg3: memref<16x128xf32, #tpu.memory_space<vmem>>, %arg4: memref<128x64xbf16, #tpu.memory_space<vmem>>, %arg5: memref<1x64xf32, #tpu.memory_space<vmem>>, %arg6: memref<16x64xf32, #tpu.memory_space<vmem>>, %arg7: memref<16x64xf32, #tpu.memory_space<vmem>>, %arg8: memref<16x64xf32, #tpu.memory_space<vmem>>) attributes {dimension_semantics = [#tpu.dimension_semantics<parallel>, #tpu.dimension_semantics<parallel>, #tpu.dimension_semantics<arbitrary>], iteration_bounds = array<i64: 2, 1, 1>, scalar_prefetch = 0 : i64, scratch_operands = 1 : i64, tpu.core_type = #tpu.core_type<tc>, window_params = [{transform_indices = @transform_0, window_bounds = array<i64: 16, 128>}, {transform_indices = @transform_1, window_bounds = array<i64: 128, 64>}, {transform_indices = @transform_2, window_bounds = array<i64: 1, 64>}, {transform_indices = @transform_3, window_bounds = array<i64: 16, 64>}, {transform_indices = @transform_4, window_bounds = array<i64: 16, 64>}]} {
    %c0_i32 = arith.constant 0 : i32
    %0 = arith.cmpi eq, %arg2, %c0_i32 : i32
    %1 = arith.extui %0 : i1 to i32
    %c0_i32_0 = arith.constant 0 : i32
    %2 = arith.cmpi ne, %1, %c0_i32_0 : i32
    scf.if %2 {
      %cst_10 = arith.constant 0.000000e+00 : f32
      %13 = vector.broadcast %cst_10 : f32 to vector<16x64xf32>
      %c0_11 = arith.constant 0 : index
      %c0_12 = arith.constant 0 : index
      %14 = vector.load %arg8[%c0_11, %c0_12] : memref<16x64xf32, #tpu.memory_space<vmem>>, vector<16x64xf32>
      tpu.vector_store %arg8[%c0_11, %c0_12], %13 {strides = array<i32>} : memref<16x64xf32, #tpu.memory_space<vmem>>, vector<16x64xf32>,
    } else {
    }
    %c0 = arith.constant 0 : index
    %c0_1 = arith.constant 0 : index
    %3 = vector.load %arg8[%c0, %c0_1] : memref<16x64xf32, #tpu.memory_space<vmem>>, vector<16x64xf32>
    %c0_2 = arith.constant 0 : index
    %c0_3 = arith.constant 0 : index
    %4 = vector.load %arg3[%c0_2, %c0_3] : memref<16x128xf32, #tpu.memory_space<vmem>>, vector<16x128xf32>
    %5 = arith.truncf %4 : vector<16x128xf32> to vector<16x128xbf16>
    %c0_4 = arith.constant 0 : index
    %c0_5 = arith.constant 0 : index
    %6 = vector.load %arg4[%c0_4, %c0_5] : memref<128x64xbf16, #tpu.memory_space<vmem>>, vector<128x64xbf16>
    %cst = arith.constant dense<0.000000e+00> : vector<16x64xf32>
    %7 = tpu.matmul %5, %6, %cst {dimension_numbers = #tpu.dot_dimension_numbers<[1], [0], [0], [1], [0, 0, 1, 1], [], []>} : vector<16x128xbf16>, vector<128x64xbf16>, vector<16x64xf32> -> vector<16x64xf32>
    %8 = arith.addf %3, %7 : vector<16x64xf32>
    %c0_6 = arith.constant 0 : index
    %c0_7 = arith.constant 0 : index
    %9 = vector.load %arg8[%c0_6, %c0_7] : memref<16x64xf32, #tpu.memory_space<vmem>>, vector<16x64xf32>
    tpu.vector_store %arg8[%c0_6, %c0_7], %8 {strides = array<i32>} : memref<16x64xf32, #tpu.memory_space<vmem>>, vector<16x64xf32>,
    %c0_i32_8 = arith.constant 0 : i32
    %10 = arith.cmpi eq, %arg2, %c0_i32_8 : i32
    %11 = arith.extui %10 : i1 to i32
    %c0_i32_9 = arith.constant 0 : i32
    %12 = arith.cmpi ne, %11, %c0_i32_9 : i32
    scf.if %12 {
      %c0_10 = arith.constant 0 : index
      %c0_11 = arith.constant 0 : index
      %13 = vector.load %arg8[%c0_10, %c0_11] : memref<16x64xf32, #tpu.memory_space<vmem>>, vector<16x64xf32>
      %c0_12 = arith.constant 0 : index
      %c0_13 = arith.constant 0 : index
      %14 = vector.load %arg5[%c0_12, %c0_13] : memref<1x64xf32, #tpu.memory_space<vmem>>, vector<1x64xf32>
      %15 = vector.broadcast %14 : vector<1x64xf32> to vector<16x64xf32>
      %16 = arith.addf %13, %15 : vector<16x64xf32>
      %c0_14 = arith.constant 0 : index
      %c0_15 = arith.constant 0 : index
      %17 = vector.load %arg6[%c0_14, %c0_15] : memref<16x64xf32, #tpu.memory_space<vmem>>, vector<16x64xf32>
      %18 = arith.addf %16, %17 : vector<16x64xf32>
      %c0_16 = arith.constant 0 : index
      %c0_17 = arith.constant 0 : index
      %19 = vector.load %arg7[%c0_16, %c0_17] : memref<16x64xf32, #tpu.memory_space<vmem>>, vector<16x64xf32>
      tpu.vector_store %arg7[%c0_16, %c0_17], %18 {strides = array<i32>} : memref<16x64xf32, #tpu.memory_space<vmem>>, vector<16x64xf32>,
    } else {
    }
    return
  }
  func.func @transform_0(%arg0: i32, %arg1: i32, %arg2: i32) -> (i32, i32) {
    %c0_i32 = arith.constant 0 : i32
    return %arg0, %arg2 : i32, i32
  }
  func.func @transform_1(%arg0: i32, %arg1: i32, %arg2: i32) -> (i32, i32) {
    %c0_i32 = arith.constant 0 : i32
    return %arg2, %arg1 : i32, i32
  }
  func.func @transform_2(%arg0: i32, %arg1: i32, %arg2: i32) -> (i32, i32) {
    %c0_i32 = arith.constant 0 : i32
    %c0_i32_0 = arith.constant 0 : i32
    return %c0_i32, %arg1 : i32, i32
  }
  func.func @transform_3(%arg0: i32, %arg1: i32, %arg2: i32) -> (i32, i32) {
    %c0_i32 = arith.constant 0 : i32
    return %arg0, %arg1 : i32, i32
  }
  func.func @transform_4(%arg0: i32, %arg1: i32, %arg2: i32) -> (i32, i32) {
    %c0_i32 = arith.constant 0 : i32
    return %arg0, %arg1 : i32, i32
  }
}

module attributes {stable_mosaic.version = 11 : i64} {
  func.func @_layernorm_kernel(%arg0: i32, %arg1: memref<16x64xf32, #tpu.memory_space<vmem>>, %arg2: memref<1x64xf32, #tpu.memory_space<vmem>>, %arg3: memref<1x64xf32, #tpu.memory_space<vmem>>, %arg4: memref<16x64xf32, #tpu.memory_space<vmem>>) attributes {dimension_semantics = [#tpu.dimension_semantics<parallel>], iteration_bounds = array<i64: 2>, scalar_prefetch = 0 : i64, scratch_operands = 0 : i64, tpu.core_type = #tpu.core_type<tc>, window_params = [{transform_indices = @transform_0, window_bounds = array<i64: 16, 64>}, {pipeline_mode = #tpu.pipeline_mode<synchronous>, transform_indices = @transform_1, window_bounds = array<i64: 1, 64>}, {pipeline_mode = #tpu.pipeline_mode<synchronous>, transform_indices = @transform_2, window_bounds = array<i64: 1, 64>}, {transform_indices = @transform_3, window_bounds = array<i64: 16, 64>}]} {
    %c0 = arith.constant 0 : index
    %c0_0 = arith.constant 0 : index
    %0 = vector.load %arg1[%c0, %c0_0] : memref<16x64xf32, #tpu.memory_space<vmem>>, vector<16x64xf32>
    %cst = arith.constant dense<0.000000e+00> : vector<16xf32>
    %1 = vector.multi_reduction <add>, %0, %cst [1] : vector<16x64xf32> to vector<16xf32>
    %2 = vector.shape_cast %1 : vector<16xf32> to vector<16x1xf32>
    %cst_1 = arith.constant 6.400000e+01 : f32
    %3 = vector.broadcast %cst_1 : f32 to vector<16x1xf32>
    %4 = arith.divf %2, %3 : vector<16x1xf32>
    %5 = vector.broadcast %4 : vector<16x1xf32> to vector<16x64xf32>
    %6 = arith.subf %0, %5 : vector<16x64xf32>
    %7 = arith.mulf %6, %6 : vector<16x64xf32>
    %cst_2 = arith.constant dense<0.000000e+00> : vector<16xf32>
    %8 = vector.multi_reduction <add>, %7, %cst_2 [1] : vector<16x64xf32> to vector<16xf32>
    %9 = vector.shape_cast %8 : vector<16xf32> to vector<16x1xf32>
    %cst_3 = arith.constant 6.400000e+01 : f32
    %10 = vector.broadcast %cst_3 : f32 to vector<16x1xf32>
    %11 = arith.divf %9, %10 : vector<16x1xf32>
    %cst_4 = arith.constant 9.99999974E-6 : f32
    %12 = vector.broadcast %cst_4 : f32 to vector<16x1xf32>
    %13 = arith.addf %11, %12 : vector<16x1xf32>
    %14 = math.rsqrt %13 : vector<16x1xf32>
    %15 = vector.broadcast %14 : vector<16x1xf32> to vector<16x64xf32>
    %16 = arith.mulf %6, %15 : vector<16x64xf32>
    %c0_5 = arith.constant 0 : index
    %c0_6 = arith.constant 0 : index
    %17 = vector.load %arg2[%c0_5, %c0_6] : memref<1x64xf32, #tpu.memory_space<vmem>>, vector<1x64xf32>
    %18 = vector.broadcast %17 : vector<1x64xf32> to vector<16x64xf32>
    %19 = arith.mulf %16, %18 : vector<16x64xf32>
    %c0_7 = arith.constant 0 : index
    %c0_8 = arith.constant 0 : index
    %20 = vector.load %arg3[%c0_7, %c0_8] : memref<1x64xf32, #tpu.memory_space<vmem>>, vector<1x64xf32>
    %21 = vector.broadcast %20 : vector<1x64xf32> to vector<16x64xf32>
    %22 = arith.addf %19, %21 : vector<16x64xf32>
    %c0_9 = arith.constant 0 : index
    %c0_10 = arith.constant 0 : index
    %23 = vector.load %arg4[%c0_9, %c0_10] : memref<16x64xf32, #tpu.memory_space<vmem>>, vector<16x64xf32>
    tpu.vector_store %arg4[%c0_9, %c0_10], %22 {strides = array<i32>} : memref<16x64xf32, #tpu.memory_space<vmem>>, vector<16x64xf32>,
    return
  }
  func.func @transform_0(%arg0: i32) -> (i32, i32) {
    %c0_i32 = arith.constant 0 : i32
    %c0_i32_0 = arith.constant 0 : i32
    return %arg0, %c0_i32 : i32, i32
  }
  func.func @transform_1(%arg0: i32) -> (i32, i32) {
    %c0_i32 = arith.constant 0 : i32
    %c0_i32_0 = arith.constant 0 : i32
    %c0_i32_1 = arith.constant 0 : i32
    return %c0_i32, %c0_i32_0 : i32, i32
  }
  func.func @transform_2(%arg0: i32) -> (i32, i32) {
    %c0_i32 = arith.constant 0 : i32
    %c0_i32_0 = arith.constant 0 : i32
    %c0_i32_1 = arith.constant 0 : i32
    return %c0_i32, %c0_i32_0 : i32, i32
  }
  func.func @transform_3(%arg0: i32) -> (i32, i32) {
    %c0_i32 = arith.constant 0 : i32
    %c0_i32_0 = arith.constant 0 : i32
    return %arg0, %c0_i32 : i32, i32
  }
}

</mosaic_0001>

<llo_original>
// kernel: transformer_decoder_forward.17
$region0: #{transformer_decoder_forward.17}
  #allocation0 [shape = 'u32[]', space=smem, size = 0x4, offset = 0x4, fixed_abs, tag = 'smem constant byte address 0x4 - core index']
  #allocation1 [shape = 'u32[144,128]{1,0:T(1,128)}', space=vmem, size = 0x12000, scoped, tag = 'internal scratch']
  %s0 = inlined_call_operand.vmem [shape: f32[32,64], index: 0, kind: input, shape index: {}]
  %s1 = inlined_call_operand.vmem [shape: f32[16,64], index: 1, kind: input, shape index: {}]
  %s2 = inlined_call_operand.vmem [shape: f32[1,64], index: 2, kind: input, shape index: {}]
  %s3 = inlined_call_operand.vmem [shape: f32[1,64], index: 3, kind: input, shape index: {}]
  %s4 = inlined_call_operand.vmem [shape: f32[32,64], index: 4, kind: output, shape index: {0}]
  %s5 = inlined_call_operand.vmem [shape: f32[32,64], index: 5, kind: output, shape index: {1}]
  %6 = xla_tuple %s4, %s5
  %s7 = sld [smem:[#allocation0]]
  $region57: #{transformer_decoder_forward.17} parent=0
    _
  %s9 = ssub.s32 1, %s7
  %s10 = scalar_select 0, %s9, %s7
  loop: start=0, step=1, limit=4
  $region2: #{transformer_decoder_forward.17} parent=0 // loop_pre_header
    _
  $region3: #{transformer_decoder_forward.17} parent=0 // loop_header
    %s12 = sphi 0, %s16
    %p13 = scmp.ge.s32.totalorder %s12, 4
    %s22 = sphi 0, %s24
    %s25 = sphi 0, %s22
    %s26 = sphi 0, %s25
    %s42 = sphi 0, %s26
    %s46 = sphi 0, %s46
    %s48 = sphi 0, %s46
    %s49 = sphi 0, %s48
    %s63 = sphi 0, %s49
    %s67 = sphi 0, %s67
    %s69 = sphi 0, %s67
    %s70 = sphi 0, %s69
    %s84 = sphi 0, %s70
    %s88 = sphi 0, %s88
    %s90 = sphi 0, %s88
    %s91 = sphi 0, %s90
    %s105 = sphi 0, %s91
    %s111 = sphi 0, %s113
    %s114 = sphi 0, %s111
    %s115 = sphi 0, %s114
    %s131 = sphi 0, %s115
    %s137 = sphi 0, %s139
    %s140 = sphi 0, %s137
    %s141 = sphi 0, %s140
    %s157 = sphi 0, %s141
  $region4: #{transformer_decoder_forward.17} parent=0 // loop_header_branch
    %15 = sbr.rel (%p13) target = $region8
  $region5: #{transformer_decoder_forward.17} parent=0 // loop_body
    %s17 = ssub.s32 %s12, 1
    %s18 = ssub.s32 %s12, 2
    %s19 = sadd.s32 %s12, 1
    %s20 = ssub.s32 %s12, %s19
    %p21 = scmp.eq.s32.totalorder %s20, 0
    %s23 = sadd.s32 %s22, 1
    %s24 = scalar_select %p21, %s22, %s23
    %p27 = pneg %p21
    %p28 = scmp.eq.s32.totalorder %s12, 1
    %p29 = por %p27, %p28
    %p30 = scmp.ne.s32.totalorder %s22, %s25
    %p31 = scmp.eq.s32.totalorder %s12, 0
    %p32 = por %p30, %p31
    %p33 = scmp.ne.s32.totalorder %s22, %s25
    %p34 = scmp.eq.s32.totalorder %s17, 1
    %p35 = por %p33, %p34
    %p36 = scmp.ne.s32.totalorder %s25, %s26
    %p37 = scmp.eq.s32.totalorder %s17, 0
    %p38 = por %p36, %p37
    %p39 = scmp.ne.s32.totalorder %s25, %s26
    %p40 = scmp.eq.s32.totalorder %s18, 1
    %p41 = por %p39, %p40
    %p43 = scmp.ne.s32.totalorder %s26, %s42
    %p44 = scmp.eq.s32.totalorder %s18, 0
    %p45 = por %p43, %p44
    %s47 = sadd.s32 %s46, 1
    %p50 = scmp.eq.s32.totalorder %s12, 1
    %p51 = scmp.ne.s32.totalorder %s46, %s48
    %p52 = scmp.eq.s32.totalorder %s12, 0
    %p53 = por %p51, %p52
    %p54 = scmp.ne.s32.totalorder %s46, %s48
    %p55 = scmp.eq.s32.totalorder %s17, 1
    %p56 = por %p54, %p55
    %p57 = scmp.ne.s32.totalorder %s48, %s49
    %p58 = scmp.eq.s32.totalorder %s17, 0
    %p59 = por %p57, %p58
    %p60 = scmp.ne.s32.totalorder %s48, %s49
    %p61 = scmp.eq.s32.totalorder %s18, 1
    %p62 = por %p60, %p61
    %p64 = scmp.ne.s32.totalorder %s49, %s63
    %p65 = scmp.eq.s32.totalorder %s18, 0
    %p66 = por %p64, %p65
    %s68 = sadd.s32 %s67, 1
    %p71 = scmp.eq.s32.totalorder %s12, 1
    %p72 = scmp.ne.s32.totalorder %s67, %s69
    %p73 = scmp.eq.s32.totalorder %s12, 0
    %p74 = por %p72, %p73
    %p75 = scmp.ne.s32.totalorder %s67, %s69
    %p76 = scmp.eq.s32.totalorder %s17, 1
    %p77 = por %p75, %p76
    %p78 = scmp.ne.s32.totalorder %s69, %s70
    %p79 = scmp.eq.s32.totalorder %s17, 0
    %p80 = por %p78, %p79
    %p81 = scmp.ne.s32.totalorder %s69, %s70
    %p82 = scmp.eq.s32.totalorder %s18, 1
    %p83 = por %p81, %p82
    %p85 = scmp.ne.s32.totalorder %s70, %s84
    %p86 = scmp.eq.s32.totalorder %s18, 0
    %p87 = por %p85, %p86
    %s89 = sadd.s32 %s88, 1
    %p92 = scmp.eq.s32.totalorder %s12, 1
    %p93 = scmp.ne.s32.totalorder %s88, %s90
    %p94 = scmp.eq.s32.totalorder %s12, 0
    %p95 = por %p93, %p94
    %p96 = scmp.ne.s32.totalorder %s88, %s90
    %p97 = scmp.eq.s32.totalorder %s17, 1
    %p98 = por %p96, %p97
    %p99 = scmp.ne.s32.totalorder %s90, %s91
    %p100 = scmp.eq.s32.totalorder %s17, 0
    %p101 = por %p99, %p100
    %p102 = scmp.ne.s32.totalorder %s90, %s91
    %p103 = scmp.eq.s32.totalorder %s18, 1
    %p104 = por %p102, %p103
    %p106 = scmp.ne.s32.totalorder %s91, %s105
    %p107 = scmp.eq.s32.totalorder %s18, 0
    %p108 = por %p106, %p107
    %s109 = ssub.s32 %s12, %s19
    %p110 = scmp.eq.s32.totalorder %s109, 0
    %s112 = sadd.s32 %s111, 1
    %s113 = scalar_select %p110, %s111, %s112
    %p116 = pneg %p110
    %p117 = scmp.eq.s32.totalorder %s12, 1
    %p118 = por %p116, %p117
    %p119 = scmp.ne.s32.totalorder %s111, %s114
    %p120 = scmp.eq.s32.totalorder %s12, 0
    %p121 = por %p119, %p120
    %p122 = scmp.ne.s32.totalorder %s111, %s114
    %p123 = scmp.eq.s32.totalorder %s17, 1
    %p124 = por %p122, %p123
    %p125 = scmp.ne.s32.totalorder %s114, %s115
    %p126 = scmp.eq.s32.totalorder %s17, 0
    %p127 = por %p125, %p126
    %p128 = scmp.ne.s32.totalorder %s114, %s115
    %p129 = scmp.eq.s32.totalorder %s18, 1
    %p130 = por %p128, %p129
    %p132 = scmp.ne.s32.totalorder %s115, %s131
    %p133 = scmp.eq.s32.totalorder %s18, 0
    %p134 = por %p132, %p133
    %s135 = ssub.s32 %s12, %s19
    %p136 = scmp.eq.s32.totalorder %s135, 0
    %s138 = sadd.s32 %s137, 1
    %s139 = scalar_select %p136, %s137, %s138
    %p142 = pneg %p136
    %p143 = scmp.eq.s32.totalorder %s12, 1
    %p144 = por %p142, %p143
    %p145 = scmp.ne.s32.totalorder %s137, %s140
    %p146 = scmp.eq.s32.totalorder %s12, 0
    %p147 = por %p145, %p146
    %p148 = scmp.ne.s32.totalorder %s137, %s140
    %p149 = scmp.eq.s32.totalorder %s17, 1
    %p150 = por %p148, %p149
    %p151 = scmp.ne.s32.totalorder %s140, %s141
    %p152 = scmp.eq.s32.totalorder %s17, 0
    %p153 = por %p151, %p152
    %p154 = scmp.ne.s32.totalorder %s140, %s141
    %p155 = scmp.eq.s32.totalorder %s18, 1
    %p156 = por %p154, %p155
    %p158 = scmp.ne.s32.totalorder %s141, %s157
    %p159 = scmp.eq.s32.totalorder %s18, 0
    %p160 = por %p158, %p159
    %p161 = scmp.le.s32.totalorder 1, %s12
    %p162 = scmp.lt.s32.totalorder %s12, 3
    %p163 = pnand %p161, %p162
    %p164 = pneg %p163
    // Predicated region
    $region9: #{transformer_decoder_forward.17} parent=5 // pred_check
      _
    $region10: #{transformer_decoder_forward.17} parent=5 // pred_check_branch
      %166 = sbr.rel (%p163) target = $region12
    $region11: #{transformer_decoder_forward.17} parent=5 // pred_region
      %s167 = ssub.s32 %s12, 1
      // Predicated region
      $region13: #{transformer_decoder_forward.17} parent=11 // pred_check
        %p168 = pneg %p59
      $region14: #{transformer_decoder_forward.17} parent=11 // pred_check_branch
        %170 = sbr.rel (%p168) target = $region16
      $region15: #{transformer_decoder_forward.17} parent=11 // pred_region
        _
      $region16: #{transformer_decoder_forward.17} parent=11 // pred_fallthru
        _
      // Predicated region
      $region17: #{transformer_decoder_forward.17} parent=11 // pred_check
        %p171 = pneg %p80
      $region18: #{transformer_decoder_forward.17} parent=11 // pred_check_branch
        %173 = sbr.rel (%p171) target = $region20
      $region19: #{transformer_decoder_forward.17} parent=11 // pred_region
        _
      $region20: #{transformer_decoder_forward.17} parent=11 // pred_fallthru
        _
      // Predicated region
      $region21: #{transformer_decoder_forward.17} parent=11 // pred_check
        %p174 = pneg %p101
      $region22: #{transformer_decoder_forward.17} parent=11 // pred_check_branch
        %176 = sbr.rel (%p174) target = $region24
      $region23: #{transformer_decoder_forward.17} parent=11 // pred_region
        _
      $region24: #{transformer_decoder_forward.17} parent=11 // pred_fallthru
        _
    $region12: #{transformer_decoder_forward.17} parent=5 // pred_fallthru
      _
    %p177 = scmp.lt.s32.totalorder %s12, 2
    // Predicated region
    $region25: #{transformer_decoder_forward.17} parent=5 // pred_check
      %p178 = pneg %p177
    $region26: #{transformer_decoder_forward.17} parent=5 // pred_check_branch
      %180 = sbr.rel (%p178) target = $region28
    $region27: #{transformer_decoder_forward.17} parent=5 // pred_region
      // Predicated region
      $region29: #{transformer_decoder_forward.17} parent=27 // pred_check
        %p181 = pneg %p32
      $region30: #{transformer_decoder_forward.17} parent=27 // pred_check_branch
        %183 = sbr.rel (%p181) target = $region32
      $region31: #{transformer_decoder_forward.17} parent=27 // pred_region
        %s184 = smul.u32 2, %s12
        %p185 = scmp.lt.s32.totalorder %s184, 3
        %s186 = scalar_select %p185, %s184, 3
        %s187 = smul.addr %s186, 8
        %s188 = scalar_lea.vmem %s0, %s187
        %s189 = smul.u32 2, %s12
      $region32: #{transformer_decoder_forward.17} parent=27 // pred_fallthru
        _
    $region28: #{transformer_decoder_forward.17} parent=5 // pred_fallthru
      _
    %p190 = scmp.le.s32.totalorder 1, %s12
    %p191 = scmp.lt.s32.totalorder %s12, 3
    %p192 = pnand %p190, %p191
    %p193 = pneg %p192
    // Predicated region
    $region33: #{transformer_decoder_forward.17} parent=5 // pred_check
      _
    $region34: #{transformer_decoder_forward.17} parent=5 // pred_check_branch
      %195 = sbr.rel (%p192) target = $region36
    $region35: #{transformer_decoder_forward.17} parent=5 // pred_region
      %s196 = ssub.s32 %s12, 1
      %s197 = smul.u32 2, %s17
      %p198 = scmp.lt.s32.totalorder %s197, 3
      %s199 = scalar_select %p198, %s197, 3
      %s200 = smul.addr %s199, 8
      %s201 = scalar_lea.vmem %s0, %s200
      %p202 = pneg %p38
      %p203 = pneg %p35
      %p204 = pneg %p59
      %p205 = pneg %p56
      %p206 = pneg %p80
      %p207 = pneg %p77
      %p208 = pneg %p101
      %p209 = pneg %p98
      %p210 = pneg %p127
      %p211 = pneg %p124
      %s212 = smul.u32 2, %s17
      %p213 = scmp.lt.s32.totalorder %s212, 3
      %s214 = scalar_select %p213, %s212, 3
      %s215 = smul.addr %s214, 8
      %s216 = scalar_lea.vmem %s4, %s215
      %p217 = pneg %p153
      %p218 = pneg %p150
      %s219 = smul.u32 2, %s17
      %p220 = scmp.lt.s32.totalorder %s219, 3
      %s221 = scalar_select %p220, %s219, 3
      %s222 = smul.addr %s221, 8
      %s223 = scalar_lea.vmem %s5, %s222
      %s224 = smul.u32 2, %s17
      %p225 = scmp.lt.s32.totalorder %s224, 3
      %s226 = scalar_select %p225, %s224, 3
      %s227 = smul.addr %s226, 8
      %s228 = scalar_lea.vmem %s0, %s227
      %s229 = smul.u32 2, %s17
      %s230 = smul.u32 2, %s17
      %p231 = scmp.lt.s32.totalorder %s230, 3
      %s232 = scalar_select %p231, %s230, 3
      %s233 = smul.addr %s232, 8
      %s234 = scalar_lea.vmem %s4, %s233
      %s235 = smul.u32 2, %s17
      %s236 = smul.u32 2, %s17
      %p237 = scmp.lt.s32.totalorder %s236, 3
      %s238 = scalar_select %p237, %s236, 3
      %s239 = smul.addr %s238, 8
      %s240 = scalar_lea.vmem %s5, %s239
      %s241 = smul.u32 2, %s17
      %v242 = vld [vmem:[%s228] sm:$0xff]
      %v243 = vld [vmem:[%s228 + $0x8] sm:$0xff]
      %vm244 = vcmask 523264
      %v245 = vsel %vm244, %v242, 0.0
      %246 = vadd.xlane.f32.xlu0 %v245
      %v247 = vpop.xlane.xlu0 %246
      %v248 = vsel %vm244, %v243, 0.0
      %249 = vadd.xlane.f32.xlu0 %v248
      %v250 = vpop.xlane.xlu0 %249
      %v251 = vrcp.pop 64.0
      %v252 = vmul.f32 %v247, %v251
      %v253 = vmul.f32 %v250, %v251
      %v254 = vsub.f32 %v242, %v252
      %v255 = vsub.f32 %v243, %v253
      %v256 = vmul.f32 %v254, %v254
      %v257 = vmul.f32 %v255, %v255
      %v258 = vsel %vm244, %v256, 0.0
      %259 = vadd.xlane.f32.xlu0 %v258
      %v260 = vpop.xlane.xlu0 %259
      %v261 = vsel %vm244, %v257, 0.0
      %262 = vadd.xlane.f32.xlu0 %v261
      %v263 = vpop.xlane.xlu0 %262
      %v264 = vmul.f32 %v260, %v251
      %v265 = vmul.f32 %v263, %v251
      %v266 = vadd.f32 %v264, 1e-05
      %v267 = vadd.f32 %v265, 1e-05
      %v268 = vrsqrt.pop %v266
      %v269 = vrsqrt.pop %v267
      %v270 = vmul.f32 %v254, %v268
      %v271 = vmul.f32 %v255, %v269
      %v272 = vld [vmem:[%s2] sm:$0x1]
      %v274 = vlaneseq
      %v275 = vshrl.u32 %v274, 7
      %v276 = vsub.s32 0, %v275
      %v277 = vrot.slane %v272, %v276
      %v279 = vmul.f32 %v270, %v277
      %v280 = vmul.f32 %v271, %v277
      %v281 = vld [vmem:[%s3] sm:$0x1]
      %v283 = vlaneseq
      %v284 = vshrl.u32 %v283, 7
      %v285 = vsub.s32 0, %v284
      %v286 = vrot.slane %v281, %v285
      %v288 = vadd.f32 %v279, %v286
      %v289 = vadd.f32 %v280, %v286
      %290 = vst.msk [vmem:[%s234] sm:$0xff] %vm244, %v288
      %291 = vst.msk [vmem:[%s234 + $0x8] sm:$0xff] %vm244, %v289
      %v292 = vld [vmem:[%s1] sm:$0xff]
      %v293 = vld [vmem:[%s1 + $0x8] sm:$0xff]
      %v294 = vadd.f32 %v288, %v292
      %v295 = vadd.f32 %v289, %v293
      %296 = vst.msk [vmem:[%s240] sm:$0xff] %vm244, %v294
      %297 = vst.msk [vmem:[%s240 + $0x8] sm:$0xff] %vm244, %v295
      %s298 = smul.u32 2, %s17
      %p299 = scmp.lt.s32.totalorder %s298, 3
      %s300 = scalar_select %p299, %s298, 3
      %s301 = smul.addr %s300, 8
      %s302 = scalar_lea.vmem %s4, %s301
      %s303 = smul.u32 2, %s17
      %p304 = scmp.lt.s32.totalorder %s303, 3
      %s305 = scalar_select %p304, %s303, 3
      %s306 = smul.addr %s305, 8
      %s307 = scalar_lea.vmem %s5, %s306
      // Predicated region
      $region37: #{transformer_decoder_forward.17} parent=35 // pred_check
        %p308 = pneg %p124
      $region38: #{transformer_decoder_forward.17} parent=35 // pred_check_branch
        %310 = sbr.rel (%p308) target = $region40
      $region39: #{transformer_decoder_forward.17} parent=35 // pred_region
        %s311 = smul.u32 2, %s17
      $region40: #{transformer_decoder_forward.17} parent=35 // pred_fallthru
        _
      // Predicated region
      $region41: #{transformer_decoder_forward.17} parent=35 // pred_check
        %p312 = pneg %p150
      $region42: #{transformer_decoder_forward.17} parent=35 // pred_check_branch
        %314 = sbr.rel (%p312) target = $region44
      $region43: #{transformer_decoder_forward.17} parent=35 // pred_region
        %s315 = smul.u32 2, %s17
      $region44: #{transformer_decoder_forward.17} parent=35 // pred_fallthru
        _
    $region36: #{transformer_decoder_forward.17} parent=5 // pred_fallthru
      _
    %p316 = scmp.le.s32.totalorder 2, %s12
    // Predicated region
    $region45: #{transformer_decoder_forward.17} parent=5 // pred_check
      %p317 = pneg %p316
    $region46: #{transformer_decoder_forward.17} parent=5 // pred_check_branch
      %319 = sbr.rel (%p317) target = $region48
    $region47: #{transformer_decoder_forward.17} parent=5 // pred_region
      %s320 = ssub.s32 %s12, 2
      // Predicated region
      $region49: #{transformer_decoder_forward.17} parent=47 // pred_check
        %p321 = pneg %p130
      $region50: #{transformer_decoder_forward.17} parent=47 // pred_check_branch
        %323 = sbr.rel (%p321) target = $region52
      $region51: #{transformer_decoder_forward.17} parent=47 // pred_region
        %s324 = smul.u32 2, %s18
        %p325 = scmp.lt.s32.totalorder %s324, 3
        %s326 = scalar_select %p325, %s324, 3
        %s327 = smul.addr %s326, 8
        %s328 = scalar_lea.vmem %s4, %s327
      $region52: #{transformer_decoder_forward.17} parent=47 // pred_fallthru
        _
      // Predicated region
      $region53: #{transformer_decoder_forward.17} parent=47 // pred_check
        %p329 = pneg %p156
      $region54: #{transformer_decoder_forward.17} parent=47 // pred_check_branch
        %331 = sbr.rel (%p329) target = $region56
      $region55: #{transformer_decoder_forward.17} parent=47 // pred_region
        %s332 = smul.u32 2, %s18
        %p333 = scmp.lt.s32.totalorder %s332, 3
        %s334 = scalar_select %p333, %s332, 3
        %s335 = smul.addr %s334, 8
        %s336 = scalar_lea.vmem %s5, %s335
      $region56: #{transformer_decoder_forward.17} parent=47 // pred_fallthru
        _
    $region48: #{transformer_decoder_forward.17} parent=5 // pred_fallthru
      _
  $region6: #{transformer_decoder_forward.17} parent=0 // loop_footer
    %s16 = sadd.s32 1, %s12
  $region7: #{transformer_decoder_forward.17} parent=0 // loop_footer_branch
    %11 = sbr.rel target = $region3
  $region8: #{transformer_decoder_forward.17} parent=0 // loop_exit
    _

// kernel: transformer_decoder_forward.18
$region0: #{transformer_decoder_forward.18}
  #allocation0 [shape = 'u32[]', space=smem, size = 0x4, offset = 0x4, fixed_abs, tag = 'smem constant byte address 0x4 - core index']
  #allocation1 [shape = 'u32[144,128]{1,0:T(1,128)}', space=vmem, size = 0x12000, scoped, tag = 'internal scratch']
  #allocation2 [shape = 'f32[16,128]{1,0:T(8,128)}', space=vmem, size = 0x2000, scoped, tag = 'scratch operand']
  %s0 = inlined_call_operand.vmem [shape: f32[32,64], index: 0, kind: input, shape index: {}]
  %s1 = inlined_call_operand.vmem [shape: bf16[64,128], index: 1, kind: input, shape index: {}]
  %s2 = inlined_call_operand.vmem [shape: f32[1,128], index: 2, kind: input, shape index: {}]
  %s3 = inlined_call_operand.vmem [shape: f32[32,128], index: 3, kind: output, shape index: {}]
  %s4 = sld [smem:[#allocation0]]
  $region53: #{transformer_decoder_forward.18} parent=0
    _
  %s6 = ssub.s32 1, %s4
  %s7 = scalar_select 0, %s6, %s4
  loop: start=0, step=1, limit=4
  $region2: #{transformer_decoder_forward.18} parent=0 // loop_pre_header
    _
  $region3: #{transformer_decoder_forward.18} parent=0 // loop_header
    %s9 = sphi 0, %s13
    %p10 = scmp.ge.s32.totalorder %s9, 4
    %s16 = sphi 0, %s35
    %s17 = sphi 0, %s31
    %s18 = sphi 0, %s27
    %s19 = sphi 0, %s16
    %s20 = sphi 0, %s17
    %s21 = sphi 0, %s18
    %s22 = sphi 0, %s19
    %s23 = sphi 0, %s20
    %s24 = sphi 0, %s21
    %s40 = sphi 0, %s42
    %s43 = sphi 0, %s40
    %s44 = sphi 0, %s43
    %s60 = sphi 0, %s44
    %s68 = sphi 0, %s70
    %s71 = sphi 0, %s68
    %s72 = sphi 0, %s71
    %s88 = sphi 0, %s72
    %s94 = sphi 0, %s96
    %s97 = sphi 0, %s94
    %s98 = sphi 0, %s97
    %s114 = sphi 0, %s98
    %s122 = sphi 0, %s124
    %s125 = sphi 0, %s122
    %s126 = sphi 0, %s125
    %s142 = sphi 0, %s126
  $region4: #{transformer_decoder_forward.18} parent=0 // loop_header_branch
    %12 = sbr.rel (%p10) target = $region8
  $region5: #{transformer_decoder_forward.18} parent=0 // loop_body
    %s14 = ssub.s32 %s9, 1
    %s15 = ssub.s32 %s9, 2
    %s25 = sadd.s32 1, %s18
    %p26 = scmp.ge.s32.totalorder %s25, 1
    %s27 = scalar_select %p26, 0, %s25
    %s28 = sadd.s32 1, %s17
    %s29 = scalar_select %p26, %s28, %s17
    %p30 = scmp.ge.s32.totalorder %s29, 1
    %s31 = scalar_select %p30, 0, %s29
    %s32 = sadd.s32 1, %s16
    %s33 = scalar_select %p30, %s32, %s16
    %p34 = scmp.ge.s32.totalorder %s33, 2
    %s35 = scalar_select %p34, 0, %s33
    %s36 = ssub.s32 %s16, %s35
    %s37 = ssub.s32 %s18, %s27
    %s38 = sor.u32 %s36, %s37
    %p39 = scmp.eq.s32.totalorder %s38, 0
    %s41 = sadd.s32 %s40, 1
    %s42 = scalar_select %p39, %s40, %s41
    %p45 = pneg %p39
    %p46 = scmp.eq.s32.totalorder %s9, 1
    %p47 = por %p45, %p46
    %p48 = scmp.ne.s32.totalorder %s40, %s43
    %p49 = scmp.eq.s32.totalorder %s9, 0
    %p50 = por %p48, %p49
    %p51 = scmp.ne.s32.totalorder %s40, %s43
    %p52 = scmp.eq.s32.totalorder %s14, 1
    %p53 = por %p51, %p52
    %p54 = scmp.ne.s32.totalorder %s43, %s44
    %p55 = scmp.eq.s32.totalorder %s14, 0
    %p56 = por %p54, %p55
    %p57 = scmp.ne.s32.totalorder %s43, %s44
    %p58 = scmp.eq.s32.totalorder %s15, 1
    %p59 = por %p57, %p58
    %p61 = scmp.ne.s32.totalorder %s44, %s60
    %p62 = scmp.eq.s32.totalorder %s15, 0
    %p63 = por %p61, %p62
    %s64 = ssub.s32 %s18, %s27
    %s65 = ssub.s32 %s17, %s31
    %s66 = sor.u32 %s64, %s65
    %p67 = scmp.eq.s32.totalorder %s66, 0
    %s69 = sadd.s32 %s68, 1
    %s70 = scalar_select %p67, %s68, %s69
    %p73 = pneg %p67
    %p74 = scmp.eq.s32.totalorder %s9, 1
    %p75 = por %p73, %p74
    %p76 = scmp.ne.s32.totalorder %s68, %s71
    %p77 = scmp.eq.s32.totalorder %s9, 0
    %p78 = por %p76, %p77
    %p79 = scmp.ne.s32.totalorder %s68, %s71
    %p80 = scmp.eq.s32.totalorder %s14, 1
    %p81 = por %p79, %p80
    %p82 = scmp.ne.s32.totalorder %s71, %s72
    %p83 = scmp.eq.s32.totalorder %s14, 0
    %p84 = por %p82, %p83
    %p85 = scmp.ne.s32.totalorder %s71, %s72
    %p86 = scmp.eq.s32.totalorder %s15, 1
    %p87 = por %p85, %p86
    %p89 = scmp.ne.s32.totalorder %s72, %s88
    %p90 = scmp.eq.s32.totalorder %s15, 0
    %p91 = por %p89, %p90
    %s92 = ssub.s32 %s17, %s31
    %p93 = scmp.eq.s32.totalorder %s92, 0
    %s95 = sadd.s32 %s94, 1
    %s96 = scalar_select %p93, %s94, %s95
    %p99 = pneg %p93
    %p100 = scmp.eq.s32.totalorder %s9, 1
    %p101 = por %p99, %p100
    %p102 = scmp.ne.s32.totalorder %s94, %s97
    %p103 = scmp.eq.s32.totalorder %s9, 0
    %p104 = por %p102, %p103
    %p105 = scmp.ne.s32.totalorder %s94, %s97
    %p106 = scmp.eq.s32.totalorder %s14, 1
    %p107 = por %p105, %p106
    %p108 = scmp.ne.s32.totalorder %s97, %s98
    %p109 = scmp.eq.s32.totalorder %s14, 0
    %p110 = por %p108, %p109
    %p111 = scmp.ne.s32.totalorder %s97, %s98
    %p112 = scmp.eq.s32.totalorder %s15, 1
    %p113 = por %p111, %p112
    %p115 = scmp.ne.s32.totalorder %s98, %s114
    %p116 = scmp.eq.s32.totalorder %s15, 0
    %p117 = por %p115, %p116
    %s118 = ssub.s32 %s16, %s35
    %s119 = ssub.s32 %s17, %s31
    %s120 = sor.u32 %s118, %s119
    %p121 = scmp.eq.s32.totalorder %s120, 0
    %s123 = sadd.s32 %s122, 1
    %s124 = scalar_select %p121, %s122, %s123
    %p127 = pneg %p121
    %p128 = scmp.eq.s32.totalorder %s9, 1
    %p129 = por %p127, %p128
    %p130 = scmp.ne.s32.totalorder %s122, %s125
    %p131 = scmp.eq.s32.totalorder %s9, 0
    %p132 = por %p130, %p131
    %p133 = scmp.ne.s32.totalorder %s122, %s125
    %p134 = scmp.eq.s32.totalorder %s14, 1
    %p135 = por %p133, %p134
    %p136 = scmp.ne.s32.totalorder %s125, %s126
    %p137 = scmp.eq.s32.totalorder %s14, 0
    %p138 = por %p136, %p137
    %p139 = scmp.ne.s32.totalorder %s125, %s126
    %p140 = scmp.eq.s32.totalorder %s15, 1
    %p141 = por %p139, %p140
    %p143 = scmp.ne.s32.totalorder %s126, %s142
    %p144 = scmp.eq.s32.totalorder %s15, 0
    %p145 = por %p143, %p144
    %p146 = scmp.le.s32.totalorder 1, %s9
    %p147 = scmp.lt.s32.totalorder %s9, 3
    %p148 = pnand %p146, %p147
    %p149 = pneg %p148
    // Predicated region
    $region9: #{transformer_decoder_forward.18} parent=5 // pred_check
      _
    $region10: #{transformer_decoder_forward.18} parent=5 // pred_check_branch
      %151 = sbr.rel (%p148) target = $region12
    $region11: #{transformer_decoder_forward.18} parent=5 // pred_region
      %s152 = ssub.s32 %s9, 1
      // Predicated region
      $region13: #{transformer_decoder_forward.18} parent=11 // pred_check
        %p153 = pneg %p84
      $region14: #{transformer_decoder_forward.18} parent=11 // pred_check_branch
        %155 = sbr.rel (%p153) target = $region16
      $region15: #{transformer_decoder_forward.18} parent=11 // pred_region
        %s156 = smul.u32 8, %s21
        %p157 = scmp.lt.s32.totalorder %s156, 7
        %s158 = scalar_select %p157, %s156, 7
        %p159 = scmp.lt.s32.totalorder %s20, 0
        %s160 = scalar_select %p159, %s20, 0
        %s161 = sadd.s32 %s160, %s158
        %s162 = smul.addr %s161, 4
        %s163 = scalar_lea.vmem %s1, %s162
        %s164 = smul.u32 8, %s21
      $region16: #{transformer_decoder_forward.18} parent=11 // pred_fallthru
        _
      // Predicated region
      $region17: #{transformer_decoder_forward.18} parent=11 // pred_check
        %p165 = pneg %p110
      $region18: #{transformer_decoder_forward.18} parent=11 // pred_check_branch
        %167 = sbr.rel (%p165) target = $region20
      $region19: #{transformer_decoder_forward.18} parent=11 // pred_region
        %p168 = scmp.lt.s32.totalorder %s20, 0
        %s169 = scalar_select %p168, %s20, 0
        %s170 = scalar_lea.vmem %s2, %s169
      $region20: #{transformer_decoder_forward.18} parent=11 // pred_fallthru
        _
    $region12: #{transformer_decoder_forward.18} parent=5 // pred_fallthru
      _
    %p171 = scmp.lt.s32.totalorder %s9, 2
    // Predicated region
    $region21: #{transformer_decoder_forward.18} parent=5 // pred_check
      %p172 = pneg %p171
    $region22: #{transformer_decoder_forward.18} parent=5 // pred_check_branch
      %174 = sbr.rel (%p172) target = $region24
    $region23: #{transformer_decoder_forward.18} parent=5 // pred_region
      // Predicated region
      $region25: #{transformer_decoder_forward.18} parent=23 // pred_check
        %p175 = pneg %p50
      $region26: #{transformer_decoder_forward.18} parent=23 // pred_check_branch
        %177 = sbr.rel (%p175) target = $region28
      $region27: #{transformer_decoder_forward.18} parent=23 // pred_region
        %s178 = smul.u32 2, %s16
        %p179 = scmp.lt.s32.totalorder %s178, 3
        %s180 = scalar_select %p179, %s178, 3
        %p181 = scmp.lt.s32.totalorder %s18, 0
        %s182 = scalar_select %p181, %s18, 0
        %s183 = sadd.s32 %s182, %s180
        %s184 = smul.addr %s183, 8
        %s185 = scalar_lea.vmem %s0, %s184
        %s186 = smul.u32 2, %s16
      $region28: #{transformer_decoder_forward.18} parent=23 // pred_fallthru
        _
    $region24: #{transformer_decoder_forward.18} parent=5 // pred_fallthru
      _
    %p187 = scmp.le.s32.totalorder 1, %s9
    %p188 = scmp.lt.s32.totalorder %s9, 3
    %p189 = pnand %p187, %p188
    %p190 = pneg %p189
    // Predicated region
    $region29: #{transformer_decoder_forward.18} parent=5 // pred_check
      _
    $region30: #{transformer_decoder_forward.18} parent=5 // pred_check_branch
      %192 = sbr.rel (%p189) target = $region32
    $region31: #{transformer_decoder_forward.18} parent=5 // pred_region
      %s193 = ssub.s32 %s9, 1
      %s194 = smul.u32 2, %s19
      %p195 = scmp.lt.s32.totalorder %s194, 3
      %s196 = scalar_select %p195, %s194, 3
      %p197 = scmp.lt.s32.totalorder %s21, 0
      %s198 = scalar_select %p197, %s21, 0
      %s199 = sadd.s32 %s198, %s196
      %s200 = smul.addr %s199, 8
      %s201 = scalar_lea.vmem %s0, %s200
      %p202 = pneg %p56
      %p203 = pneg %p53
      %s204 = smul.u32 8, %s21
      %p205 = scmp.lt.s32.totalorder %s204, 7
      %s206 = scalar_select %p205, %s204, 7
      %p207 = scmp.lt.s32.totalorder %s20, 0
      %s208 = scalar_select %p207, %s20, 0
      %s209 = sadd.s32 %s208, %s206
      %s210 = smul.addr %s209, 4
      %s211 = scalar_lea.vmem %s1, %s210
      %p212 = pneg %p84
      %p213 = pneg %p81
      %p214 = scmp.lt.s32.totalorder %s20, 0
      %s215 = scalar_select %p214, %s20, 0
      %s216 = scalar_lea.vmem %s2, %s215
      %p217 = pneg %p110
      %p218 = pneg %p107
      %p219 = pneg %p138
      %p220 = pneg %p135
      %s221 = smul.u32 2, %s19
      %p222 = scmp.lt.s32.totalorder %s221, 3
      %s223 = scalar_select %p222, %s221, 3
      %p224 = scmp.lt.s32.totalorder %s20, 0
      %s225 = scalar_select %p224, %s20, 0
      %s226 = sadd.s32 %s225, %s223
      %s227 = smul.addr %s226, 8
      %s228 = scalar_lea.vmem %s3, %s227
      %s229 = smul.u32 2, %s19
      %p230 = scmp.lt.s32.totalorder %s229, 3
      %s231 = scalar_select %p230, %s229, 3
      %p232 = scmp.lt.s32.totalorder %s21, 0
      %s233 = scalar_select %p232, %s21, 0
      %s234 = sadd.s32 %s233, %s231
      %s235 = smul.addr %s234, 8
      %s236 = scalar_lea.vmem %s0, %s235
      %s237 = smul.u32 2, %s19
      %s238 = smul.u32 8, %s21
      %p239 = scmp.lt.s32.totalorder %s238, 7
      %s240 = scalar_select %p239, %s238, 7
      %p241 = scmp.lt.s32.totalorder %s20, 0
      %s242 = scalar_select %p241, %s20, 0
      %s243 = sadd.s32 %s242, %s240
      %s244 = smul.addr %s243, 4
      %s245 = scalar_lea.vmem %s1, %s244
      %s246 = smul.u32 8, %s21
      %p247 = scmp.lt.s32.totalorder %s20, 0
      %s248 = scalar_select %p247, %s20, 0
      %s249 = scalar_lea.vmem %s2, %s248
      %s250 = smul.u32 2, %s19
      %p251 = scmp.lt.s32.totalorder %s250, 3
      %s252 = scalar_select %p251, %s250, 3
      %p253 = scmp.lt.s32.totalorder %s20, 0
      %s254 = scalar_select %p253, %s20, 0
      %s255 = sadd.s32 %s254, %s252
      %s256 = smul.addr %s255, 8
      %s257 = scalar_lea.vmem %s3, %s256
      %s258 = smul.u32 2, %s19
      %p260 = scmp.eq.s32.totalorder %s21, 0
      // Predicated region
      $region33: #{transformer_decoder_forward.18} parent=31 // pred_check
        %p261 = pneg %p260
      $region34: #{transformer_decoder_forward.18} parent=31 // pred_check_branch
        %263 = sbr.rel (%p261) target = $region36
      $region35: #{transformer_decoder_forward.18} parent=31 // pred_region
        %264 = vst [vmem:[#allocation2] sm:$0xff] 0.0
        %265 = vst [vmem:[#allocation2 + $0x8] sm:$0xff] 0.0
      $region36: #{transformer_decoder_forward.18} parent=31 // pred_fallthru
        _
      %v266 = vld [vmem:[#allocation2] sm:$0xff]
      %v267 = vld [vmem:[#allocation2 + $0x8] sm:$0xff]
      %v268 = vld [vmem:[%s236] sm:$0xff]
      %v269 = vld [vmem:[%s236 + $0x8] sm:$0xff]
      %v270 = vpack.c.bf16 %v269, %v268
      %v271 = vld [vmem:[%s245] sm:$0xf]
      %v272 = vld [vmem:[%s245 + $0x4] sm:$0xf]
      %v273 = vld [vmem:[%s245 + $0x8] sm:$0xf]
      %v274 = vld [vmem:[%s245 + $0xc] sm:$0xf]
      %v275 = vld [vmem:[%s245 + $0x10] sm:$0xf]
      %v276 = vld [vmem:[%s245 + $0x14] sm:$0xf]
      %v277 = vld [vmem:[%s245 + $0x18] sm:$0xf]
      %v278 = vld [vmem:[%s245 + $0x1c] sm:$0xf]
      %v287 = vunpack.c.l.b16 %v271
      %v288 = vunpack.c.l.b16 %v272
      %v289 = vunpack.c.l.b16 %v273
      %v290 = vunpack.c.l.b16 %v274
      %v291 = vunpack.c.l.b16 %v275
      %v292 = vunpack.c.l.b16 %v276
      %v293 = vunpack.c.l.b16 %v277
      %v294 = vunpack.c.l.b16 %v278
      %v295 = vpack.c.b16 %v288, %v287
      %v296 = vpack.c.b16 %v290, %v289
      %v297 = vpack.c.b16 %v292, %v291
      %v298 = vpack.c.b16 %v294, %v293
      %vm303 = vcmask 523264
      %v305 = vsel %vm303, %v270, 0
      %307 = vmatprep.subr.bf16.mxu0 0
      %308 = vmatpush1.bf16.msra.mxu0 %v295
      %309 = vmatprep.subr.bf16.mxu0 0
      %310 = vmatpush1.bf16.msra.mxu0 %v296
      %311 = vmatprep.subr.bf16.mxu0 0
      %312 = vmatpush1.bf16.msra.mxu0 %v297
      %313 = vmatprep.subr.bf16.mxu0 0
      %314 = vmatpush1.bf16.msra.mxu0 %v298
      %315 = vmatprep.subr.bf16.mxu0 0
      %316 = vmatpush1.bf16.msra.mxu0 0
      %317 = vmatprep.subr.bf16.mxu0 0
      %318 = vmatpush1.bf16.msra.mxu0 0
      %319 = vmatprep.subr.bf16.mxu0 0
      %320 = vmatpush1.bf16.msra.mxu0 0
      %321 = vmatprep.subr.bf16.mxu0 0
      %322 = vmatpush1.bf16.msra.mxu0 0
      %323 = vmatprep.subr.bf16.mxu0 0
      %324 = vmatpush1.bf16.msra.mxu0 0
      %325 = vmatprep.subr.bf16.mxu0 0
      %326 = vmatpush1.bf16.msra.mxu0 0
      %327 = vmatprep.subr.bf16.mxu0 0
      %328 = vmatpush1.bf16.msra.mxu0 0
      %329 = vmatprep.subr.bf16.mxu0 0
      %330 = vmatpush1.bf16.msra.mxu0 0
      %331 = vmatprep.subr.bf16.mxu0 0
      %332 = vmatpush1.bf16.msra.mxu0 0
      %333 = vmatprep.subr.bf16.mxu0 0
      %334 = vmatpush1.bf16.msra.mxu0 0
      %335 = vmatprep.subr.bf16.mxu0 0
      %336 = vmatpush1.bf16.msra.mxu0 0
      %337 = vmatprep.subr.bf16.mxu0 0
      %338 = vmatpush1.bf16.msra.mxu0 0
      %339 = vmatprep.mubr.bf16.mxu0 0
      %340 = vmatmul.mubr.bf16.gmra.mrb[0].mxu0 %v305
      %v341 = vpop.f32.mrb[0].mxu0
      %v342 = vadd.f32 0.0, %v341
      %v343 = vpop.f32.mrb[0].mxu0
      %v344 = vpop.f32.mrb[0].mxu0
      %v345 = vadd.f32 0.0, %v344
      %v346 = vpop.f32.mrb[0].mxu0
      %347 = vdwg.mxu0
      %v348 = vadd.f32 %v266, %v342
      %v349 = vadd.f32 %v267, %v345
      %350 = vst [vmem:[#allocation2] sm:$0xff] %v348
      %351 = vst [vmem:[#allocation2 + $0x8] sm:$0xff] %v349
      // Predicated region
      $region37: #{transformer_decoder_forward.18} parent=31 // pred_check
        %p352 = pneg %p260
      $region38: #{transformer_decoder_forward.18} parent=31 // pred_check_branch
        %354 = sbr.rel (%p352) target = $region40
      $region39: #{transformer_decoder_forward.18} parent=31 // pred_region
        %v355 = vld [vmem:[#allocation2] sm:$0xff]
        %v356 = vld [vmem:[#allocation2 + $0x8] sm:$0xff]
        %v357 = vld [vmem:[%s249] sm:$0x1]
        %v359 = vlaneseq
        %v360 = vshrl.u32 %v359, 7
        %v361 = vsub.s32 0, %v360
        %v362 = vrot.slane %v357, %v361
        %v364 = vadd.f32 %v355, %v362
        %v365 = vadd.f32 %v356, %v362
        %366 = vst [vmem:[%s257] sm:$0xff] %v364
        %367 = vst [vmem:[%s257 + $0x8] sm:$0xff] %v365
      $region40: #{transformer_decoder_forward.18} parent=31 // pred_fallthru
        _
      %s368 = smul.u32 2, %s19
      %p369 = scmp.lt.s32.totalorder %s368, 3
      %s370 = scalar_select %p369, %s368, 3
      %p371 = scmp.lt.s32.totalorder %s20, 0
      %s372 = scalar_select %p371, %s20, 0
      %s373 = sadd.s32 %s372, %s370
      %s374 = smul.addr %s373, 8
      %s375 = scalar_lea.vmem %s3, %s374
      // Predicated region
      $region41: #{transformer_decoder_forward.18} parent=31 // pred_check
        %p376 = pneg %p135
      $region42: #{transformer_decoder_forward.18} parent=31 // pred_check_branch
        %378 = sbr.rel (%p376) target = $region44
      $region43: #{transformer_decoder_forward.18} parent=31 // pred_region
        %s379 = smul.u32 2, %s19
      $region44: #{transformer_decoder_forward.18} parent=31 // pred_fallthru
        _
    $region32: #{transformer_decoder_forward.18} parent=5 // pred_fallthru
      _
    %p380 = scmp.le.s32.totalorder 2, %s9
    // Predicated region
    $region45: #{transformer_decoder_forward.18} parent=5 // pred_check
      %p381 = pneg %p380
    $region46: #{transformer_decoder_forward.18} parent=5 // pred_check_branch
      %383 = sbr.rel (%p381) target = $region48
    $region47: #{transformer_decoder_forward.18} parent=5 // pred_region
      %s384 = ssub.s32 %s9, 2
      // Predicated region
      $region49: #{transformer_decoder_forward.18} parent=47 // pred_check
        %p385 = pneg %p141
      $region50: #{transformer_decoder_forward.18} parent=47 // pred_check_branch
        %387 = sbr.rel (%p385) target = $region52
      $region51: #{transformer_decoder_forward.18} parent=47 // pred_region
        %s388 = smul.u32 2, %s22
        %p389 = scmp.lt.s32.totalorder %s388, 3
        %s390 = scalar_select %p389, %s388, 3
        %p391 = scmp.lt.s32.totalorder %s23, 0
        %s392 = scalar_select %p391, %s23, 0
        %s393 = sadd.s32 %s392, %s390
        %s394 = smul.addr %s393, 8
        %s395 = scalar_lea.vmem %s3, %s394
      $region52: #{transformer_decoder_forward.18} parent=47 // pred_fallthru
        _
    $region48: #{transformer_decoder_forward.18} parent=5 // pred_fallthru
      _
  $region6: #{transformer_decoder_forward.18} parent=0 // loop_footer
    %s13 = sadd.s32 1, %s9
  $region7: #{transformer_decoder_forward.18} parent=0 // loop_footer_branch
    %8 = sbr.rel target = $region3
  $region8: #{transformer_decoder_forward.18} parent=0 // loop_exit
    _

// kernel: transformer_decoder_forward.19
$region0: #{transformer_decoder_forward.19}
  #allocation0 [shape = 'u32[]', space=smem, size = 0x4, offset = 0x4, fixed_abs, tag = 'smem constant byte address 0x4 - core index']
  #allocation1 [shape = 'u32[144,128]{1,0:T(1,128)}', space=vmem, size = 0x12000, scoped, tag = 'internal scratch']
  #allocation2 [shape = 'f32[16,64]{1,0:T(8,128)}', space=vmem, size = 0x2000, scoped, tag = 'scratch operand']
  %s0 = inlined_call_operand.vmem [shape: f32[32,64], index: 0, kind: input, shape index: {}]
  %s1 = inlined_call_operand.vmem [shape: bf16[64,64], index: 1, kind: input, shape index: {}]
  %s2 = inlined_call_operand.vmem [shape: f32[1,64], index: 2, kind: input, shape index: {}]
  %s3 = inlined_call_operand.vmem [shape: f32[32,64], index: 3, kind: output, shape index: {}]
  %s4 = sld [smem:[#allocation0]]
  $region53: #{transformer_decoder_forward.19} parent=0
    _
  %s6 = ssub.s32 1, %s4
  %s7 = scalar_select 0, %s6, %s4
  loop: start=0, step=1, limit=4
  $region2: #{transformer_decoder_forward.19} parent=0 // loop_pre_header
    _
  $region3: #{transformer_decoder_forward.19} parent=0 // loop_header
    %s9 = sphi 0, %s13
    %p10 = scmp.ge.s32.totalorder %s9, 4
    %s16 = sphi 0, %s35
    %s17 = sphi 0, %s31
    %s18 = sphi 0, %s27
    %s19 = sphi 0, %s16
    %s20 = sphi 0, %s17
    %s21 = sphi 0, %s18
    %s22 = sphi 0, %s19
    %s23 = sphi 0, %s20
    %s24 = sphi 0, %s21
    %s40 = sphi 0, %s42
    %s43 = sphi 0, %s40
    %s44 = sphi 0, %s43
    %s60 = sphi 0, %s44
    %s68 = sphi 0, %s70
    %s71 = sphi 0, %s68
    %s72 = sphi 0, %s71
    %s88 = sphi 0, %s72
    %s94 = sphi 0, %s96
    %s97 = sphi 0, %s94
    %s98 = sphi 0, %s97
    %s114 = sphi 0, %s98
    %s122 = sphi 0, %s124
    %s125 = sphi 0, %s122
    %s126 = sphi 0, %s125
    %s142 = sphi 0, %s126
  $region4: #{transformer_decoder_forward.19} parent=0 // loop_header_branch
    %12 = sbr.rel (%p10) target = $region8
  $region5: #{transformer_decoder_forward.19} parent=0 // loop_body
    %s14 = ssub.s32 %s9, 1
    %s15 = ssub.s32 %s9, 2
    %s25 = sadd.s32 1, %s18
    %p26 = scmp.ge.s32.totalorder %s25, 1
    %s27 = scalar_select %p26, 0, %s25
    %s28 = sadd.s32 1, %s17
    %s29 = scalar_select %p26, %s28, %s17
    %p30 = scmp.ge.s32.totalorder %s29, 1
    %s31 = scalar_select %p30, 0, %s29
    %s32 = sadd.s32 1, %s16
    %s33 = scalar_select %p30, %s32, %s16
    %p34 = scmp.ge.s32.totalorder %s33, 2
    %s35 = scalar_select %p34, 0, %s33
    %s36 = ssub.s32 %s16, %s35
    %s37 = ssub.s32 %s18, %s27
    %s38 = sor.u32 %s36, %s37
    %p39 = scmp.eq.s32.totalorder %s38, 0
    %s41 = sadd.s32 %s40, 1
    %s42 = scalar_select %p39, %s40, %s41
    %p45 = pneg %p39
    %p46 = scmp.eq.s32.totalorder %s9, 1
    %p47 = por %p45, %p46
    %p48 = scmp.ne.s32.totalorder %s40, %s43
    %p49 = scmp.eq.s32.totalorder %s9, 0
    %p50 = por %p48, %p49
    %p51 = scmp.ne.s32.totalorder %s40, %s43
    %p52 = scmp.eq.s32.totalorder %s14, 1
    %p53 = por %p51, %p52
    %p54 = scmp.ne.s32.totalorder %s43, %s44
    %p55 = scmp.eq.s32.totalorder %s14, 0
    %p56 = por %p54, %p55
    %p57 = scmp.ne.s32.totalorder %s43, %s44
    %p58 = scmp.eq.s32.totalorder %s15, 1
    %p59 = por %p57, %p58
    %p61 = scmp.ne.s32.totalorder %s44, %s60
    %p62 = scmp.eq.s32.totalorder %s15, 0
    %p63 = por %p61, %p62
    %s64 = ssub.s32 %s18, %s27
    %s65 = ssub.s32 %s17, %s31
    %s66 = sor.u32 %s64, %s65
    %p67 = scmp.eq.s32.totalorder %s66, 0
    %s69 = sadd.s32 %s68, 1
    %s70 = scalar_select %p67, %s68, %s69
    %p73 = pneg %p67
    %p74 = scmp.eq.s32.totalorder %s9, 1
    %p75 = por %p73, %p74
    %p76 = scmp.ne.s32.totalorder %s68, %s71
    %p77 = scmp.eq.s32.totalorder %s9, 0
    %p78 = por %p76, %p77
    %p79 = scmp.ne.s32.totalorder %s68, %s71
    %p80 = scmp.eq.s32.totalorder %s14, 1
    %p81 = por %p79, %p80
    %p82 = scmp.ne.s32.totalorder %s71, %s72
    %p83 = scmp.eq.s32.totalorder %s14, 0
    %p84 = por %p82, %p83
    %p85 = scmp.ne.s32.totalorder %s71, %s72
    %p86 = scmp.eq.s32.totalorder %s15, 1
    %p87 = por %p85, %p86
    %p89 = scmp.ne.s32.totalorder %s72, %s88
    %p90 = scmp.eq.s32.totalorder %s15, 0
    %p91 = por %p89, %p90
    %s92 = ssub.s32 %s17, %s31
    %p93 = scmp.eq.s32.totalorder %s92, 0
    %s95 = sadd.s32 %s94, 1
    %s96 = scalar_select %p93, %s94, %s95
    %p99 = pneg %p93
    %p100 = scmp.eq.s32.totalorder %s9, 1
    %p101 = por %p99, %p100
    %p102 = scmp.ne.s32.totalorder %s94, %s97
    %p103 = scmp.eq.s32.totalorder %s9, 0
    %p104 = por %p102, %p103
    %p105 = scmp.ne.s32.totalorder %s94, %s97
    %p106 = scmp.eq.s32.totalorder %s14, 1
    %p107 = por %p105, %p106
    %p108 = scmp.ne.s32.totalorder %s97, %s98
    %p109 = scmp.eq.s32.totalorder %s14, 0
    %p110 = por %p108, %p109
    %p111 = scmp.ne.s32.totalorder %s97, %s98
    %p112 = scmp.eq.s32.totalorder %s15, 1
    %p113 = por %p111, %p112
    %p115 = scmp.ne.s32.totalorder %s98, %s114
    %p116 = scmp.eq.s32.totalorder %s15, 0
    %p117 = por %p115, %p116
    %s118 = ssub.s32 %s16, %s35
    %s119 = ssub.s32 %s17, %s31
    %s120 = sor.u32 %s118, %s119
    %p121 = scmp.eq.s32.totalorder %s120, 0
    %s123 = sadd.s32 %s122, 1
    %s124 = scalar_select %p121, %s122, %s123
    %p127 = pneg %p121
    %p128 = scmp.eq.s32.totalorder %s9, 1
    %p129 = por %p127, %p128
    %p130 = scmp.ne.s32.totalorder %s122, %s125
    %p131 = scmp.eq.s32.totalorder %s9, 0
    %p132 = por %p130, %p131
    %p133 = scmp.ne.s32.totalorder %s122, %s125
    %p134 = scmp.eq.s32.totalorder %s14, 1
    %p135 = por %p133, %p134
    %p136 = scmp.ne.s32.totalorder %s125, %s126
    %p137 = scmp.eq.s32.totalorder %s14, 0
    %p138 = por %p136, %p137
    %p139 = scmp.ne.s32.totalorder %s125, %s126
    %p140 = scmp.eq.s32.totalorder %s15, 1
    %p141 = por %p139, %p140
    %p143 = scmp.ne.s32.totalorder %s126, %s142
    %p144 = scmp.eq.s32.totalorder %s15, 0
    %p145 = por %p143, %p144
    %p146 = scmp.le.s32.totalorder 1, %s9
    %p147 = scmp.lt.s32.totalorder %s9, 3
    %p148 = pnand %p146, %p147
    %p149 = pneg %p148
    // Predicated region
    $region9: #{transformer_decoder_forward.19} parent=5 // pred_check
      _
    $region10: #{transformer_decoder_forward.19} parent=5 // pred_check_branch
      %151 = sbr.rel (%p148) target = $region12
    $region11: #{transformer_decoder_forward.19} parent=5 // pred_region
      %s152 = ssub.s32 %s9, 1
      // Predicated region
      $region13: #{transformer_decoder_forward.19} parent=11 // pred_check
        %p153 = pneg %p84
      $region14: #{transformer_decoder_forward.19} parent=11 // pred_check_branch
        %155 = sbr.rel (%p153) target = $region16
      $region15: #{transformer_decoder_forward.19} parent=11 // pred_region
        %s156 = smul.u32 8, %s21
        %p157 = scmp.lt.s32.totalorder %s156, 7
        %s158 = scalar_select %p157, %s156, 7
        %p159 = scmp.lt.s32.totalorder %s20, 0
        %s160 = scalar_select %p159, %s20, 0
        %s161 = sadd.s32 %s160, %s158
        %s162 = smul.addr %s161, 4
        %s163 = scalar_lea.vmem %s1, %s162
        %s164 = smul.u32 8, %s21
      $region16: #{transformer_decoder_forward.19} parent=11 // pred_fallthru
        _
      // Predicated region
      $region17: #{transformer_decoder_forward.19} parent=11 // pred_check
        %p165 = pneg %p110
      $region18: #{transformer_decoder_forward.19} parent=11 // pred_check_branch
        %167 = sbr.rel (%p165) target = $region20
      $region19: #{transformer_decoder_forward.19} parent=11 // pred_region
        %p168 = scmp.lt.s32.totalorder %s20, 0
        %s169 = scalar_select %p168, %s20, 0
        %s170 = scalar_lea.vmem %s2, %s169
      $region20: #{transformer_decoder_forward.19} parent=11 // pred_fallthru
        _
    $region12: #{transformer_decoder_forward.19} parent=5 // pred_fallthru
      _
    %p171 = scmp.lt.s32.totalorder %s9, 2
    // Predicated region
    $region21: #{transformer_decoder_forward.19} parent=5 // pred_check
      %p172 = pneg %p171
    $region22: #{transformer_decoder_forward.19} parent=5 // pred_check_branch
      %174 = sbr.rel (%p172) target = $region24
    $region23: #{transformer_decoder_forward.19} parent=5 // pred_region
      // Predicated region
      $region25: #{transformer_decoder_forward.19} parent=23 // pred_check
        %p175 = pneg %p50
      $region26: #{transformer_decoder_forward.19} parent=23 // pred_check_branch
        %177 = sbr.rel (%p175) target = $region28
      $region27: #{transformer_decoder_forward.19} parent=23 // pred_region
        %s178 = smul.u32 2, %s16
        %p179 = scmp.lt.s32.totalorder %s178, 3
        %s180 = scalar_select %p179, %s178, 3
        %p181 = scmp.lt.s32.totalorder %s18, 0
        %s182 = scalar_select %p181, %s18, 0
        %s183 = sadd.s32 %s182, %s180
        %s184 = smul.addr %s183, 8
        %s185 = scalar_lea.vmem %s0, %s184
        %s186 = smul.u32 2, %s16
      $region28: #{transformer_decoder_forward.19} parent=23 // pred_fallthru
        _
    $region24: #{transformer_decoder_forward.19} parent=5 // pred_fallthru
      _
    %p187 = scmp.le.s32.totalorder 1, %s9
    %p188 = scmp.lt.s32.totalorder %s9, 3
    %p189 = pnand %p187, %p188
    %p190 = pneg %p189
    // Predicated region
    $region29: #{transformer_decoder_forward.19} parent=5 // pred_check
      _
    $region30: #{transformer_decoder_forward.19} parent=5 // pred_check_branch
      %192 = sbr.rel (%p189) target = $region32
    $region31: #{transformer_decoder_forward.19} parent=5 // pred_region
      %s193 = ssub.s32 %s9, 1
      %s194 = smul.u32 2, %s19
      %p195 = scmp.lt.s32.totalorder %s194, 3
      %s196 = scalar_select %p195, %s194, 3
      %p197 = scmp.lt.s32.totalorder %s21, 0
      %s198 = scalar_select %p197, %s21, 0
      %s199 = sadd.s32 %s198, %s196
      %s200 = smul.addr %s199, 8
      %s201 = scalar_lea.vmem %s0, %s200
      %p202 = pneg %p56
      %p203 = pneg %p53
      %s204 = smul.u32 8, %s21
      %p205 = scmp.lt.s32.totalorder %s204, 7
      %s206 = scalar_select %p205, %s204, 7
      %p207 = scmp.lt.s32.totalorder %s20, 0
      %s208 = scalar_select %p207, %s20, 0
      %s209 = sadd.s32 %s208, %s206
      %s210 = smul.addr %s209, 4
      %s211 = scalar_lea.vmem %s1, %s210
      %p212 = pneg %p84
      %p213 = pneg %p81
      %p214 = scmp.lt.s32.totalorder %s20, 0
      %s215 = scalar_select %p214, %s20, 0
      %s216 = scalar_lea.vmem %s2, %s215
      %p217 = pneg %p110
      %p218 = pneg %p107
      %p219 = pneg %p138
      %p220 = pneg %p135
      %s221 = smul.u32 2, %s19
      %p222 = scmp.lt.s32.totalorder %s221, 3
      %s223 = scalar_select %p222, %s221, 3
      %p224 = scmp.lt.s32.totalorder %s20, 0
      %s225 = scalar_select %p224, %s20, 0
      %s226 = sadd.s32 %s225, %s223
      %s227 = smul.addr %s226, 8
      %s228 = scalar_lea.vmem %s3, %s227
      %s229 = smul.u32 2, %s19
      %p230 = scmp.lt.s32.totalorder %s229, 3
      %s231 = scalar_select %p230, %s229, 3
      %p232 = scmp.lt.s32.totalorder %s21, 0
      %s233 = scalar_select %p232, %s21, 0
      %s234 = sadd.s32 %s233, %s231
      %s235 = smul.addr %s234, 8
      %s236 = scalar_lea.vmem %s0, %s235
      %s237 = smul.u32 2, %s19
      %s238 = smul.u32 8, %s21
      %p239 = scmp.lt.s32.totalorder %s238, 7
      %s240 = scalar_select %p239, %s238, 7
      %p241 = scmp.lt.s32.totalorder %s20, 0
      %s242 = scalar_select %p241, %s20, 0
      %s243 = sadd.s32 %s242, %s240
      %s244 = smul.addr %s243, 4
      %s245 = scalar_lea.vmem %s1, %s244
      %s246 = smul.u32 8, %s21
      %p247 = scmp.lt.s32.totalorder %s20, 0
      %s248 = scalar_select %p247, %s20, 0
      %s249 = scalar_lea.vmem %s2, %s248
      %s250 = smul.u32 2, %s19
      %p251 = scmp.lt.s32.totalorder %s250, 3
      %s252 = scalar_select %p251, %s250, 3
      %p253 = scmp.lt.s32.totalorder %s20, 0
      %s254 = scalar_select %p253, %s20, 0
      %s255 = sadd.s32 %s254, %s252
      %s256 = smul.addr %s255, 8
      %s257 = scalar_lea.vmem %s3, %s256
      %s258 = smul.u32 2, %s19
      %p260 = scmp.eq.s32.totalorder %s21, 0
      // Predicated region
      $region33: #{transformer_decoder_forward.19} parent=31 // pred_check
        %p261 = pneg %p260
      $region34: #{transformer_decoder_forward.19} parent=31 // pred_check_branch
        %263 = sbr.rel (%p261) target = $region36
      $region35: #{transformer_decoder_forward.19} parent=31 // pred_region
        %vm264 = vcmask 523264
        %265 = vst.msk [vmem:[#allocation2] sm:$0xff] %vm264, 0.0
        %266 = vst.msk [vmem:[#allocation2 + $0x8] sm:$0xff] %vm264, 0.0
      $region36: #{transformer_decoder_forward.19} parent=31 // pred_fallthru
        _
      %v267 = vld [vmem:[#allocation2] sm:$0xff]
      %v268 = vld [vmem:[#allocation2 + $0x8] sm:$0xff]
      %v269 = vld [vmem:[%s236] sm:$0xff]
      %v270 = vld [vmem:[%s236 + $0x8] sm:$0xff]
      %v271 = vpack.c.bf16 %v270, %v269
      %v272 = vld [vmem:[%s245] sm:$0xf]
      %v273 = vld [vmem:[%s245 + $0x4] sm:$0xf]
      %v274 = vld [vmem:[%s245 + $0x8] sm:$0xf]
      %v275 = vld [vmem:[%s245 + $0xc] sm:$0xf]
      %v276 = vld [vmem:[%s245 + $0x10] sm:$0xf]
      %v277 = vld [vmem:[%s245 + $0x14] sm:$0xf]
      %v278 = vld [vmem:[%s245 + $0x18] sm:$0xf]
      %v279 = vld [vmem:[%s245 + $0x1c] sm:$0xf]
      %v288 = vunpack.c.l.b16 %v272
      %v289 = vunpack.c.l.b16 %v273
      %v290 = vunpack.c.l.b16 %v274
      %v291 = vunpack.c.l.b16 %v275
      %v292 = vunpack.c.l.b16 %v276
      %v293 = vunpack.c.l.b16 %v277
      %v294 = vunpack.c.l.b16 %v278
      %v295 = vunpack.c.l.b16 %v279
      %v296 = vpack.c.b16 %v289, %v288
      %v297 = vpack.c.b16 %v291, %v290
      %v298 = vpack.c.b16 %v293, %v292
      %v299 = vpack.c.b16 %v295, %v294
      %vm304 = vcmask 523264
      %v306 = vsel %vm304, %v271, 0
      %308 = vmatprep.subr.bf16.mxu0 0
      %309 = vmatpush1.bf16.msra.mxu0 %v296
      %310 = vmatprep.subr.bf16.mxu0 0
      %311 = vmatpush1.bf16.msra.mxu0 %v297
      %312 = vmatprep.subr.bf16.mxu0 0
      %313 = vmatpush1.bf16.msra.mxu0 %v298
      %314 = vmatprep.subr.bf16.mxu0 0
      %315 = vmatpush1.bf16.msra.mxu0 %v299
      %316 = vmatprep.subr.bf16.mxu0 0
      %317 = vmatpush1.bf16.msra.mxu0 0
      %318 = vmatprep.subr.bf16.mxu0 0
      %319 = vmatpush1.bf16.msra.mxu0 0
      %320 = vmatprep.subr.bf16.mxu0 0
      %321 = vmatpush1.bf16.msra.mxu0 0
      %322 = vmatprep.subr.bf16.mxu0 0
      %323 = vmatpush1.bf16.msra.mxu0 0
      %324 = vmatprep.subr.bf16.mxu0 0
      %325 = vmatpush1.bf16.msra.mxu0 0
      %326 = vmatprep.subr.bf16.mxu0 0
      %327 = vmatpush1.bf16.msra.mxu0 0
      %328 = vmatprep.subr.bf16.mxu0 0
      %329 = vmatpush1.bf16.msra.mxu0 0
      %330 = vmatprep.subr.bf16.mxu0 0
      %331 = vmatpush1.bf16.msra.mxu0 0
      %332 = vmatprep.subr.bf16.mxu0 0
      %333 = vmatpush1.bf16.msra.mxu0 0
      %334 = vmatprep.subr.bf16.mxu0 0
      %335 = vmatpush1.bf16.msra.mxu0 0
      %336 = vmatprep.subr.bf16.mxu0 0
      %337 = vmatpush1.bf16.msra.mxu0 0
      %338 = vmatprep.subr.bf16.mxu0 0
      %339 = vmatpush1.bf16.msra.mxu0 0
      %340 = vmatprep.mubr.bf16.mxu0 0
      %341 = vmatmul.mubr.bf16.gmra.mrb[0].mxu0 %v306
      %v342 = vpop.f32.mrb[0].mxu0
      %v343 = vadd.f32 0.0, %v342
      %v344 = vpop.f32.mrb[0].mxu0
      %v345 = vpop.f32.mrb[0].mxu0
      %v346 = vadd.f32 0.0, %v345
      %v347 = vpop.f32.mrb[0].mxu0
      %348 = vdwg.mxu0
      %v349 = vadd.f32 %v267, %v343
      %v350 = vadd.f32 %v268, %v346
      %351 = vst.msk [vmem:[#allocation2] sm:$0xff] %vm304, %v349
      %352 = vst.msk [vmem:[#allocation2 + $0x8] sm:$0xff] %vm304, %v350
      // Predicated region
      $region37: #{transformer_decoder_forward.19} parent=31 // pred_check
        %p353 = pneg %p260
      $region38: #{transformer_decoder_forward.19} parent=31 // pred_check_branch
        %355 = sbr.rel (%p353) target = $region40
      $region39: #{transformer_decoder_forward.19} parent=31 // pred_region
        %v356 = vld [vmem:[#allocation2] sm:$0xff]
        %v357 = vld [vmem:[#allocation2 + $0x8] sm:$0xff]
        %v358 = vld [vmem:[%s249] sm:$0x1]
        %v360 = vlaneseq
        %v361 = vshrl.u32 %v360, 7
        %v362 = vsub.s32 0, %v361
        %v363 = vrot.slane %v358, %v362
        %v365 = vadd.f32 %v356, %v363
        %v366 = vadd.f32 %v357, %v363
        %367 = vst.msk [vmem:[%s257] sm:$0xff] %vm304, %v365
        %368 = vst.msk [vmem:[%s257 + $0x8] sm:$0xff] %vm304, %v366
      $region40: #{transformer_decoder_forward.19} parent=31 // pred_fallthru
        _
      %s369 = smul.u32 2, %s19
      %p370 = scmp.lt.s32.totalorder %s369, 3
      %s371 = scalar_select %p370, %s369, 3
      %p372 = scmp.lt.s32.totalorder %s20, 0
      %s373 = scalar_select %p372, %s20, 0
      %s374 = sadd.s32 %s373, %s371
      %s375 = smul.addr %s374, 8
      %s376 = scalar_lea.vmem %s3, %s375
      // Predicated region
      $region41: #{transformer_decoder_forward.19} parent=31 // pred_check
        %p377 = pneg %p135
      $region42: #{transformer_decoder_forward.19} parent=31 // pred_check_branch
        %379 = sbr.rel (%p377) target = $region44
      $region43: #{transformer_decoder_forward.19} parent=31 // pred_region
        %s380 = smul.u32 2, %s19
      $region44: #{transformer_decoder_forward.19} parent=31 // pred_fallthru
        _
    $region32: #{transformer_decoder_forward.19} parent=5 // pred_fallthru
      _
    %p381 = scmp.le.s32.totalorder 2, %s9
    // Predicated region
    $region45: #{transformer_decoder_forward.19} parent=5 // pred_check
      %p382 = pneg %p381
    $region46: #{transformer_decoder_forward.19} parent=5 // pred_check_branch
      %384 = sbr.rel (%p382) target = $region48
    $region47: #{transformer_decoder_forward.19} parent=5 // pred_region
      %s385 = ssub.s32 %s9, 2
      // Predicated region
      $region49: #{transformer_decoder_forward.19} parent=47 // pred_check
        %p386 = pneg %p141
      $region50: #{transformer_decoder_forward.19} parent=47 // pred_check_branch
        %388 = sbr.rel (%p386) target = $region52
      $region51: #{transformer_decoder_forward.19} parent=47 // pred_region
        %s389 = smul.u32 2, %s22
        %p390 = scmp.lt.s32.totalorder %s389, 3
        %s391 = scalar_select %p390, %s389, 3
        %p392 = scmp.lt.s32.totalorder %s23, 0
        %s393 = scalar_select %p392, %s23, 0
        %s394 = sadd.s32 %s393, %s391
        %s395 = smul.addr %s394, 8
        %s396 = scalar_lea.vmem %s3, %s395
      $region52: #{transformer_decoder_forward.19} parent=47 // pred_fallthru
        _
    $region48: #{transformer_decoder_forward.19} parent=5 // pred_fallthru
      _
  $region6: #{transformer_decoder_forward.19} parent=0 // loop_footer
    %s13 = sadd.s32 1, %s9
  $region7: #{transformer_decoder_forward.19} parent=0 // loop_footer_branch
    %8 = sbr.rel target = $region3
  $region8: #{transformer_decoder_forward.19} parent=0 // loop_exit
    _

// kernel: transformer_decoder_forward.21
$region0: #{transformer_decoder_forward.21}
  #allocation0 [shape = 'u32[]', space=smem, size = 0x4, offset = 0x4, fixed_abs, tag = 'smem constant byte address 0x4 - core index']
  #allocation1 [shape = 'u32[144,128]{1,0:T(1,128)}', space=vmem, size = 0x12000, scoped, tag = 'internal scratch']
  #allocation2 [shape = 'f32[16,64]{1,0:T(8,128)}', space=vmem, size = 0x2000, scoped, tag = 'scratch operand']
  %s0 = inlined_call_operand.vmem [shape: f32[32,64], index: 0, kind: input, shape index: {}]
  %s1 = inlined_call_operand.vmem [shape: bf16[64,64], index: 1, kind: input, shape index: {}]
  %s2 = inlined_call_operand.vmem [shape: f32[1,64], index: 2, kind: input, shape index: {}]
  %s3 = inlined_call_operand.vmem [shape: f32[1,64], index: 3, kind: input, shape index: {}]
  %s4 = inlined_call_operand.vmem [shape: f32[1,64], index: 4, kind: input, shape index: {}]
  %s5 = inlined_call_operand.vmem [shape: f32[32,64], index: 5, kind: input, shape index: {}]
  %s6 = inlined_call_operand.vmem [shape: f32[32,64], index: 6, kind: output, shape index: {}]
  %s7 = sld [smem:[#allocation0]]
  $region65: #{transformer_decoder_forward.21} parent=0
    _
  %s9 = ssub.s32 1, %s7
  %s10 = scalar_select 0, %s9, %s7
  loop: start=0, step=1, limit=4
  $region2: #{transformer_decoder_forward.21} parent=0 // loop_pre_header
    _
  $region3: #{transformer_decoder_forward.21} parent=0 // loop_header
    %s12 = sphi 0, %s16
    %p13 = scmp.ge.s32.totalorder %s12, 4
    %s19 = sphi 0, %s38
    %s20 = sphi 0, %s34
    %s21 = sphi 0, %s30
    %s22 = sphi 0, %s19
    %s23 = sphi 0, %s20
    %s24 = sphi 0, %s21
    %s25 = sphi 0, %s22
    %s26 = sphi 0, %s23
    %s27 = sphi 0, %s24
    %s43 = sphi 0, %s45
    %s46 = sphi 0, %s43
    %s47 = sphi 0, %s46
    %s63 = sphi 0, %s47
    %s71 = sphi 0, %s73
    %s74 = sphi 0, %s71
    %s75 = sphi 0, %s74
    %s91 = sphi 0, %s75
    %s97 = sphi 0, %s99
    %s100 = sphi 0, %s97
    %s101 = sphi 0, %s100
    %s117 = sphi 0, %s101
    %s123 = sphi 0, %s125
    %s126 = sphi 0, %s123
    %s127 = sphi 0, %s126
    %s143 = sphi 0, %s127
    %s149 = sphi 0, %s151
    %s152 = sphi 0, %s149
    %s153 = sphi 0, %s152
    %s169 = sphi 0, %s153
    %s177 = sphi 0, %s179
    %s180 = sphi 0, %s177
    %s181 = sphi 0, %s180
    %s197 = sphi 0, %s181
    %s205 = sphi 0, %s207
    %s208 = sphi 0, %s205
    %s209 = sphi 0, %s208
    %s225 = sphi 0, %s209
  $region4: #{transformer_decoder_forward.21} parent=0 // loop_header_branch
    %15 = sbr.rel (%p13) target = $region8
  $region5: #{transformer_decoder_forward.21} parent=0 // loop_body
    %s17 = ssub.s32 %s12, 1
    %s18 = ssub.s32 %s12, 2
    %s28 = sadd.s32 1, %s21
    %p29 = scmp.ge.s32.totalorder %s28, 1
    %s30 = scalar_select %p29, 0, %s28
    %s31 = sadd.s32 1, %s20
    %s32 = scalar_select %p29, %s31, %s20
    %p33 = scmp.ge.s32.totalorder %s32, 1
    %s34 = scalar_select %p33, 0, %s32
    %s35 = sadd.s32 1, %s19
    %s36 = scalar_select %p33, %s35, %s19
    %p37 = scmp.ge.s32.totalorder %s36, 2
    %s38 = scalar_select %p37, 0, %s36
    %s39 = ssub.s32 %s19, %s38
    %s40 = ssub.s32 %s21, %s30
    %s41 = sor.u32 %s39, %s40
    %p42 = scmp.eq.s32.totalorder %s41, 0
    %s44 = sadd.s32 %s43, 1
    %s45 = scalar_select %p42, %s43, %s44
    %p48 = pneg %p42
    %p49 = scmp.eq.s32.totalorder %s12, 1
    %p50 = por %p48, %p49
    %p51 = scmp.ne.s32.totalorder %s43, %s46
    %p52 = scmp.eq.s32.totalorder %s12, 0
    %p53 = por %p51, %p52
    %p54 = scmp.ne.s32.totalorder %s43, %s46
    %p55 = scmp.eq.s32.totalorder %s17, 1
    %p56 = por %p54, %p55
    %p57 = scmp.ne.s32.totalorder %s46, %s47
    %p58 = scmp.eq.s32.totalorder %s17, 0
    %p59 = por %p57, %p58
    %p60 = scmp.ne.s32.totalorder %s46, %s47
    %p61 = scmp.eq.s32.totalorder %s18, 1
    %p62 = por %p60, %p61
    %p64 = scmp.ne.s32.totalorder %s47, %s63
    %p65 = scmp.eq.s32.totalorder %s18, 0
    %p66 = por %p64, %p65
    %s67 = ssub.s32 %s21, %s30
    %s68 = ssub.s32 %s20, %s34
    %s69 = sor.u32 %s67, %s68
    %p70 = scmp.eq.s32.totalorder %s69, 0
    %s72 = sadd.s32 %s71, 1
    %s73 = scalar_select %p70, %s71, %s72
    %p76 = pneg %p70
    %p77 = scmp.eq.s32.totalorder %s12, 1
    %p78 = por %p76, %p77
    %p79 = scmp.ne.s32.totalorder %s71, %s74
    %p80 = scmp.eq.s32.totalorder %s12, 0
    %p81 = por %p79, %p80
    %p82 = scmp.ne.s32.totalorder %s71, %s74
    %p83 = scmp.eq.s32.totalorder %s17, 1
    %p84 = por %p82, %p83
    %p85 = scmp.ne.s32.totalorder %s74, %s75
    %p86 = scmp.eq.s32.totalorder %s17, 0
    %p87 = por %p85, %p86
    %p88 = scmp.ne.s32.totalorder %s74, %s75
    %p89 = scmp.eq.s32.totalorder %s18, 1
    %p90 = por %p88, %p89
    %p92 = scmp.ne.s32.totalorder %s75, %s91
    %p93 = scmp.eq.s32.totalorder %s18, 0
    %p94 = por %p92, %p93
    %s95 = ssub.s32 %s20, %s34
    %p96 = scmp.eq.s32.totalorder %s95, 0
    %s98 = sadd.s32 %s97, 1
    %s99 = scalar_select %p96, %s97, %s98
    %p102 = pneg %p96
    %p103 = scmp.eq.s32.totalorder %s12, 1
    %p104 = por %p102, %p103
    %p105 = scmp.ne.s32.totalorder %s97, %s100
    %p106 = scmp.eq.s32.totalorder %s12, 0
    %p107 = por %p105, %p106
    %p108 = scmp.ne.s32.totalorder %s97, %s100
    %p109 = scmp.eq.s32.totalorder %s17, 1
    %p110 = por %p108, %p109
    %p111 = scmp.ne.s32.totalorder %s100, %s101
    %p112 = scmp.eq.s32.totalorder %s17, 0
    %p113 = por %p111, %p112
    %p114 = scmp.ne.s32.totalorder %s100, %s101
    %p115 = scmp.eq.s32.totalorder %s18, 1
    %p116 = por %p114, %p115
    %p118 = scmp.ne.s32.totalorder %s101, %s117
    %p119 = scmp.eq.s32.totalorder %s18, 0
    %p120 = por %p118, %p119
    %s121 = ssub.s32 %s20, %s34
    %p122 = scmp.eq.s32.totalorder %s121, 0
    %s124 = sadd.s32 %s123, 1
    %s125 = scalar_select %p122, %s123, %s124
    %p128 = pneg %p122
    %p129 = scmp.eq.s32.totalorder %s12, 1
    %p130 = por %p128, %p129
    %p131 = scmp.ne.s32.totalorder %s123, %s126
    %p132 = scmp.eq.s32.totalorder %s12, 0
    %p133 = por %p131, %p132
    %p134 = scmp.ne.s32.totalorder %s123, %s126
    %p135 = scmp.eq.s32.totalorder %s17, 1
    %p136 = por %p134, %p135
    %p137 = scmp.ne.s32.totalorder %s126, %s127
    %p138 = scmp.eq.s32.totalorder %s17, 0
    %p139 = por %p137, %p138
    %p140 = scmp.ne.s32.totalorder %s126, %s127
    %p141 = scmp.eq.s32.totalorder %s18, 1
    %p142 = por %p140, %p141
    %p144 = scmp.ne.s32.totalorder %s127, %s143
    %p145 = scmp.eq.s32.totalorder %s18, 0
    %p146 = por %p144, %p145
    %s147 = ssub.s32 %s20, %s34
    %p148 = scmp.eq.s32.totalorder %s147, 0
    %s150 = sadd.s32 %s149, 1
    %s151 = scalar_select %p148, %s149, %s150
    %p154 = pneg %p148
    %p155 = scmp.eq.s32.totalorder %s12, 1
    %p156 = por %p154, %p155
    %p157 = scmp.ne.s32.totalorder %s149, %s152
    %p158 = scmp.eq.s32.totalorder %s12, 0
    %p159 = por %p157, %p158
    %p160 = scmp.ne.s32.totalorder %s149, %s152
    %p161 = scmp.eq.s32.totalorder %s17, 1
    %p162 = por %p160, %p161
    %p163 = scmp.ne.s32.totalorder %s152, %s153
    %p164 = scmp.eq.s32.totalorder %s17, 0
    %p165 = por %p163, %p164
    %p166 = scmp.ne.s32.totalorder %s152, %s153
    %p167 = scmp.eq.s32.totalorder %s18, 1
    %p168 = por %p166, %p167
    %p170 = scmp.ne.s32.totalorder %s153, %s169
    %p171 = scmp.eq.s32.totalorder %s18, 0
    %p172 = por %p170, %p171
    %s173 = ssub.s32 %s19, %s38
    %s174 = ssub.s32 %s20, %s34
    %s175 = sor.u32 %s173, %s174
    %p176 = scmp.eq.s32.totalorder %s175, 0
    %s178 = sadd.s32 %s177, 1
    %s179 = scalar_select %p176, %s177, %s178
    %p182 = pneg %p176
    %p183 = scmp.eq.s32.totalorder %s12, 1
    %p184 = por %p182, %p183
    %p185 = scmp.ne.s32.totalorder %s177, %s180
    %p186 = scmp.eq.s32.totalorder %s12, 0
    %p187 = por %p185, %p186
    %p188 = scmp.ne.s32.totalorder %s177, %s180
    %p189 = scmp.eq.s32.totalorder %s17, 1
    %p190 = por %p188, %p189
    %p191 = scmp.ne.s32.totalorder %s180, %s181
    %p192 = scmp.eq.s32.totalorder %s17, 0
    %p193 = por %p191, %p192
    %p194 = scmp.ne.s32.totalorder %s180, %s181
    %p195 = scmp.eq.s32.totalorder %s18, 1
    %p196 = por %p194, %p195
    %p198 = scmp.ne.s32.totalorder %s181, %s197
    %p199 = scmp.eq.s32.totalorder %s18, 0
    %p200 = por %p198, %p199
    %s201 = ssub.s32 %s19, %s38
    %s202 = ssub.s32 %s20, %s34
    %s203 = sor.u32 %s201, %s202
    %p204 = scmp.eq.s32.totalorder %s203, 0
    %s206 = sadd.s32 %s205, 1
    %s207 = scalar_select %p204, %s205, %s206
    %p210 = pneg %p204
    %p211 = scmp.eq.s32.totalorder %s12, 1
    %p212 = por %p210, %p211
    %p213 = scmp.ne.s32.totalorder %s205, %s208
    %p214 = scmp.eq.s32.totalorder %s12, 0
    %p215 = por %p213, %p214
    %p216 = scmp.ne.s32.totalorder %s205, %s208
    %p217 = scmp.eq.s32.totalorder %s17, 1
    %p218 = por %p216, %p217
    %p219 = scmp.ne.s32.totalorder %s208, %s209
    %p220 = scmp.eq.s32.totalorder %s17, 0
    %p221 = por %p219, %p220
    %p222 = scmp.ne.s32.totalorder %s208, %s209
    %p223 = scmp.eq.s32.totalorder %s18, 1
    %p224 = por %p222, %p223
    %p226 = scmp.ne.s32.totalorder %s209, %s225
    %p227 = scmp.eq.s32.totalorder %s18, 0
    %p228 = por %p226, %p227
    %p229 = scmp.le.s32.totalorder 1, %s12
    %p230 = scmp.lt.s32.totalorder %s12, 3
    %p231 = pnand %p229, %p230
    %p232 = pneg %p231
    // Predicated region
    $region9: #{transformer_decoder_forward.21} parent=5 // pred_check
      _
    $region10: #{transformer_decoder_forward.21} parent=5 // pred_check_branch
      %234 = sbr.rel (%p231) target = $region12
    $region11: #{transformer_decoder_forward.21} parent=5 // pred_region
      %s235 = ssub.s32 %s12, 1
      // Predicated region
      $region13: #{transformer_decoder_forward.21} parent=11 // pred_check
        %p236 = pneg %p87
      $region14: #{transformer_decoder_forward.21} parent=11 // pred_check_branch
        %238 = sbr.rel (%p236) target = $region16
      $region15: #{transformer_decoder_forward.21} parent=11 // pred_region
        %s239 = smul.u32 8, %s24
        %p240 = scmp.lt.s32.totalorder %s239, 7
        %s241 = scalar_select %p240, %s239, 7
        %p242 = scmp.lt.s32.totalorder %s23, 0
        %s243 = scalar_select %p242, %s23, 0
        %s244 = sadd.s32 %s243, %s241
        %s245 = smul.addr %s244, 4
        %s246 = scalar_lea.vmem %s1, %s245
        %s247 = smul.u32 8, %s24
      $region16: #{transformer_decoder_forward.21} parent=11 // pred_fallthru
        _
      // Predicated region
      $region17: #{transformer_decoder_forward.21} parent=11 // pred_check
        %p248 = pneg %p113
      $region18: #{transformer_decoder_forward.21} parent=11 // pred_check_branch
        %250 = sbr.rel (%p248) target = $region20
      $region19: #{transformer_decoder_forward.21} parent=11 // pred_region
        %p251 = scmp.lt.s32.totalorder %s23, 0
        %s252 = scalar_select %p251, %s23, 0
        %s253 = scalar_lea.vmem %s2, %s252
      $region20: #{transformer_decoder_forward.21} parent=11 // pred_fallthru
        _
      // Predicated region
      $region21: #{transformer_decoder_forward.21} parent=11 // pred_check
        %p254 = pneg %p139
      $region22: #{transformer_decoder_forward.21} parent=11 // pred_check_branch
        %256 = sbr.rel (%p254) target = $region24
      $region23: #{transformer_decoder_forward.21} parent=11 // pred_region
        %p257 = scmp.lt.s32.totalorder %s23, 0
        %s258 = scalar_select %p257, %s23, 0
        %s259 = scalar_lea.vmem %s3, %s258
      $region24: #{transformer_decoder_forward.21} parent=11 // pred_fallthru
        _
      // Predicated region
      $region25: #{transformer_decoder_forward.21} parent=11 // pred_check
        %p260 = pneg %p165
      $region26: #{transformer_decoder_forward.21} parent=11 // pred_check_branch
        %262 = sbr.rel (%p260) target = $region28
      $region27: #{transformer_decoder_forward.21} parent=11 // pred_region
        %p263 = scmp.lt.s32.totalorder %s23, 0
        %s264 = scalar_select %p263, %s23, 0
        %s265 = scalar_lea.vmem %s4, %s264
      $region28: #{transformer_decoder_forward.21} parent=11 // pred_fallthru
        _
    $region12: #{transformer_decoder_forward.21} parent=5 // pred_fallthru
      _
    %p266 = scmp.lt.s32.totalorder %s12, 2
    // Predicated region
    $region29: #{transformer_decoder_forward.21} parent=5 // pred_check
      %p267 = pneg %p266
    $region30: #{transformer_decoder_forward.21} parent=5 // pred_check_branch
      %269 = sbr.rel (%p267) target = $region32
    $region31: #{transformer_decoder_forward.21} parent=5 // pred_region
      // Predicated region
      $region33: #{transformer_decoder_forward.21} parent=31 // pred_check
        %p270 = pneg %p53
      $region34: #{transformer_decoder_forward.21} parent=31 // pred_check_branch
        %272 = sbr.rel (%p270) target = $region36
      $region35: #{transformer_decoder_forward.21} parent=31 // pred_region
        %s273 = smul.u32 2, %s19
        %p274 = scmp.lt.s32.totalorder %s273, 3
        %s275 = scalar_select %p274, %s273, 3
        %p276 = scmp.lt.s32.totalorder %s21, 0
        %s277 = scalar_select %p276, %s21, 0
        %s278 = sadd.s32 %s277, %s275
        %s279 = smul.addr %s278, 8
        %s280 = scalar_lea.vmem %s0, %s279
        %s281 = smul.u32 2, %s19
      $region36: #{transformer_decoder_forward.21} parent=31 // pred_fallthru
        _
      // Predicated region
      $region37: #{transformer_decoder_forward.21} parent=31 // pred_check
        %p282 = pneg %p187
      $region38: #{transformer_decoder_forward.21} parent=31 // pred_check_branch
        %284 = sbr.rel (%p282) target = $region40
      $region39: #{transformer_decoder_forward.21} parent=31 // pred_region
        %s285 = smul.u32 2, %s19
        %p286 = scmp.lt.s32.totalorder %s285, 3
        %s287 = scalar_select %p286, %s285, 3
        %p288 = scmp.lt.s32.totalorder %s20, 0
        %s289 = scalar_select %p288, %s20, 0
        %s290 = sadd.s32 %s289, %s287
        %s291 = smul.addr %s290, 8
        %s292 = scalar_lea.vmem %s5, %s291
        %s293 = smul.u32 2, %s19
      $region40: #{transformer_decoder_forward.21} parent=31 // pred_fallthru
        _
    $region32: #{transformer_decoder_forward.21} parent=5 // pred_fallthru
      _
    %p294 = scmp.le.s32.totalorder 1, %s12
    %p295 = scmp.lt.s32.totalorder %s12, 3
    %p296 = pnand %p294, %p295
    %p297 = pneg %p296
    // Predicated region
    $region41: #{transformer_decoder_forward.21} parent=5 // pred_check
      _
    $region42: #{transformer_decoder_forward.21} parent=5 // pred_check_branch
      %299 = sbr.rel (%p296) target = $region44
    $region43: #{transformer_decoder_forward.21} parent=5 // pred_region
      %s300 = ssub.s32 %s12, 1
      %s301 = smul.u32 2, %s22
      %p302 = scmp.lt.s32.totalorder %s301, 3
      %s303 = scalar_select %p302, %s301, 3
      %p304 = scmp.lt.s32.totalorder %s24, 0
      %s305 = scalar_select %p304, %s24, 0
      %s306 = sadd.s32 %s305, %s303
      %s307 = smul.addr %s306, 8
      %s308 = scalar_lea.vmem %s0, %s307
      %p309 = pneg %p59
      %p310 = pneg %p56
      %s311 = smul.u32 8, %s24
      %p312 = scmp.lt.s32.totalorder %s311, 7
      %s313 = scalar_select %p312, %s311, 7
      %p314 = scmp.lt.s32.totalorder %s23, 0
      %s315 = scalar_select %p314, %s23, 0
      %s316 = sadd.s32 %s315, %s313
      %s317 = smul.addr %s316, 4
      %s318 = scalar_lea.vmem %s1, %s317
      %p319 = pneg %p87
      %p320 = pneg %p84
      %p321 = scmp.lt.s32.totalorder %s23, 0
      %s322 = scalar_select %p321, %s23, 0
      %s323 = scalar_lea.vmem %s2, %s322
      %p324 = pneg %p113
      %p325 = pneg %p110
      %p326 = scmp.lt.s32.totalorder %s23, 0
      %s327 = scalar_select %p326, %s23, 0
      %s328 = scalar_lea.vmem %s3, %s327
      %p329 = pneg %p139
      %p330 = pneg %p136
      %p331 = scmp.lt.s32.totalorder %s23, 0
      %s332 = scalar_select %p331, %s23, 0
      %s333 = scalar_lea.vmem %s4, %s332
      %p334 = pneg %p165
      %p335 = pneg %p162
      %s336 = smul.u32 2, %s22
      %p337 = scmp.lt.s32.totalorder %s336, 3
      %s338 = scalar_select %p337, %s336, 3
      %p339 = scmp.lt.s32.totalorder %s23, 0
      %s340 = scalar_select %p339, %s23, 0
      %s341 = sadd.s32 %s340, %s338
      %s342 = smul.addr %s341, 8
      %s343 = scalar_lea.vmem %s5, %s342
      %p344 = pneg %p193
      %p345 = pneg %p190
      %p346 = pneg %p221
      %p347 = pneg %p218
      %s348 = smul.u32 2, %s22
      %p349 = scmp.lt.s32.totalorder %s348, 3
      %s350 = scalar_select %p349, %s348, 3
      %p351 = scmp.lt.s32.totalorder %s23, 0
      %s352 = scalar_select %p351, %s23, 0
      %s353 = sadd.s32 %s352, %s350
      %s354 = smul.addr %s353, 8
      %s355 = scalar_lea.vmem %s6, %s354
      %s356 = smul.u32 2, %s22
      %p357 = scmp.lt.s32.totalorder %s356, 3
      %s358 = scalar_select %p357, %s356, 3
      %p359 = scmp.lt.s32.totalorder %s24, 0
      %s360 = scalar_select %p359, %s24, 0
      %s361 = sadd.s32 %s360, %s358
      %s362 = smul.addr %s361, 8
      %s363 = scalar_lea.vmem %s0, %s362
      %s364 = smul.u32 2, %s22
      %s365 = smul.u32 8, %s24
      %p366 = scmp.lt.s32.totalorder %s365, 7
      %s367 = scalar_select %p366, %s365, 7
      %p368 = scmp.lt.s32.totalorder %s23, 0
      %s369 = scalar_select %p368, %s23, 0
      %s370 = sadd.s32 %s369, %s367
      %s371 = smul.addr %s370, 4
      %s372 = scalar_lea.vmem %s1, %s371
      %s373 = smul.u32 8, %s24
      %p374 = scmp.lt.s32.totalorder %s23, 0
      %s375 = scalar_select %p374, %s23, 0
      %s376 = scalar_lea.vmem %s2, %s375
      %p377 = scmp.lt.s32.totalorder %s23, 0
      %s378 = scalar_select %p377, %s23, 0
      %s379 = scalar_lea.vmem %s3, %s378
      %p380 = scmp.lt.s32.totalorder %s23, 0
      %s381 = scalar_select %p380, %s23, 0
      %s382 = scalar_lea.vmem %s4, %s381
      %s383 = smul.u32 2, %s22
      %p384 = scmp.lt.s32.totalorder %s383, 3
      %s385 = scalar_select %p384, %s383, 3
      %p386 = scmp.lt.s32.totalorder %s23, 0
      %s387 = scalar_select %p386, %s23, 0
      %s388 = sadd.s32 %s387, %s385
      %s389 = smul.addr %s388, 8
      %s390 = scalar_lea.vmem %s5, %s389
      %s391 = smul.u32 2, %s22
      %s392 = smul.u32 2, %s22
      %p393 = scmp.lt.s32.totalorder %s392, 3
      %s394 = scalar_select %p393, %s392, 3
      %p395 = scmp.lt.s32.totalorder %s23, 0
      %s396 = scalar_select %p395, %s23, 0
      %s397 = sadd.s32 %s396, %s394
      %s398 = smul.addr %s397, 8
      %s399 = scalar_lea.vmem %s6, %s398
      %s400 = smul.u32 2, %s22
      %p402 = scmp.eq.s32.totalorder %s24, 0
      // Predicated region
      $region45: #{transformer_decoder_forward.21} parent=43 // pred_check
        %p403 = pneg %p402
      $region46: #{transformer_decoder_forward.21} parent=43 // pred_check_branch
        %405 = sbr.rel (%p403) target = $region48
      $region47: #{transformer_decoder_forward.21} parent=43 // pred_region
        %vm406 = vcmask 523264
        %407 = vst.msk [vmem:[#allocation2] sm:$0xff] %vm406, 0.0
        %408 = vst.msk [vmem:[#allocation2 + $0x8] sm:$0xff] %vm406, 0.0
      $region48: #{transformer_decoder_forward.21} parent=43 // pred_fallthru
        _
      %v409 = vld [vmem:[#allocation2] sm:$0xff]
      %v410 = vld [vmem:[#allocation2 + $0x8] sm:$0xff]
      %v411 = vld [vmem:[%s363] sm:$0xff]
      %v412 = vld [vmem:[%s363 + $0x8] sm:$0xff]
      %v413 = vpack.c.bf16 %v412, %v411
      %v414 = vld [vmem:[%s372] sm:$0xf]
      %v415 = vld [vmem:[%s372 + $0x4] sm:$0xf]
      %v416 = vld [vmem:[%s372 + $0x8] sm:$0xf]
      %v417 = vld [vmem:[%s372 + $0xc] sm:$0xf]
      %v418 = vld [vmem:[%s372 + $0x10] sm:$0xf]
      %v419 = vld [vmem:[%s372 + $0x14] sm:$0xf]
      %v420 = vld [vmem:[%s372 + $0x18] sm:$0xf]
      %v421 = vld [vmem:[%s372 + $0x1c] sm:$0xf]
      %v430 = vunpack.c.l.b16 %v414
      %v431 = vunpack.c.l.b16 %v415
      %v432 = vunpack.c.l.b16 %v416
      %v433 = vunpack.c.l.b16 %v417
      %v434 = vunpack.c.l.b16 %v418
      %v435 = vunpack.c.l.b16 %v419
      %v436 = vunpack.c.l.b16 %v420
      %v437 = vunpack.c.l.b16 %v421
      %v438 = vpack.c.b16 %v431, %v430
      %v439 = vpack.c.b16 %v433, %v432
      %v440 = vpack.c.b16 %v435, %v434
      %v441 = vpack.c.b16 %v437, %v436
      %vm446 = vcmask 523264
      %v448 = vsel %vm446, %v413, 0
      %450 = vmatprep.subr.bf16.mxu0 0
      %451 = vmatpush1.bf16.msra.mxu0 %v438
      %452 = vmatprep.subr.bf16.mxu0 0
      %453 = vmatpush1.bf16.msra.mxu0 %v439
      %454 = vmatprep.subr.bf16.mxu0 0
      %455 = vmatpush1.bf16.msra.mxu0 %v440
      %456 = vmatprep.subr.bf16.mxu0 0
      %457 = vmatpush1.bf16.msra.mxu0 %v441
      %458 = vmatprep.subr.bf16.mxu0 0
      %459 = vmatpush1.bf16.msra.mxu0 0
      %460 = vmatprep.subr.bf16.mxu0 0
      %461 = vmatpush1.bf16.msra.mxu0 0
      %462 = vmatprep.subr.bf16.mxu0 0
      %463 = vmatpush1.bf16.msra.mxu0 0
      %464 = vmatprep.subr.bf16.mxu0 0
      %465 = vmatpush1.bf16.msra.mxu0 0
      %466 = vmatprep.subr.bf16.mxu0 0
      %467 = vmatpush1.bf16.msra.mxu0 0
      %468 = vmatprep.subr.bf16.mxu0 0
      %469 = vmatpush1.bf16.msra.mxu0 0
      %470 = vmatprep.subr.bf16.mxu0 0
      %471 = vmatpush1.bf16.msra.mxu0 0
      %472 = vmatprep.subr.bf16.mxu0 0
      %473 = vmatpush1.bf16.msra.mxu0 0
      %474 = vmatprep.subr.bf16.mxu0 0
      %475 = vmatpush1.bf16.msra.mxu0 0
      %476 = vmatprep.subr.bf16.mxu0 0
      %477 = vmatpush1.bf16.msra.mxu0 0
      %478 = vmatprep.subr.bf16.mxu0 0
      %479 = vmatpush1.bf16.msra.mxu0 0
      %480 = vmatprep.subr.bf16.mxu0 0
      %481 = vmatpush1.bf16.msra.mxu0 0
      %482 = vmatprep.mubr.bf16.mxu0 0
      %483 = vmatmul.mubr.bf16.gmra.mrb[0].mxu0 %v448
      %v484 = vpop.f32.mrb[0].mxu0
      %v485 = vadd.f32 0.0, %v484
      %v486 = vpop.f32.mrb[0].mxu0
      %v487 = vpop.f32.mrb[0].mxu0
      %v488 = vadd.f32 0.0, %v487
      %v489 = vpop.f32.mrb[0].mxu0
      %490 = vdwg.mxu0
      %v491 = vadd.f32 %v409, %v485
      %v492 = vadd.f32 %v410, %v488
      %493 = vst.msk [vmem:[#allocation2] sm:$0xff] %vm446, %v491
      %494 = vst.msk [vmem:[#allocation2 + $0x8] sm:$0xff] %vm446, %v492
      // Predicated region
      $region49: #{transformer_decoder_forward.21} parent=43 // pred_check
        %p495 = pneg %p402
      $region50: #{transformer_decoder_forward.21} parent=43 // pred_check_branch
        %497 = sbr.rel (%p495) target = $region52
      $region51: #{transformer_decoder_forward.21} parent=43 // pred_region
        %v498 = vld [vmem:[#allocation2] sm:$0xff]
        %v499 = vld [vmem:[#allocation2 + $0x8] sm:$0xff]
        %v500 = vld [vmem:[%s376] sm:$0x1]
        %v502 = vlaneseq
        %v503 = vshrl.u32 %v502, 7
        %v504 = vsub.s32 0, %v503
        %v505 = vrot.slane %v500, %v504
        %v507 = vadd.f32 %v498, %v505
        %v508 = vadd.f32 %v499, %v505
        %v509 = vsel %vm446, %v507, 0.0
        %510 = vadd.xlane.f32.xlu0 %v509
        %v511 = vpop.xlane.xlu0 %510
        %v512 = vsel %vm446, %v508, 0.0
        %513 = vadd.xlane.f32.xlu0 %v512
        %v514 = vpop.xlane.xlu0 %513
        %v515 = vrcp.pop 64.0
        %v516 = vmul.f32 %v511, %v515
        %v517 = vmul.f32 %v514, %v515
        %v518 = vsub.f32 %v507, %v516
        %v519 = vsub.f32 %v508, %v517
        %v520 = vmul.f32 %v518, %v518
        %v521 = vmul.f32 %v519, %v519
        %v522 = vsel %vm446, %v520, 0.0
        %523 = vadd.xlane.f32.xlu0 %v522
        %v524 = vpop.xlane.xlu0 %523
        %v525 = vsel %vm446, %v521, 0.0
        %526 = vadd.xlane.f32.xlu0 %v525
        %v527 = vpop.xlane.xlu0 %526
        %v528 = vmul.f32 %v524, %v515
        %v529 = vmul.f32 %v527, %v515
        %v530 = vadd.f32 %v528, 1e-05
        %v531 = vadd.f32 %v529, 1e-05
        %v532 = vrsqrt.pop %v530
        %v533 = vrsqrt.pop %v531
        %v534 = vmul.f32 %v518, %v532
        %v535 = vmul.f32 %v519, %v533
        %v536 = vld [vmem:[%s379] sm:$0x1]
        %v538 = vlaneseq
        %v539 = vshrl.u32 %v538, 7
        %v540 = vsub.s32 0, %v539
        %v541 = vrot.slane %v536, %v540
        %v543 = vmul.f32 %v534, %v541
        %v544 = vmul.f32 %v535, %v541
        %v545 = vld [vmem:[%s382] sm:$0x1]
        %v547 = vlaneseq
        %v548 = vshrl.u32 %v547, 7
        %v549 = vsub.s32 0, %v548
        %v550 = vrot.slane %v545, %v549
        %v552 = vadd.f32 %v543, %v550
        %v553 = vadd.f32 %v544, %v550
        %v554 = vld [vmem:[%s390] sm:$0xff]
        %v555 = vld [vmem:[%s390 + $0x8] sm:$0xff]
        %v556 = vadd.f32 %v552, %v554
        %v557 = vadd.f32 %v553, %v555
        %558 = vst.msk [vmem:[%s399] sm:$0xff] %vm446, %v556
        %559 = vst.msk [vmem:[%s399 + $0x8] sm:$0xff] %vm446, %v557
      $region52: #{transformer_decoder_forward.21} parent=43 // pred_fallthru
        _
      %s560 = smul.u32 2, %s22
      %p561 = scmp.lt.s32.totalorder %s560, 3
      %s562 = scalar_select %p561, %s560, 3
      %p563 = scmp.lt.s32.totalorder %s23, 0
      %s564 = scalar_select %p563, %s23, 0
      %s565 = sadd.s32 %s564, %s562
      %s566 = smul.addr %s565, 8
      %s567 = scalar_lea.vmem %s6, %s566
      // Predicated region
      $region53: #{transformer_decoder_forward.21} parent=43 // pred_check
        %p568 = pneg %p218
      $region54: #{transformer_decoder_forward.21} parent=43 // pred_check_branch
        %570 = sbr.rel (%p568) target = $region56
      $region55: #{transformer_decoder_forward.21} parent=43 // pred_region
        %s571 = smul.u32 2, %s22
      $region56: #{transformer_decoder_forward.21} parent=43 // pred_fallthru
        _
    $region44: #{transformer_decoder_forward.21} parent=5 // pred_fallthru
      _
    %p572 = scmp.le.s32.totalorder 2, %s12
    // Predicated region
    $region57: #{transformer_decoder_forward.21} parent=5 // pred_check
      %p573 = pneg %p572
    $region58: #{transformer_decoder_forward.21} parent=5 // pred_check_branch
      %575 = sbr.rel (%p573) target = $region60
    $region59: #{transformer_decoder_forward.21} parent=5 // pred_region
      %s576 = ssub.s32 %s12, 2
      // Predicated region
      $region61: #{transformer_decoder_forward.21} parent=59 // pred_check
        %p577 = pneg %p224
      $region62: #{transformer_decoder_forward.21} parent=59 // pred_check_branch
        %579 = sbr.rel (%p577) target = $region64
      $region63: #{transformer_decoder_forward.21} parent=59 // pred_region
        %s580 = smul.u32 2, %s25
        %p581 = scmp.lt.s32.totalorder %s580, 3
        %s582 = scalar_select %p581, %s580, 3
        %p583 = scmp.lt.s32.totalorder %s26, 0
        %s584 = scalar_select %p583, %s26, 0
        %s585 = sadd.s32 %s584, %s582
        %s586 = smul.addr %s585, 8
        %s587 = scalar_lea.vmem %s6, %s586
      $region64: #{transformer_decoder_forward.21} parent=59 // pred_fallthru
        _
    $region60: #{transformer_decoder_forward.21} parent=5 // pred_fallthru
      _
  $region6: #{transformer_decoder_forward.21} parent=0 // loop_footer
    %s16 = sadd.s32 1, %s12
  $region7: #{transformer_decoder_forward.21} parent=0 // loop_footer_branch
    %11 = sbr.rel target = $region3
  $region8: #{transformer_decoder_forward.21} parent=0 // loop_exit
    _

// kernel: transformer_decoder_forward.22
$region0: #{transformer_decoder_forward.22}
  #allocation0 [shape = 'u32[]', space=smem, size = 0x4, offset = 0x4, fixed_abs, tag = 'smem constant byte address 0x4 - core index']
  #allocation1 [shape = 'u32[144,128]{1,0:T(1,128)}', space=vmem, size = 0x12000, scoped, tag = 'internal scratch']
  %s0 = inlined_call_operand.vmem [shape: f32[32,64], index: 0, kind: input, shape index: {}]
  %s1 = inlined_call_operand.vmem [shape: f32[1,64], index: 1, kind: input, shape index: {}]
  %s2 = inlined_call_operand.vmem [shape: f32[1,64], index: 2, kind: input, shape index: {}]
  %s3 = inlined_call_operand.vmem [shape: f32[32,64], index: 3, kind: output, shape index: {}]
  %s4 = sld [smem:[#allocation0]]
  $region45: #{transformer_decoder_forward.22} parent=0
    _
  %s6 = ssub.s32 1, %s4
  %s7 = scalar_select 0, %s6, %s4
  loop: start=0, step=1, limit=4
  $region2: #{transformer_decoder_forward.22} parent=0 // loop_pre_header
    _
  $region3: #{transformer_decoder_forward.22} parent=0 // loop_header
    %s9 = sphi 0, %s13
    %p10 = scmp.ge.s32.totalorder %s9, 4
    %s19 = sphi 0, %s21
    %s22 = sphi 0, %s19
    %s23 = sphi 0, %s22
    %s39 = sphi 0, %s23
    %s43 = sphi 0, %s43
    %s45 = sphi 0, %s43
    %s46 = sphi 0, %s45
    %s60 = sphi 0, %s46
    %s64 = sphi 0, %s64
    %s66 = sphi 0, %s64
    %s67 = sphi 0, %s66
    %s81 = sphi 0, %s67
    %s87 = sphi 0, %s89
    %s90 = sphi 0, %s87
    %s91 = sphi 0, %s90
    %s107 = sphi 0, %s91
  $region4: #{transformer_decoder_forward.22} parent=0 // loop_header_branch
    %12 = sbr.rel (%p10) target = $region8
  $region5: #{transformer_decoder_forward.22} parent=0 // loop_body
    %s14 = ssub.s32 %s9, 1
    %s15 = ssub.s32 %s9, 2
    %s16 = sadd.s32 %s9, 1
    %s17 = ssub.s32 %s9, %s16
    %p18 = scmp.eq.s32.totalorder %s17, 0
    %s20 = sadd.s32 %s19, 1
    %s21 = scalar_select %p18, %s19, %s20
    %p24 = pneg %p18
    %p25 = scmp.eq.s32.totalorder %s9, 1
    %p26 = por %p24, %p25
    %p27 = scmp.ne.s32.totalorder %s19, %s22
    %p28 = scmp.eq.s32.totalorder %s9, 0
    %p29 = por %p27, %p28
    %p30 = scmp.ne.s32.totalorder %s19, %s22
    %p31 = scmp.eq.s32.totalorder %s14, 1
    %p32 = por %p30, %p31
    %p33 = scmp.ne.s32.totalorder %s22, %s23
    %p34 = scmp.eq.s32.totalorder %s14, 0
    %p35 = por %p33, %p34
    %p36 = scmp.ne.s32.totalorder %s22, %s23
    %p37 = scmp.eq.s32.totalorder %s15, 1
    %p38 = por %p36, %p37
    %p40 = scmp.ne.s32.totalorder %s23, %s39
    %p41 = scmp.eq.s32.totalorder %s15, 0
    %p42 = por %p40, %p41
    %s44 = sadd.s32 %s43, 1
    %p47 = scmp.eq.s32.totalorder %s9, 1
    %p48 = scmp.ne.s32.totalorder %s43, %s45
    %p49 = scmp.eq.s32.totalorder %s9, 0
    %p50 = por %p48, %p49
    %p51 = scmp.ne.s32.totalorder %s43, %s45
    %p52 = scmp.eq.s32.totalorder %s14, 1
    %p53 = por %p51, %p52
    %p54 = scmp.ne.s32.totalorder %s45, %s46
    %p55 = scmp.eq.s32.totalorder %s14, 0
    %p56 = por %p54, %p55
    %p57 = scmp.ne.s32.totalorder %s45, %s46
    %p58 = scmp.eq.s32.totalorder %s15, 1
    %p59 = por %p57, %p58
    %p61 = scmp.ne.s32.totalorder %s46, %s60
    %p62 = scmp.eq.s32.totalorder %s15, 0
    %p63 = por %p61, %p62
    %s65 = sadd.s32 %s64, 1
    %p68 = scmp.eq.s32.totalorder %s9, 1
    %p69 = scmp.ne.s32.totalorder %s64, %s66
    %p70 = scmp.eq.s32.totalorder %s9, 0
    %p71 = por %p69, %p70
    %p72 = scmp.ne.s32.totalorder %s64, %s66
    %p73 = scmp.eq.s32.totalorder %s14, 1
    %p74 = por %p72, %p73
    %p75 = scmp.ne.s32.totalorder %s66, %s67
    %p76 = scmp.eq.s32.totalorder %s14, 0
    %p77 = por %p75, %p76
    %p78 = scmp.ne.s32.totalorder %s66, %s67
    %p79 = scmp.eq.s32.totalorder %s15, 1
    %p80 = por %p78, %p79
    %p82 = scmp.ne.s32.totalorder %s67, %s81
    %p83 = scmp.eq.s32.totalorder %s15, 0
    %p84 = por %p82, %p83
    %s85 = ssub.s32 %s9, %s16
    %p86 = scmp.eq.s32.totalorder %s85, 0
    %s88 = sadd.s32 %s87, 1
    %s89 = scalar_select %p86, %s87, %s88
    %p92 = pneg %p86
    %p93 = scmp.eq.s32.totalorder %s9, 1
    %p94 = por %p92, %p93
    %p95 = scmp.ne.s32.totalorder %s87, %s90
    %p96 = scmp.eq.s32.totalorder %s9, 0
    %p97 = por %p95, %p96
    %p98 = scmp.ne.s32.totalorder %s87, %s90
    %p99 = scmp.eq.s32.totalorder %s14, 1
    %p100 = por %p98, %p99
    %p101 = scmp.ne.s32.totalorder %s90, %s91
    %p102 = scmp.eq.s32.totalorder %s14, 0
    %p103 = por %p101, %p102
    %p104 = scmp.ne.s32.totalorder %s90, %s91
    %p105 = scmp.eq.s32.totalorder %s15, 1
    %p106 = por %p104, %p105
    %p108 = scmp.ne.s32.totalorder %s91, %s107
    %p109 = scmp.eq.s32.totalorder %s15, 0
    %p110 = por %p108, %p109
    %p111 = scmp.le.s32.totalorder 1, %s9
    %p112 = scmp.lt.s32.totalorder %s9, 3
    %p113 = pnand %p111, %p112
    %p114 = pneg %p113
    // Predicated region
    $region9: #{transformer_decoder_forward.22} parent=5 // pred_check
      _
    $region10: #{transformer_decoder_forward.22} parent=5 // pred_check_branch
      %116 = sbr.rel (%p113) target = $region12
    $region11: #{transformer_decoder_forward.22} parent=5 // pred_region
      %s117 = ssub.s32 %s9, 1
      // Predicated region
      $region13: #{transformer_decoder_forward.22} parent=11 // pred_check
        %p118 = pneg %p56
      $region14: #{transformer_decoder_forward.22} parent=11 // pred_check_branch
        %120 = sbr.rel (%p118) target = $region16
      $region15: #{transformer_decoder_forward.22} parent=11 // pred_region
        _
      $region16: #{transformer_decoder_forward.22} parent=11 // pred_fallthru
        _
      // Predicated region
      $region17: #{transformer_decoder_forward.22} parent=11 // pred_check
        %p121 = pneg %p77
      $region18: #{transformer_decoder_forward.22} parent=11 // pred_check_branch
        %123 = sbr.rel (%p121) target = $region20
      $region19: #{transformer_decoder_forward.22} parent=11 // pred_region
        _
      $region20: #{transformer_decoder_forward.22} parent=11 // pred_fallthru
        _
    $region12: #{transformer_decoder_forward.22} parent=5 // pred_fallthru
      _
    %p124 = scmp.lt.s32.totalorder %s9, 2
    // Predicated region
    $region21: #{transformer_decoder_forward.22} parent=5 // pred_check
      %p125 = pneg %p124
    $region22: #{transformer_decoder_forward.22} parent=5 // pred_check_branch
      %127 = sbr.rel (%p125) target = $region24
    $region23: #{transformer_decoder_forward.22} parent=5 // pred_region
      // Predicated region
      $region25: #{transformer_decoder_forward.22} parent=23 // pred_check
        %p128 = pneg %p29
      $region26: #{transformer_decoder_forward.22} parent=23 // pred_check_branch
        %130 = sbr.rel (%p128) target = $region28
      $region27: #{transformer_decoder_forward.22} parent=23 // pred_region
        %s131 = smul.u32 2, %s9
        %p132 = scmp.lt.s32.totalorder %s131, 3
        %s133 = scalar_select %p132, %s131, 3
        %s134 = smul.addr %s133, 8
        %s135 = scalar_lea.vmem %s0, %s134
        %s136 = smul.u32 2, %s9
      $region28: #{transformer_decoder_forward.22} parent=23 // pred_fallthru
        _
    $region24: #{transformer_decoder_forward.22} parent=5 // pred_fallthru
      _
    %p137 = scmp.le.s32.totalorder 1, %s9
    %p138 = scmp.lt.s32.totalorder %s9, 3
    %p139 = pnand %p137, %p138
    %p140 = pneg %p139
    // Predicated region
    $region29: #{transformer_decoder_forward.22} parent=5 // pred_check
      _
    $region30: #{transformer_decoder_forward.22} parent=5 // pred_check_branch
      %142 = sbr.rel (%p139) target = $region32
    $region31: #{transformer_decoder_forward.22} parent=5 // pred_region
      %s143 = ssub.s32 %s9, 1
      %s144 = smul.u32 2, %s14
      %p145 = scmp.lt.s32.totalorder %s144, 3
      %s146 = scalar_select %p145, %s144, 3
      %s147 = smul.addr %s146, 8
      %s148 = scalar_lea.vmem %s0, %s147
      %p149 = pneg %p35
      %p150 = pneg %p32
      %p151 = pneg %p56
      %p152 = pneg %p53
      %p153 = pneg %p77
      %p154 = pneg %p74
      %p155 = pneg %p103
      %p156 = pneg %p100
      %s157 = smul.u32 2, %s14
      %p158 = scmp.lt.s32.totalorder %s157, 3
      %s159 = scalar_select %p158, %s157, 3
      %s160 = smul.addr %s159, 8
      %s161 = scalar_lea.vmem %s3, %s160
      %s162 = smul.u32 2, %s14
      %p163 = scmp.lt.s32.totalorder %s162, 3
      %s164 = scalar_select %p163, %s162, 3
      %s165 = smul.addr %s164, 8
      %s166 = scalar_lea.vmem %s0, %s165
      %s167 = smul.u32 2, %s14
      %s168 = smul.u32 2, %s14
      %p169 = scmp.lt.s32.totalorder %s168, 3
      %s170 = scalar_select %p169, %s168, 3
      %s171 = smul.addr %s170, 8
      %s172 = scalar_lea.vmem %s3, %s171
      %s173 = smul.u32 2, %s14
      %v174 = vld [vmem:[%s166] sm:$0xff]
      %v175 = vld [vmem:[%s166 + $0x8] sm:$0xff]
      %vm176 = vcmask 523264
      %v177 = vsel %vm176, %v174, 0.0
      %178 = vadd.xlane.f32.xlu0 %v177
      %v179 = vpop.xlane.xlu0 %178
      %v180 = vsel %vm176, %v175, 0.0
      %181 = vadd.xlane.f32.xlu0 %v180
      %v182 = vpop.xlane.xlu0 %181
      %v183 = vrcp.pop 64.0
      %v184 = vmul.f32 %v179, %v183
      %v185 = vmul.f32 %v182, %v183
      %v186 = vsub.f32 %v174, %v184
      %v187 = vsub.f32 %v175, %v185
      %v188 = vmul.f32 %v186, %v186
      %v189 = vmul.f32 %v187, %v187
      %v190 = vsel %vm176, %v188, 0.0
      %191 = vadd.xlane.f32.xlu0 %v190
      %v192 = vpop.xlane.xlu0 %191
      %v193 = vsel %vm176, %v189, 0.0
      %194 = vadd.xlane.f32.xlu0 %v193
      %v195 = vpop.xlane.xlu0 %194
      %v196 = vmul.f32 %v192, %v183
      %v197 = vmul.f32 %v195, %v183
      %v198 = vadd.f32 %v196, 1e-05
      %v199 = vadd.f32 %v197, 1e-05
      %v200 = vrsqrt.pop %v198
      %v201 = vrsqrt.pop %v199
      %v202 = vmul.f32 %v186, %v200
      %v203 = vmul.f32 %v187, %v201
      %v204 = vld [vmem:[%s1] sm:$0x1]
      %v206 = vlaneseq
      %v207 = vshrl.u32 %v206, 7
      %v208 = vsub.s32 0, %v207
      %v209 = vrot.slane %v204, %v208
      %v211 = vmul.f32 %v202, %v209
      %v212 = vmul.f32 %v203, %v209
      %v213 = vld [vmem:[%s2] sm:$0x1]
      %v215 = vlaneseq
      %v216 = vshrl.u32 %v215, 7
      %v217 = vsub.s32 0, %v216
      %v218 = vrot.slane %v213, %v217
      %v220 = vadd.f32 %v211, %v218
      %v221 = vadd.f32 %v212, %v218
      %222 = vst.msk [vmem:[%s172] sm:$0xff] %vm176, %v220
      %223 = vst.msk [vmem:[%s172 + $0x8] sm:$0xff] %vm176, %v221
      %s224 = smul.u32 2, %s14
      %p225 = scmp.lt.s32.totalorder %s224, 3
      %s226 = scalar_select %p225, %s224, 3
      %s227 = smul.addr %s226, 8
      %s228 = scalar_lea.vmem %s3, %s227
      // Predicated region
      $region33: #{transformer_decoder_forward.22} parent=31 // pred_check
        %p229 = pneg %p100
      $region34: #{transformer_decoder_forward.22} parent=31 // pred_check_branch
        %231 = sbr.rel (%p229) target = $region36
      $region35: #{transformer_decoder_forward.22} parent=31 // pred_region
        %s232 = smul.u32 2, %s14
      $region36: #{transformer_decoder_forward.22} parent=31 // pred_fallthru
        _
    $region32: #{transformer_decoder_forward.22} parent=5 // pred_fallthru
      _
    %p233 = scmp.le.s32.totalorder 2, %s9
    // Predicated region
    $region37: #{transformer_decoder_forward.22} parent=5 // pred_check
      %p234 = pneg %p233
    $region38: #{transformer_decoder_forward.22} parent=5 // pred_check_branch
      %236 = sbr.rel (%p234) target = $region40
    $region39: #{transformer_decoder_forward.22} parent=5 // pred_region
      %s237 = ssub.s32 %s9, 2
      // Predicated region
      $region41: #{transformer_decoder_forward.22} parent=39 // pred_check
        %p238 = pneg %p106
      $region42: #{transformer_decoder_forward.22} parent=39 // pred_check_branch
        %240 = sbr.rel (%p238) target = $region44
      $region43: #{transformer_decoder_forward.22} parent=39 // pred_region
        %s241 = smul.u32 2, %s15
        %p242 = scmp.lt.s32.totalorder %s241, 3
        %s243 = scalar_select %p242, %s241, 3
        %s244 = smul.addr %s243, 8
        %s245 = scalar_lea.vmem %s3, %s244
      $region44: #{transformer_decoder_forward.22} parent=39 // pred_fallthru
        _
    $region40: #{transformer_decoder_forward.22} parent=5 // pred_fallthru
      _
  $region6: #{transformer_decoder_forward.22} parent=0 // loop_footer
    %s13 = sadd.s32 1, %s9
  $region7: #{transformer_decoder_forward.22} parent=0 // loop_footer_branch
    %8 = sbr.rel target = $region3
  $region8: #{transformer_decoder_forward.22} parent=0 // loop_exit
    _

// kernel: transformer_decoder_forward.23
$region0: #{transformer_decoder_forward.23}
  #allocation0 [shape = 'u32[]', space=smem, size = 0x4, offset = 0x4, fixed_abs, tag = 'smem constant byte address 0x4 - core index']
  #allocation1 [shape = 'u32[144,128]{1,0:T(1,128)}', space=vmem, size = 0x12000, scoped, tag = 'internal scratch']
  #allocation2 [shape = 'f32[16,128]{1,0:T(8,128)}', space=vmem, size = 0x2000, scoped, tag = 'scratch operand']
  %s0 = inlined_call_operand.vmem [shape: f32[32,64], index: 0, kind: input, shape index: {}]
  %s1 = inlined_call_operand.vmem [shape: bf16[64,128], index: 1, kind: input, shape index: {}]
  %s2 = inlined_call_operand.vmem [shape: f32[1,128], index: 2, kind: input, shape index: {}]
  %s3 = inlined_call_operand.vmem [shape: f32[32,128], index: 3, kind: output, shape index: {}]
  %s4 = sld [smem:[#allocation0]]
  $region53: #{transformer_decoder_forward.23} parent=0
    _
  %s6 = ssub.s32 1, %s4
  %s7 = scalar_select 0, %s6, %s4
  loop: start=0, step=1, limit=4
  $region2: #{transformer_decoder_forward.23} parent=0 // loop_pre_header
    _
  $region3: #{transformer_decoder_forward.23} parent=0 // loop_header
    %s9 = sphi 0, %s13
    %p10 = scmp.ge.s32.totalorder %s9, 4
    %s16 = sphi 0, %s35
    %s17 = sphi 0, %s31
    %s18 = sphi 0, %s27
    %s19 = sphi 0, %s16
    %s20 = sphi 0, %s17
    %s21 = sphi 0, %s18
    %s22 = sphi 0, %s19
    %s23 = sphi 0, %s20
    %s24 = sphi 0, %s21
    %s40 = sphi 0, %s42
    %s43 = sphi 0, %s40
    %s44 = sphi 0, %s43
    %s60 = sphi 0, %s44
    %s68 = sphi 0, %s70
    %s71 = sphi 0, %s68
    %s72 = sphi 0, %s71
    %s88 = sphi 0, %s72
    %s94 = sphi 0, %s96
    %s97 = sphi 0, %s94
    %s98 = sphi 0, %s97
    %s114 = sphi 0, %s98
    %s122 = sphi 0, %s124
    %s125 = sphi 0, %s122
    %s126 = sphi 0, %s125
    %s142 = sphi 0, %s126
  $region4: #{transformer_decoder_forward.23} parent=0 // loop_header_branch
    %12 = sbr.rel (%p10) target = $region8
  $region5: #{transformer_decoder_forward.23} parent=0 // loop_body
    %s14 = ssub.s32 %s9, 1
    %s15 = ssub.s32 %s9, 2
    %s25 = sadd.s32 1, %s18
    %p26 = scmp.ge.s32.totalorder %s25, 1
    %s27 = scalar_select %p26, 0, %s25
    %s28 = sadd.s32 1, %s17
    %s29 = scalar_select %p26, %s28, %s17
    %p30 = scmp.ge.s32.totalorder %s29, 1
    %s31 = scalar_select %p30, 0, %s29
    %s32 = sadd.s32 1, %s16
    %s33 = scalar_select %p30, %s32, %s16
    %p34 = scmp.ge.s32.totalorder %s33, 2
    %s35 = scalar_select %p34, 0, %s33
    %s36 = ssub.s32 %s16, %s35
    %s37 = ssub.s32 %s18, %s27
    %s38 = sor.u32 %s36, %s37
    %p39 = scmp.eq.s32.totalorder %s38, 0
    %s41 = sadd.s32 %s40, 1
    %s42 = scalar_select %p39, %s40, %s41
    %p45 = pneg %p39
    %p46 = scmp.eq.s32.totalorder %s9, 1
    %p47 = por %p45, %p46
    %p48 = scmp.ne.s32.totalorder %s40, %s43
    %p49 = scmp.eq.s32.totalorder %s9, 0
    %p50 = por %p48, %p49
    %p51 = scmp.ne.s32.totalorder %s40, %s43
    %p52 = scmp.eq.s32.totalorder %s14, 1
    %p53 = por %p51, %p52
    %p54 = scmp.ne.s32.totalorder %s43, %s44
    %p55 = scmp.eq.s32.totalorder %s14, 0
    %p56 = por %p54, %p55
    %p57 = scmp.ne.s32.totalorder %s43, %s44
    %p58 = scmp.eq.s32.totalorder %s15, 1
    %p59 = por %p57, %p58
    %p61 = scmp.ne.s32.totalorder %s44, %s60
    %p62 = scmp.eq.s32.totalorder %s15, 0
    %p63 = por %p61, %p62
    %s64 = ssub.s32 %s18, %s27
    %s65 = ssub.s32 %s17, %s31
    %s66 = sor.u32 %s64, %s65
    %p67 = scmp.eq.s32.totalorder %s66, 0
    %s69 = sadd.s32 %s68, 1
    %s70 = scalar_select %p67, %s68, %s69
    %p73 = pneg %p67
    %p74 = scmp.eq.s32.totalorder %s9, 1
    %p75 = por %p73, %p74
    %p76 = scmp.ne.s32.totalorder %s68, %s71
    %p77 = scmp.eq.s32.totalorder %s9, 0
    %p78 = por %p76, %p77
    %p79 = scmp.ne.s32.totalorder %s68, %s71
    %p80 = scmp.eq.s32.totalorder %s14, 1
    %p81 = por %p79, %p80
    %p82 = scmp.ne.s32.totalorder %s71, %s72
    %p83 = scmp.eq.s32.totalorder %s14, 0
    %p84 = por %p82, %p83
    %p85 = scmp.ne.s32.totalorder %s71, %s72
    %p86 = scmp.eq.s32.totalorder %s15, 1
    %p87 = por %p85, %p86
    %p89 = scmp.ne.s32.totalorder %s72, %s88
    %p90 = scmp.eq.s32.totalorder %s15, 0
    %p91 = por %p89, %p90
    %s92 = ssub.s32 %s17, %s31
    %p93 = scmp.eq.s32.totalorder %s92, 0
    %s95 = sadd.s32 %s94, 1
    %s96 = scalar_select %p93, %s94, %s95
    %p99 = pneg %p93
    %p100 = scmp.eq.s32.totalorder %s9, 1
    %p101 = por %p99, %p100
    %p102 = scmp.ne.s32.totalorder %s94, %s97
    %p103 = scmp.eq.s32.totalorder %s9, 0
    %p104 = por %p102, %p103
    %p105 = scmp.ne.s32.totalorder %s94, %s97
    %p106 = scmp.eq.s32.totalorder %s14, 1
    %p107 = por %p105, %p106
    %p108 = scmp.ne.s32.totalorder %s97, %s98
    %p109 = scmp.eq.s32.totalorder %s14, 0
    %p110 = por %p108, %p109
    %p111 = scmp.ne.s32.totalorder %s97, %s98
    %p112 = scmp.eq.s32.totalorder %s15, 1
    %p113 = por %p111, %p112
    %p115 = scmp.ne.s32.totalorder %s98, %s114
    %p116 = scmp.eq.s32.totalorder %s15, 0
    %p117 = por %p115, %p116
    %s118 = ssub.s32 %s16, %s35
    %s119 = ssub.s32 %s17, %s31
    %s120 = sor.u32 %s118, %s119
    %p121 = scmp.eq.s32.totalorder %s120, 0
    %s123 = sadd.s32 %s122, 1
    %s124 = scalar_select %p121, %s122, %s123
    %p127 = pneg %p121
    %p128 = scmp.eq.s32.totalorder %s9, 1
    %p129 = por %p127, %p128
    %p130 = scmp.ne.s32.totalorder %s122, %s125
    %p131 = scmp.eq.s32.totalorder %s9, 0
    %p132 = por %p130, %p131
    %p133 = scmp.ne.s32.totalorder %s122, %s125
    %p134 = scmp.eq.s32.totalorder %s14, 1
    %p135 = por %p133, %p134
    %p136 = scmp.ne.s32.totalorder %s125, %s126
    %p137 = scmp.eq.s32.totalorder %s14, 0
    %p138 = por %p136, %p137
    %p139 = scmp.ne.s32.totalorder %s125, %s126
    %p140 = scmp.eq.s32.totalorder %s15, 1
    %p141 = por %p139, %p140
    %p143 = scmp.ne.s32.totalorder %s126, %s142
    %p144 = scmp.eq.s32.totalorder %s15, 0
    %p145 = por %p143, %p144
    %p146 = scmp.le.s32.totalorder 1, %s9
    %p147 = scmp.lt.s32.totalorder %s9, 3
    %p148 = pnand %p146, %p147
    %p149 = pneg %p148
    // Predicated region
    $region9: #{transformer_decoder_forward.23} parent=5 // pred_check
      _
    $region10: #{transformer_decoder_forward.23} parent=5 // pred_check_branch
      %151 = sbr.rel (%p148) target = $region12
    $region11: #{transformer_decoder_forward.23} parent=5 // pred_region
      %s152 = ssub.s32 %s9, 1
      // Predicated region
      $region13: #{transformer_decoder_forward.23} parent=11 // pred_check
        %p153 = pneg %p84
      $region14: #{transformer_decoder_forward.23} parent=11 // pred_check_branch
        %155 = sbr.rel (%p153) target = $region16
      $region15: #{transformer_decoder_forward.23} parent=11 // pred_region
        %s156 = smul.u32 8, %s21
        %p157 = scmp.lt.s32.totalorder %s156, 7
        %s158 = scalar_select %p157, %s156, 7
        %p159 = scmp.lt.s32.totalorder %s20, 0
        %s160 = scalar_select %p159, %s20, 0
        %s161 = sadd.s32 %s160, %s158
        %s162 = smul.addr %s161, 4
        %s163 = scalar_lea.vmem %s1, %s162
        %s164 = smul.u32 8, %s21
      $region16: #{transformer_decoder_forward.23} parent=11 // pred_fallthru
        _
      // Predicated region
      $region17: #{transformer_decoder_forward.23} parent=11 // pred_check
        %p165 = pneg %p110
      $region18: #{transformer_decoder_forward.23} parent=11 // pred_check_branch
        %167 = sbr.rel (%p165) target = $region20
      $region19: #{transformer_decoder_forward.23} parent=11 // pred_region
        %p168 = scmp.lt.s32.totalorder %s20, 0
        %s169 = scalar_select %p168, %s20, 0
        %s170 = scalar_lea.vmem %s2, %s169
      $region20: #{transformer_decoder_forward.23} parent=11 // pred_fallthru
        _
    $region12: #{transformer_decoder_forward.23} parent=5 // pred_fallthru
      _
    %p171 = scmp.lt.s32.totalorder %s9, 2
    // Predicated region
    $region21: #{transformer_decoder_forward.23} parent=5 // pred_check
      %p172 = pneg %p171
    $region22: #{transformer_decoder_forward.23} parent=5 // pred_check_branch
      %174 = sbr.rel (%p172) target = $region24
    $region23: #{transformer_decoder_forward.23} parent=5 // pred_region
      // Predicated region
      $region25: #{transformer_decoder_forward.23} parent=23 // pred_check
        %p175 = pneg %p50
      $region26: #{transformer_decoder_forward.23} parent=23 // pred_check_branch
        %177 = sbr.rel (%p175) target = $region28
      $region27: #{transformer_decoder_forward.23} parent=23 // pred_region
        %s178 = smul.u32 2, %s16
        %p179 = scmp.lt.s32.totalorder %s178, 3
        %s180 = scalar_select %p179, %s178, 3
        %p181 = scmp.lt.s32.totalorder %s18, 0
        %s182 = scalar_select %p181, %s18, 0
        %s183 = sadd.s32 %s182, %s180
        %s184 = smul.addr %s183, 8
        %s185 = scalar_lea.vmem %s0, %s184
        %s186 = smul.u32 2, %s16
      $region28: #{transformer_decoder_forward.23} parent=23 // pred_fallthru
        _
    $region24: #{transformer_decoder_forward.23} parent=5 // pred_fallthru
      _
    %p187 = scmp.le.s32.totalorder 1, %s9
    %p188 = scmp.lt.s32.totalorder %s9, 3
    %p189 = pnand %p187, %p188
    %p190 = pneg %p189
    // Predicated region
    $region29: #{transformer_decoder_forward.23} parent=5 // pred_check
      _
    $region30: #{transformer_decoder_forward.23} parent=5 // pred_check_branch
      %192 = sbr.rel (%p189) target = $region32
    $region31: #{transformer_decoder_forward.23} parent=5 // pred_region
      %s193 = ssub.s32 %s9, 1
      %s194 = smul.u32 2, %s19
      %p195 = scmp.lt.s32.totalorder %s194, 3
      %s196 = scalar_select %p195, %s194, 3
      %p197 = scmp.lt.s32.totalorder %s21, 0
      %s198 = scalar_select %p197, %s21, 0
      %s199 = sadd.s32 %s198, %s196
      %s200 = smul.addr %s199, 8
      %s201 = scalar_lea.vmem %s0, %s200
      %p202 = pneg %p56
      %p203 = pneg %p53
      %s204 = smul.u32 8, %s21
      %p205 = scmp.lt.s32.totalorder %s204, 7
      %s206 = scalar_select %p205, %s204, 7
      %p207 = scmp.lt.s32.totalorder %s20, 0
      %s208 = scalar_select %p207, %s20, 0
      %s209 = sadd.s32 %s208, %s206
      %s210 = smul.addr %s209, 4
      %s211 = scalar_lea.vmem %s1, %s210
      %p212 = pneg %p84
      %p213 = pneg %p81
      %p214 = scmp.lt.s32.totalorder %s20, 0
      %s215 = scalar_select %p214, %s20, 0
      %s216 = scalar_lea.vmem %s2, %s215
      %p217 = pneg %p110
      %p218 = pneg %p107
      %p219 = pneg %p138
      %p220 = pneg %p135
      %s221 = smul.u32 2, %s19
      %p222 = scmp.lt.s32.totalorder %s221, 3
      %s223 = scalar_select %p222, %s221, 3
      %p224 = scmp.lt.s32.totalorder %s20, 0
      %s225 = scalar_select %p224, %s20, 0
      %s226 = sadd.s32 %s225, %s223
      %s227 = smul.addr %s226, 8
      %s228 = scalar_lea.vmem %s3, %s227
      %s229 = smul.u32 2, %s19
      %p230 = scmp.lt.s32.totalorder %s229, 3
      %s231 = scalar_select %p230, %s229, 3
      %p232 = scmp.lt.s32.totalorder %s21, 0
      %s233 = scalar_select %p232, %s21, 0
      %s234 = sadd.s32 %s233, %s231
      %s235 = smul.addr %s234, 8
      %s236 = scalar_lea.vmem %s0, %s235
      %s237 = smul.u32 2, %s19
      %s238 = smul.u32 8, %s21
      %p239 = scmp.lt.s32.totalorder %s238, 7
      %s240 = scalar_select %p239, %s238, 7
      %p241 = scmp.lt.s32.totalorder %s20, 0
      %s242 = scalar_select %p241, %s20, 0
      %s243 = sadd.s32 %s242, %s240
      %s244 = smul.addr %s243, 4
      %s245 = scalar_lea.vmem %s1, %s244
      %s246 = smul.u32 8, %s21
      %p247 = scmp.lt.s32.totalorder %s20, 0
      %s248 = scalar_select %p247, %s20, 0
      %s249 = scalar_lea.vmem %s2, %s248
      %s250 = smul.u32 2, %s19
      %p251 = scmp.lt.s32.totalorder %s250, 3
      %s252 = scalar_select %p251, %s250, 3
      %p253 = scmp.lt.s32.totalorder %s20, 0
      %s254 = scalar_select %p253, %s20, 0
      %s255 = sadd.s32 %s254, %s252
      %s256 = smul.addr %s255, 8
      %s257 = scalar_lea.vmem %s3, %s256
      %s258 = smul.u32 2, %s19
      %p260 = scmp.eq.s32.totalorder %s21, 0
      // Predicated region
      $region33: #{transformer_decoder_forward.23} parent=31 // pred_check
        %p261 = pneg %p260
      $region34: #{transformer_decoder_forward.23} parent=31 // pred_check_branch
        %263 = sbr.rel (%p261) target = $region36
      $region35: #{transformer_decoder_forward.23} parent=31 // pred_region
        %264 = vst [vmem:[#allocation2] sm:$0xff] 0.0
        %265 = vst [vmem:[#allocation2 + $0x8] sm:$0xff] 0.0
      $region36: #{transformer_decoder_forward.23} parent=31 // pred_fallthru
        _
      %v266 = vld [vmem:[#allocation2] sm:$0xff]
      %v267 = vld [vmem:[#allocation2 + $0x8] sm:$0xff]
      %v268 = vld [vmem:[%s236] sm:$0xff]
      %v269 = vld [vmem:[%s236 + $0x8] sm:$0xff]
      %v270 = vpack.c.bf16 %v269, %v268
      %v271 = vld [vmem:[%s245] sm:$0xf]
      %v272 = vld [vmem:[%s245 + $0x4] sm:$0xf]
      %v273 = vld [vmem:[%s245 + $0x8] sm:$0xf]
      %v274 = vld [vmem:[%s245 + $0xc] sm:$0xf]
      %v275 = vld [vmem:[%s245 + $0x10] sm:$0xf]
      %v276 = vld [vmem:[%s245 + $0x14] sm:$0xf]
      %v277 = vld [vmem:[%s245 + $0x18] sm:$0xf]
      %v278 = vld [vmem:[%s245 + $0x1c] sm:$0xf]
      %v287 = vunpack.c.l.b16 %v271
      %v288 = vunpack.c.l.b16 %v272
      %v289 = vunpack.c.l.b16 %v273
      %v290 = vunpack.c.l.b16 %v274
      %v291 = vunpack.c.l.b16 %v275
      %v292 = vunpack.c.l.b16 %v276
      %v293 = vunpack.c.l.b16 %v277
      %v294 = vunpack.c.l.b16 %v278
      %v295 = vpack.c.b16 %v288, %v287
      %v296 = vpack.c.b16 %v290, %v289
      %v297 = vpack.c.b16 %v292, %v291
      %v298 = vpack.c.b16 %v294, %v293
      %vm303 = vcmask 523264
      %v305 = vsel %vm303, %v270, 0
      %307 = vmatprep.subr.bf16.mxu0 0
      %308 = vmatpush1.bf16.msra.mxu0 %v295
      %309 = vmatprep.subr.bf16.mxu0 0
      %310 = vmatpush1.bf16.msra.mxu0 %v296
      %311 = vmatprep.subr.bf16.mxu0 0
      %312 = vmatpush1.bf16.msra.mxu0 %v297
      %313 = vmatprep.subr.bf16.mxu0 0
      %314 = vmatpush1.bf16.msra.mxu0 %v298
      %315 = vmatprep.subr.bf16.mxu0 0
      %316 = vmatpush1.bf16.msra.mxu0 0
      %317 = vmatprep.subr.bf16.mxu0 0
      %318 = vmatpush1.bf16.msra.mxu0 0
      %319 = vmatprep.subr.bf16.mxu0 0
      %320 = vmatpush1.bf16.msra.mxu0 0
      %321 = vmatprep.subr.bf16.mxu0 0
      %322 = vmatpush1.bf16.msra.mxu0 0
      %323 = vmatprep.subr.bf16.mxu0 0
      %324 = vmatpush1.bf16.msra.mxu0 0
      %325 = vmatprep.subr.bf16.mxu0 0
      %326 = vmatpush1.bf16.msra.mxu0 0
      %327 = vmatprep.subr.bf16.mxu0 0
      %328 = vmatpush1.bf16.msra.mxu0 0
      %329 = vmatprep.subr.bf16.mxu0 0
      %330 = vmatpush1.bf16.msra.mxu0 0
      %331 = vmatprep.subr.bf16.mxu0 0
      %332 = vmatpush1.bf16.msra.mxu0 0
      %333 = vmatprep.subr.bf16.mxu0 0
      %334 = vmatpush1.bf16.msra.mxu0 0
      %335 = vmatprep.subr.bf16.mxu0 0
      %336 = vmatpush1.bf16.msra.mxu0 0
      %337 = vmatprep.subr.bf16.mxu0 0
      %338 = vmatpush1.bf16.msra.mxu0 0
      %339 = vmatprep.mubr.bf16.mxu0 0
      %340 = vmatmul.mubr.bf16.gmra.mrb[0].mxu0 %v305
      %v341 = vpop.f32.mrb[0].mxu0
      %v342 = vadd.f32 0.0, %v341
      %v343 = vpop.f32.mrb[0].mxu0
      %v344 = vpop.f32.mrb[0].mxu0
      %v345 = vadd.f32 0.0, %v344
      %v346 = vpop.f32.mrb[0].mxu0
      %347 = vdwg.mxu0
      %v348 = vadd.f32 %v266, %v342
      %v349 = vadd.f32 %v267, %v345
      %350 = vst [vmem:[#allocation2] sm:$0xff] %v348
      %351 = vst [vmem:[#allocation2 + $0x8] sm:$0xff] %v349
      // Predicated region
      $region37: #{transformer_decoder_forward.23} parent=31 // pred_check
        %p352 = pneg %p260
      $region38: #{transformer_decoder_forward.23} parent=31 // pred_check_branch
        %354 = sbr.rel (%p352) target = $region40
      $region39: #{transformer_decoder_forward.23} parent=31 // pred_region
        %v355 = vld [vmem:[#allocation2] sm:$0xff]
        %v356 = vld [vmem:[#allocation2 + $0x8] sm:$0xff]
        %v357 = vld [vmem:[%s249] sm:$0x1]
        %v359 = vlaneseq
        %v360 = vshrl.u32 %v359, 7
        %v361 = vsub.s32 0, %v360
        %v362 = vrot.slane %v357, %v361
        %v364 = vadd.f32 %v355, %v362
        %v365 = vadd.f32 %v356, %v362
        %v366 = vmax.f32 %v364, 0.0
        %v367 = vmax.f32 %v365, 0.0
        %368 = vst [vmem:[%s257] sm:$0xff] %v366
        %369 = vst [vmem:[%s257 + $0x8] sm:$0xff] %v367
      $region40: #{transformer_decoder_forward.23} parent=31 // pred_fallthru
        _
      %s370 = smul.u32 2, %s19
      %p371 = scmp.lt.s32.totalorder %s370, 3
      %s372 = scalar_select %p371, %s370, 3
      %p373 = scmp.lt.s32.totalorder %s20, 0
      %s374 = scalar_select %p373, %s20, 0
      %s375 = sadd.s32 %s374, %s372
      %s376 = smul.addr %s375, 8
      %s377 = scalar_lea.vmem %s3, %s376
      // Predicated region
      $region41: #{transformer_decoder_forward.23} parent=31 // pred_check
        %p378 = pneg %p135
      $region42: #{transformer_decoder_forward.23} parent=31 // pred_check_branch
        %380 = sbr.rel (%p378) target = $region44
      $region43: #{transformer_decoder_forward.23} parent=31 // pred_region
        %s381 = smul.u32 2, %s19
      $region44: #{transformer_decoder_forward.23} parent=31 // pred_fallthru
        _
    $region32: #{transformer_decoder_forward.23} parent=5 // pred_fallthru
      _
    %p382 = scmp.le.s32.totalorder 2, %s9
    // Predicated region
    $region45: #{transformer_decoder_forward.23} parent=5 // pred_check
      %p383 = pneg %p382
    $region46: #{transformer_decoder_forward.23} parent=5 // pred_check_branch
      %385 = sbr.rel (%p383) target = $region48
    $region47: #{transformer_decoder_forward.23} parent=5 // pred_region
      %s386 = ssub.s32 %s9, 2
      // Predicated region
      $region49: #{transformer_decoder_forward.23} parent=47 // pred_check
        %p387 = pneg %p141
      $region50: #{transformer_decoder_forward.23} parent=47 // pred_check_branch
        %389 = sbr.rel (%p387) target = $region52
      $region51: #{transformer_decoder_forward.23} parent=47 // pred_region
        %s390 = smul.u32 2, %s22
        %p391 = scmp.lt.s32.totalorder %s390, 3
        %s392 = scalar_select %p391, %s390, 3
        %p393 = scmp.lt.s32.totalorder %s23, 0
        %s394 = scalar_select %p393, %s23, 0
        %s395 = sadd.s32 %s394, %s392
        %s396 = smul.addr %s395, 8
        %s397 = scalar_lea.vmem %s3, %s396
      $region52: #{transformer_decoder_forward.23} parent=47 // pred_fallthru
        _
    $region48: #{transformer_decoder_forward.23} parent=5 // pred_fallthru
      _
  $region6: #{transformer_decoder_forward.23} parent=0 // loop_footer
    %s13 = sadd.s32 1, %s9
  $region7: #{transformer_decoder_forward.23} parent=0 // loop_footer_branch
    %8 = sbr.rel target = $region3
  $region8: #{transformer_decoder_forward.23} parent=0 // loop_exit
    _

// kernel: transformer_decoder_forward.20
$region0: #{transformer_decoder_forward.20}
  #allocation0 [shape = 'u32[]', space=smem, size = 0x4, offset = 0x4, fixed_abs, tag = 'smem constant byte address 0x4 - core index']
  #allocation1 [shape = 'u32[144,128]{1,0:T(1,128)}', space=vmem, size = 0x12000, scoped, tag = 'internal scratch']
  %s0 = inlined_call_operand.vmem [shape: f32[16,16,8], index: 0, kind: input, shape index: {}]
  %s1 = inlined_call_operand.vmem [shape: f32[16,16,8], index: 1, kind: input, shape index: {}]
  %s2 = inlined_call_operand.vmem [shape: f32[16,16,8], index: 2, kind: input, shape index: {}]
  %s3 = inlined_call_operand.vmem [shape: f32[16,16,8], index: 3, kind: output, shape index: {}]
  %s4 = sld [smem:[#allocation0]]
  $region45: #{transformer_decoder_forward.20} parent=0
    _
  %s6 = ssub.s32 1, %s4
  %s7 = scalar_select 0, %s6, %s4
  loop: start=0, step=1, limit=4
  $region2: #{transformer_decoder_forward.20} parent=0 // loop_pre_header
    _
  $region3: #{transformer_decoder_forward.20} parent=0 // loop_header
    %s9 = sphi 0, %s13
    %p10 = scmp.ge.s32.totalorder %s9, 4
    %s19 = sphi 0, %s21
    %s22 = sphi 0, %s19
    %s23 = sphi 0, %s22
    %s39 = sphi 0, %s23
    %s45 = sphi 0, %s47
    %s48 = sphi 0, %s45
    %s49 = sphi 0, %s48
    %s65 = sphi 0, %s49
    %s71 = sphi 0, %s73
    %s74 = sphi 0, %s71
    %s75 = sphi 0, %s74
    %s91 = sphi 0, %s75
    %s97 = sphi 0, %s99
    %s100 = sphi 0, %s97
    %s101 = sphi 0, %s100
    %s117 = sphi 0, %s101
  $region4: #{transformer_decoder_forward.20} parent=0 // loop_header_branch
    %12 = sbr.rel (%p10) target = $region8
  $region5: #{transformer_decoder_forward.20} parent=0 // loop_body
    %s14 = ssub.s32 %s9, 1
    %s15 = ssub.s32 %s9, 2
    %s16 = sadd.s32 %s9, 1
    %s17 = ssub.s32 %s9, %s16
    %p18 = scmp.eq.s32.totalorder %s17, 0
    %s20 = sadd.s32 %s19, 1
    %s21 = scalar_select %p18, %s19, %s20
    %p24 = pneg %p18
    %p25 = scmp.eq.s32.totalorder %s9, 1
    %p26 = por %p24, %p25
    %p27 = scmp.ne.s32.totalorder %s19, %s22
    %p28 = scmp.eq.s32.totalorder %s9, 0
    %p29 = por %p27, %p28
    %p30 = scmp.ne.s32.totalorder %s19, %s22
    %p31 = scmp.eq.s32.totalorder %s14, 1
    %p32 = por %p30, %p31
    %p33 = scmp.ne.s32.totalorder %s22, %s23
    %p34 = scmp.eq.s32.totalorder %s14, 0
    %p35 = por %p33, %p34
    %p36 = scmp.ne.s32.totalorder %s22, %s23
    %p37 = scmp.eq.s32.totalorder %s15, 1
    %p38 = por %p36, %p37
    %p40 = scmp.ne.s32.totalorder %s23, %s39
    %p41 = scmp.eq.s32.totalorder %s15, 0
    %p42 = por %p40, %p41
    %s43 = ssub.s32 %s9, %s16
    %p44 = scmp.eq.s32.totalorder %s43, 0
    %s46 = sadd.s32 %s45, 1
    %s47 = scalar_select %p44, %s45, %s46
    %p50 = pneg %p44
    %p51 = scmp.eq.s32.totalorder %s9, 1
    %p52 = por %p50, %p51
    %p53 = scmp.ne.s32.totalorder %s45, %s48
    %p54 = scmp.eq.s32.totalorder %s9, 0
    %p55 = por %p53, %p54
    %p56 = scmp.ne.s32.totalorder %s45, %s48
    %p57 = scmp.eq.s32.totalorder %s14, 1
    %p58 = por %p56, %p57
    %p59 = scmp.ne.s32.totalorder %s48, %s49
    %p60 = scmp.eq.s32.totalorder %s14, 0
    %p61 = por %p59, %p60
    %p62 = scmp.ne.s32.totalorder %s48, %s49
    %p63 = scmp.eq.s32.totalorder %s15, 1
    %p64 = por %p62, %p63
    %p66 = scmp.ne.s32.totalorder %s49, %s65
    %p67 = scmp.eq.s32.totalorder %s15, 0
    %p68 = por %p66, %p67
    %s69 = ssub.s32 %s9, %s16
    %p70 = scmp.eq.s32.totalorder %s69, 0
    %s72 = sadd.s32 %s71, 1
    %s73 = scalar_select %p70, %s71, %s72
    %p76 = pneg %p70
    %p77 = scmp.eq.s32.totalorder %s9, 1
    %p78 = por %p76, %p77
    %p79 = scmp.ne.s32.totalorder %s71, %s74
    %p80 = scmp.eq.s32.totalorder %s9, 0
    %p81 = por %p79, %p80
    %p82 = scmp.ne.s32.totalorder %s71, %s74
    %p83 = scmp.eq.s32.totalorder %s14, 1
    %p84 = por %p82, %p83
    %p85 = scmp.ne.s32.totalorder %s74, %s75
    %p86 = scmp.eq.s32.totalorder %s14, 0
    %p87 = por %p85, %p86
    %p88 = scmp.ne.s32.totalorder %s74, %s75
    %p89 = scmp.eq.s32.totalorder %s15, 1
    %p90 = por %p88, %p89
    %p92 = scmp.ne.s32.totalorder %s75, %s91
    %p93 = scmp.eq.s32.totalorder %s15, 0
    %p94 = por %p92, %p93
    %s95 = ssub.s32 %s9, %s16
    %p96 = scmp.eq.s32.totalorder %s95, 0
    %s98 = sadd.s32 %s97, 1
    %s99 = scalar_select %p96, %s97, %s98
    %p102 = pneg %p96
    %p103 = scmp.eq.s32.totalorder %s9, 1
    %p104 = por %p102, %p103
    %p105 = scmp.ne.s32.totalorder %s97, %s100
    %p106 = scmp.eq.s32.totalorder %s9, 0
    %p107 = por %p105, %p106
    %p108 = scmp.ne.s32.totalorder %s97, %s100
    %p109 = scmp.eq.s32.totalorder %s14, 1
    %p110 = por %p108, %p109
    %p111 = scmp.ne.s32.totalorder %s100, %s101
    %p112 = scmp.eq.s32.totalorder %s14, 0
    %p113 = por %p111, %p112
    %p114 = scmp.ne.s32.totalorder %s100, %s101
    %p115 = scmp.eq.s32.totalorder %s15, 1
    %p116 = por %p114, %p115
    %p118 = scmp.ne.s32.totalorder %s101, %s117
    %p119 = scmp.eq.s32.totalorder %s15, 0
    %p120 = por %p118, %p119
    %p121 = scmp.le.s32.totalorder 1, %s9
    %p122 = scmp.lt.s32.totalorder %s9, 3
    %p123 = pnand %p121, %p122
    %p124 = pneg %p123
    // Predicated region
    $region9: #{transformer_decoder_forward.20} parent=5 // pred_check
      _
    $region10: #{transformer_decoder_forward.20} parent=5 // pred_check_branch
      %126 = sbr.rel (%p123) target = $region12
    $region11: #{transformer_decoder_forward.20} parent=5 // pred_region
      %s127 = ssub.s32 %s9, 1
    $region12: #{transformer_decoder_forward.20} parent=5 // pred_fallthru
      _
    %p128 = scmp.lt.s32.totalorder %s9, 2
    // Predicated region
    $region13: #{transformer_decoder_forward.20} parent=5 // pred_check
      %p129 = pneg %p128
    $region14: #{transformer_decoder_forward.20} parent=5 // pred_check_branch
      %131 = sbr.rel (%p129) target = $region16
    $region15: #{transformer_decoder_forward.20} parent=5 // pred_region
      // Predicated region
      $region17: #{transformer_decoder_forward.20} parent=15 // pred_check
        %p132 = pneg %p29
      $region18: #{transformer_decoder_forward.20} parent=15 // pred_check_branch
        %134 = sbr.rel (%p132) target = $region20
      $region19: #{transformer_decoder_forward.20} parent=15 // pred_region
        %s135 = smul.u32 8, %s9
        %p136 = scmp.lt.s32.totalorder %s135, 15
        %s137 = scalar_select %p136, %s135, 15
        %s138 = smul.addr %s137, 2
        %s139 = smul.addr %s138, 8
        %s140 = scalar_lea.vmem %s0, %s139
        %s141 = smul.u32 8, %s9
      $region20: #{transformer_decoder_forward.20} parent=15 // pred_fallthru
        _
      // Predicated region
      $region21: #{transformer_decoder_forward.20} parent=15 // pred_check
        %p142 = pneg %p55
      $region22: #{transformer_decoder_forward.20} parent=15 // pred_check_branch
        %144 = sbr.rel (%p142) target = $region24
      $region23: #{transformer_decoder_forward.20} parent=15 // pred_region
        %s145 = smul.u32 8, %s9
        %p146 = scmp.lt.s32.totalorder %s145, 15
        %s147 = scalar_select %p146, %s145, 15
        %s148 = smul.addr %s147, 2
        %s149 = smul.addr %s148, 8
        %s150 = scalar_lea.vmem %s1, %s149
        %s151 = smul.u32 8, %s9
      $region24: #{transformer_decoder_forward.20} parent=15 // pred_fallthru
        _
      // Predicated region
      $region25: #{transformer_decoder_forward.20} parent=15 // pred_check
        %p152 = pneg %p81
      $region26: #{transformer_decoder_forward.20} parent=15 // pred_check_branch
        %154 = sbr.rel (%p152) target = $region28
      $region27: #{transformer_decoder_forward.20} parent=15 // pred_region
        %s155 = smul.u32 8, %s9
        %p156 = scmp.lt.s32.totalorder %s155, 15
        %s157 = scalar_select %p156, %s155, 15
        %s158 = smul.addr %s157, 2
        %s159 = smul.addr %s158, 8
        %s160 = scalar_lea.vmem %s2, %s159
        %s161 = smul.u32 8, %s9
      $region28: #{transformer_decoder_forward.20} parent=15 // pred_fallthru
        _
    $region16: #{transformer_decoder_forward.20} parent=5 // pred_fallthru
      _
    %p162 = scmp.le.s32.totalorder 1, %s9
    %p163 = scmp.lt.s32.totalorder %s9, 3
    %p164 = pnand %p162, %p163
    %p165 = pneg %p164
    // Predicated region
    $region29: #{transformer_decoder_forward.20} parent=5 // pred_check
      _
    $region30: #{transformer_decoder_forward.20} parent=5 // pred_check_branch
      %167 = sbr.rel (%p164) target = $region32
    $region31: #{transformer_decoder_forward.20} parent=5 // pred_region
      %s168 = ssub.s32 %s9, 1
      %s169 = smul.u32 8, %s14
      %p170 = scmp.lt.s32.totalorder %s169, 15
      %s171 = scalar_select %p170, %s169, 15
      %s172 = smul.addr %s171, 2
      %s173 = smul.addr %s172, 8
      %s174 = scalar_lea.vmem %s0, %s173
      %p175 = pneg %p35
      %p176 = pneg %p32
      %s177 = smul.u32 8, %s14
      %p178 = scmp.lt.s32.totalorder %s177, 15
      %s179 = scalar_select %p178, %s177, 15
      %s180 = smul.addr %s179, 2
      %s181 = smul.addr %s180, 8
      %s182 = scalar_lea.vmem %s1, %s181
      %p183 = pneg %p61
      %p184 = pneg %p58
      %s185 = smul.u32 8, %s14
      %p186 = scmp.lt.s32.totalorder %s185, 15
      %s187 = scalar_select %p186, %s185, 15
      %s188 = smul.addr %s187, 2
      %s189 = smul.addr %s188, 8
      %s190 = scalar_lea.vmem %s2, %s189
      %p191 = pneg %p87
      %p192 = pneg %p84
      %p193 = pneg %p113
      %p194 = pneg %p110
      %s195 = smul.u32 8, %s14
      %p196 = scmp.lt.s32.totalorder %s195, 15
      %s197 = scalar_select %p196, %s195, 15
      %s198 = smul.addr %s197, 2
      %s199 = smul.addr %s198, 8
      %s200 = scalar_lea.vmem %s3, %s199
      %s201 = smul.u32 8, %s14
      %p202 = scmp.lt.s32.totalorder %s201, 15
      %s203 = scalar_select %p202, %s201, 15
      %s204 = smul.addr %s203, 2
      %s205 = smul.addr %s204, 8
      %s206 = scalar_lea.vmem %s0, %s205
      %s207 = smul.u32 8, %s14
      %s208 = smul.u32 8, %s14
      %p209 = scmp.lt.s32.totalorder %s208, 15
      %s210 = scalar_select %p209, %s208, 15
      %s211 = smul.addr %s210, 2
      %s212 = smul.addr %s211, 8
      %s213 = scalar_lea.vmem %s1, %s212
      %s214 = smul.u32 8, %s14
      %s215 = smul.u32 8, %s14
      %p216 = scmp.lt.s32.totalorder %s215, 15
      %s217 = scalar_select %p216, %s215, 15
      %s218 = smul.addr %s217, 2
      %s219 = smul.addr %s218, 8
      %s220 = scalar_lea.vmem %s2, %s219
      %s221 = smul.u32 8, %s14
      %s222 = smul.u32 8, %s14
      %p223 = scmp.lt.s32.totalorder %s222, 15
      %s224 = scalar_select %p223, %s222, 15
      %s225 = smul.addr %s224, 2
      %s226 = smul.addr %s225, 8
      %s227 = scalar_lea.vmem %s3, %s226
      %s228 = smul.u32 8, %s14
      %v230 = vld [vmem:[%s206] sm:$0xff]
      %v231 = vld [vmem:[%s206 + $0x8] sm:$0xff]
      %v232 = vld [vmem:[%s206 + $0x10] sm:$0xff]
      %v233 = vld [vmem:[%s206 + $0x18] sm:$0xff]
      %v234 = vld [vmem:[%s206 + $0x20] sm:$0xff]
      %v235 = vld [vmem:[%s206 + $0x28] sm:$0xff]
      %v236 = vld [vmem:[%s206 + $0x30] sm:$0xff]
      %v237 = vld [vmem:[%s206 + $0x38] sm:$0xff]
      %v238 = vld [vmem:[%s206 + $0x40] sm:$0xff]
      %v239 = vld [vmem:[%s206 + $0x48] sm:$0xff]
      %v240 = vld [vmem:[%s206 + $0x50] sm:$0xff]
      %v241 = vld [vmem:[%s206 + $0x58] sm:$0xff]
      %v242 = vld [vmem:[%s206 + $0x60] sm:$0xff]
      %v243 = vld [vmem:[%s206 + $0x68] sm:$0xff]
      %v244 = vld [vmem:[%s206 + $0x70] sm:$0xff]
      %v245 = vld [vmem:[%s206 + $0x78] sm:$0xff]
      %v246 = vmul.f32 %v230, 0.35355338
      %v247 = vmul.f32 %v231, 0.35355338
      %v248 = vmul.f32 %v232, 0.35355338
      %v249 = vmul.f32 %v233, 0.35355338
      %v250 = vmul.f32 %v234, 0.35355338
      %v251 = vmul.f32 %v235, 0.35355338
      %v252 = vmul.f32 %v236, 0.35355338
      %v253 = vmul.f32 %v237, 0.35355338
      %v254 = vmul.f32 %v238, 0.35355338
      %v255 = vmul.f32 %v239, 0.35355338
      %v256 = vmul.f32 %v240, 0.35355338
      %v257 = vmul.f32 %v241, 0.35355338
      %v258 = vmul.f32 %v242, 0.35355338
      %v259 = vmul.f32 %v243, 0.35355338
      %v260 = vmul.f32 %v244, 0.35355338
      %v261 = vmul.f32 %v245, 0.35355338
      %v262 = vpack.c.bf16 %v247, %v246
      %v263 = vpack.c.bf16 %v249, %v248
      %v264 = vpack.c.bf16 %v251, %v250
      %v265 = vpack.c.bf16 %v253, %v252
      %v266 = vpack.c.bf16 %v255, %v254
      %v267 = vpack.c.bf16 %v257, %v256
      %v268 = vpack.c.bf16 %v259, %v258
      %v269 = vpack.c.bf16 %v261, %v260
      %v270 = vld [vmem:[%s213] sm:$0xff]
      %v271 = vld [vmem:[%s213 + $0x8] sm:$0xff]
      %v272 = vld [vmem:[%s213 + $0x10] sm:$0xff]
      %v273 = vld [vmem:[%s213 + $0x18] sm:$0xff]
      %v274 = vld [vmem:[%s213 + $0x20] sm:$0xff]
      %v275 = vld [vmem:[%s213 + $0x28] sm:$0xff]
      %v276 = vld [vmem:[%s213 + $0x30] sm:$0xff]
      %v277 = vld [vmem:[%s213 + $0x38] sm:$0xff]
      %v278 = vld [vmem:[%s213 + $0x40] sm:$0xff]
      %v279 = vld [vmem:[%s213 + $0x48] sm:$0xff]
      %v280 = vld [vmem:[%s213 + $0x50] sm:$0xff]
      %v281 = vld [vmem:[%s213 + $0x58] sm:$0xff]
      %v282 = vld [vmem:[%s213 + $0x60] sm:$0xff]
      %v283 = vld [vmem:[%s213 + $0x68] sm:$0xff]
      %v284 = vld [vmem:[%s213 + $0x70] sm:$0xff]
      %v285 = vld [vmem:[%s213 + $0x78] sm:$0xff]
      %v286 = vpack.c.bf16 %v271, %v270
      %v287 = vpack.c.bf16 %v273, %v272
      %v288 = vpack.c.bf16 %v275, %v274
      %v289 = vpack.c.bf16 %v277, %v276
      %v290 = vpack.c.bf16 %v279, %v278
      %v291 = vpack.c.bf16 %v281, %v280
      %v292 = vpack.c.bf16 %v283, %v282
      %v293 = vpack.c.bf16 %v285, %v284
      %v294 = vld [vmem:[%s220] sm:$0xff]
      %v295 = vld [vmem:[%s220 + $0x8] sm:$0xff]
      %v296 = vld [vmem:[%s220 + $0x10] sm:$0xff]
      %v297 = vld [vmem:[%s220 + $0x18] sm:$0xff]
      %v298 = vld [vmem:[%s220 + $0x20] sm:$0xff]
      %v299 = vld [vmem:[%s220 + $0x28] sm:$0xff]
      %v300 = vld [vmem:[%s220 + $0x30] sm:$0xff]
      %v301 = vld [vmem:[%s220 + $0x38] sm:$0xff]
      %v302 = vld [vmem:[%s220 + $0x40] sm:$0xff]
      %v303 = vld [vmem:[%s220 + $0x48] sm:$0xff]
      %v304 = vld [vmem:[%s220 + $0x50] sm:$0xff]
      %v305 = vld [vmem:[%s220 + $0x58] sm:$0xff]
      %v306 = vld [vmem:[%s220 + $0x60] sm:$0xff]
      %v307 = vld [vmem:[%s220 + $0x68] sm:$0xff]
      %v308 = vld [vmem:[%s220 + $0x70] sm:$0xff]
      %v309 = vld [vmem:[%s220 + $0x78] sm:$0xff]
      %v310 = vpack.c.bf16 %v295, %v294
      %v311 = vpack.c.bf16 %v297, %v296
      %v312 = vpack.c.bf16 %v299, %v298
      %v313 = vpack.c.bf16 %v301, %v300
      %v314 = vpack.c.bf16 %v303, %v302
      %v315 = vpack.c.bf16 %v305, %v304
      %v316 = vpack.c.bf16 %v307, %v306
      %v317 = vpack.c.bf16 %v309, %v308
      %vm318 = vcmask 64512
      %v320 = vsel %vm318, %v262, 0
      %v323 = vsel %vm318, %v286, 0
      %325 = vmatprep.subr.bf16.mxu0 0
      %326 = vmatpush1.bf16.xpose.msra.mxu0 %v323
      %327 = vmatprep.subr.bf16.mxu0 0
      %328 = vmatpush1.bf16.xpose.msra.mxu0 0
      %329 = vmatprep.subr.bf16.mxu0 0
      %330 = vmatpush1.bf16.xpose.msra.mxu0 0
      %331 = vmatprep.subr.bf16.mxu0 0
      %332 = vmatpush1.bf16.xpose.msra.mxu0 0
      %333 = vmatprep.subr.bf16.mxu0 0
      %334 = vmatpush1.bf16.xpose.msra.mxu0 0
      %335 = vmatprep.subr.bf16.mxu0 0
      %336 = vmatpush1.bf16.xpose.msra.mxu0 0
      %337 = vmatprep.subr.bf16.mxu0 0
      %338 = vmatpush1.bf16.xpose.msra.mxu0 0
      %339 = vmatprep.subr.bf16.mxu0 0
      %340 = vmatpush1.bf16.xpose.msra.mxu0 0
      %341 = vmatprep.subr.bf16.mxu0 0
      %342 = vmatpush1.bf16.xpose.msra.mxu0 0
      %343 = vmatprep.subr.bf16.mxu0 0
      %344 = vmatpush1.bf16.xpose.msra.mxu0 0
      %345 = vmatprep.subr.bf16.mxu0 0
      %346 = vmatpush1.bf16.xpose.msra.mxu0 0
      %347 = vmatprep.subr.bf16.mxu0 0
      %348 = vmatpush1.bf16.xpose.msra.mxu0 0
      %349 = vmatprep.subr.bf16.mxu0 0
      %350 = vmatpush1.bf16.xpose.msra.mxu0 0
      %351 = vmatprep.subr.bf16.mxu0 0
      %352 = vmatpush1.bf16.xpose.msra.mxu0 0
      %353 = vmatprep.subr.bf16.mxu0 0
      %354 = vmatpush1.bf16.xpose.msra.mxu0 0
      %355 = vmatprep.subr.bf16.mxu0 0
      %356 = vmatpush1.bf16.xpose.msra.mxu0 0
      %357 = vmatprep.mubr.bf16.mxu0 0
      %358 = vmatmul.mubr.bf16.gmra.mrb[0].mxu0 %v320
      %v359 = vpop.f32.mrb[0].mxu0
      %v360 = vadd.f32 0.0, %v359
      %v361 = vpop.f32.mrb[0].mxu0
      %v362 = vpop.f32.mrb[0].mxu0
      %v363 = vadd.f32 0.0, %v362
      %v364 = vpop.f32.mrb[0].mxu0
      %365 = vdwg.mxu0
      %v367 = vsel %vm318, %v263, 0
      %v370 = vsel %vm318, %v287, 0
      %372 = vmatprep.subr.bf16.mxu0 0
      %373 = vmatpush1.bf16.xpose.msra.mxu0 %v370
      %374 = vmatprep.subr.bf16.mxu0 0
      %375 = vmatpush1.bf16.xpose.msra.mxu0 0
      %376 = vmatprep.subr.bf16.mxu0 0
      %377 = vmatpush1.bf16.xpose.msra.mxu0 0
      %378 = vmatprep.subr.bf16.mxu0 0
      %379 = vmatpush1.bf16.xpose.msra.mxu0 0
      %380 = vmatprep.subr.bf16.mxu0 0
      %381 = vmatpush1.bf16.xpose.msra.mxu0 0
      %382 = vmatprep.subr.bf16.mxu0 0
      %383 = vmatpush1.bf16.xpose.msra.mxu0 0
      %384 = vmatprep.subr.bf16.mxu0 0
      %385 = vmatpush1.bf16.xpose.msra.mxu0 0
      %386 = vmatprep.subr.bf16.mxu0 0
      %387 = vmatpush1.bf16.xpose.msra.mxu0 0
      %388 = vmatprep.subr.bf16.mxu0 0
      %389 = vmatpush1.bf16.xpose.msra.mxu0 0
      %390 = vmatprep.subr.bf16.mxu0 0
      %391 = vmatpush1.bf16.xpose.msra.mxu0 0
      %392 = vmatprep.subr.bf16.mxu0 0
      %393 = vmatpush1.bf16.xpose.msra.mxu0 0
      %394 = vmatprep.subr.bf16.mxu0 0
      %395 = vmatpush1.bf16.xpose.msra.mxu0 0
      %396 = vmatprep.subr.bf16.mxu0 0
      %397 = vmatpush1.bf16.xpose.msra.mxu0 0
      %398 = vmatprep.subr.bf16.mxu0 0
      %399 = vmatpush1.bf16.xpose.msra.mxu0 0
      %400 = vmatprep.subr.bf16.mxu0 0
      %401 = vmatpush1.bf16.xpose.msra.mxu0 0
      %402 = vmatprep.subr.bf16.mxu0 0
      %403 = vmatpush1.bf16.xpose.msra.mxu0 0
      %404 = vmatprep.mubr.bf16.mxu0 0
      %405 = vmatmul.mubr.bf16.gmra.mrb[0].mxu0 %v367
      %v406 = vpop.f32.mrb[0].mxu0
      %v407 = vadd.f32 0.0, %v406
      %v408 = vpop.f32.mrb[0].mxu0
      %v409 = vpop.f32.mrb[0].mxu0
      %v410 = vadd.f32 0.0, %v409
      %v411 = vpop.f32.mrb[0].mxu0
      %412 = vdwg.mxu0
      %v414 = vsel %vm318, %v264, 0
      %v417 = vsel %vm318, %v288, 0
      %419 = vmatprep.subr.bf16.mxu0 0
      %420 = vmatpush1.bf16.xpose.msra.mxu0 %v417
      %421 = vmatprep.subr.bf16.mxu0 0
      %422 = vmatpush1.bf16.xpose.msra.mxu0 0
      %423 = vmatprep.subr.bf16.mxu0 0
      %424 = vmatpush1.bf16.xpose.msra.mxu0 0
      %425 = vmatprep.subr.bf16.mxu0 0
      %426 = vmatpush1.bf16.xpose.msra.mxu0 0
      %427 = vmatprep.subr.bf16.mxu0 0
      %428 = vmatpush1.bf16.xpose.msra.mxu0 0
      %429 = vmatprep.subr.bf16.mxu0 0
      %430 = vmatpush1.bf16.xpose.msra.mxu0 0
      %431 = vmatprep.subr.bf16.mxu0 0
      %432 = vmatpush1.bf16.xpose.msra.mxu0 0
      %433 = vmatprep.subr.bf16.mxu0 0
      %434 = vmatpush1.bf16.xpose.msra.mxu0 0
      %435 = vmatprep.subr.bf16.mxu0 0
      %436 = vmatpush1.bf16.xpose.msra.mxu0 0
      %437 = vmatprep.subr.bf16.mxu0 0
      %438 = vmatpush1.bf16.xpose.msra.mxu0 0
      %439 = vmatprep.subr.bf16.mxu0 0
      %440 = vmatpush1.bf16.xpose.msra.mxu0 0
      %441 = vmatprep.subr.bf16.mxu0 0
      %442 = vmatpush1.bf16.xpose.msra.mxu0 0
      %443 = vmatprep.subr.bf16.mxu0 0
      %444 = vmatpush1.bf16.xpose.msra.mxu0 0
      %445 = vmatprep.subr.bf16.mxu0 0
      %446 = vmatpush1.bf16.xpose.msra.mxu0 0
      %447 = vmatprep.subr.bf16.mxu0 0
      %448 = vmatpush1.bf16.xpose.msra.mxu0 0
      %449 = vmatprep.subr.bf16.mxu0 0
      %450 = vmatpush1.bf16.xpose.msra.mxu0 0
      %451 = vmatprep.mubr.bf16.mxu0 0
      %452 = vmatmul.mubr.bf16.gmra.mrb[0].mxu0 %v414
      %v453 = vpop.f32.mrb[0].mxu0
      %v454 = vadd.f32 0.0, %v453
      %v455 = vpop.f32.mrb[0].mxu0
      %v456 = vpop.f32.mrb[0].mxu0
      %v457 = vadd.f32 0.0, %v456
      %v458 = vpop.f32.mrb[0].mxu0
      %459 = vdwg.mxu0
      %v461 = vsel %vm318, %v265, 0
      %v464 = vsel %vm318, %v289, 0
      %466 = vmatprep.subr.bf16.mxu0 0
      %467 = vmatpush1.bf16.xpose.msra.mxu0 %v464
      %468 = vmatprep.subr.bf16.mxu0 0
      %469 = vmatpush1.bf16.xpose.msra.mxu0 0
      %470 = vmatprep.subr.bf16.mxu0 0
      %471 = vmatpush1.bf16.xpose.msra.mxu0 0
      %472 = vmatprep.subr.bf16.mxu0 0
      %473 = vmatpush1.bf16.xpose.msra.mxu0 0
      %474 = vmatprep.subr.bf16.mxu0 0
      %475 = vmatpush1.bf16.xpose.msra.mxu0 0
      %476 = vmatprep.subr.bf16.mxu0 0
      %477 = vmatpush1.bf16.xpose.msra.mxu0 0
      %478 = vmatprep.subr.bf16.mxu0 0
      %479 = vmatpush1.bf16.xpose.msra.mxu0 0
      %480 = vmatprep.subr.bf16.mxu0 0
      %481 = vmatpush1.bf16.xpose.msra.mxu0 0
      %482 = vmatprep.subr.bf16.mxu0 0
      %483 = vmatpush1.bf16.xpose.msra.mxu0 0
      %484 = vmatprep.subr.bf16.mxu0 0
      %485 = vmatpush1.bf16.xpose.msra.mxu0 0
      %486 = vmatprep.subr.bf16.mxu0 0
      %487 = vmatpush1.bf16.xpose.msra.mxu0 0
      %488 = vmatprep.subr.bf16.mxu0 0
      %489 = vmatpush1.bf16.xpose.msra.mxu0 0
      %490 = vmatprep.subr.bf16.mxu0 0
      %491 = vmatpush1.bf16.xpose.msra.mxu0 0
      %492 = vmatprep.subr.bf16.mxu0 0
      %493 = vmatpush1.bf16.xpose.msra.mxu0 0
      %494 = vmatprep.subr.bf16.mxu0 0
      %495 = vmatpush1.bf16.xpose.msra.mxu0 0
      %496 = vmatprep.subr.bf16.mxu0 0
      %497 = vmatpush1.bf16.xpose.msra.mxu0 0
      %498 = vmatprep.mubr.bf16.mxu0 0
      %499 = vmatmul.mubr.bf16.gmra.mrb[0].mxu0 %v461
      %v500 = vpop.f32.mrb[0].mxu0
      %v501 = vadd.f32 0.0, %v500
      %v502 = vpop.f32.mrb[0].mxu0
      %v503 = vpop.f32.mrb[0].mxu0
      %v504 = vadd.f32 0.0, %v503
      %v505 = vpop.f32.mrb[0].mxu0
      %506 = vdwg.mxu0
      %v508 = vsel %vm318, %v266, 0
      %v511 = vsel %vm318, %v290, 0
      %513 = vmatprep.subr.bf16.mxu0 0
      %514 = vmatpush1.bf16.xpose.msra.mxu0 %v511
      %515 = vmatprep.subr.bf16.mxu0 0
      %516 = vmatpush1.bf16.xpose.msra.mxu0 0
      %517 = vmatprep.subr.bf16.mxu0 0
      %518 = vmatpush1.bf16.xpose.msra.mxu0 0
      %519 = vmatprep.subr.bf16.mxu0 0
      %520 = vmatpush1.bf16.xpose.msra.mxu0 0
      %521 = vmatprep.subr.bf16.mxu0 0
      %522 = vmatpush1.bf16.xpose.msra.mxu0 0
      %523 = vmatprep.subr.bf16.mxu0 0
      %524 = vmatpush1.bf16.xpose.msra.mxu0 0
      %525 = vmatprep.subr.bf16.mxu0 0
      %526 = vmatpush1.bf16.xpose.msra.mxu0 0
      %527 = vmatprep.subr.bf16.mxu0 0
      %528 = vmatpush1.bf16.xpose.msra.mxu0 0
      %529 = vmatprep.subr.bf16.mxu0 0
      %530 = vmatpush1.bf16.xpose.msra.mxu0 0
      %531 = vmatprep.subr.bf16.mxu0 0
      %532 = vmatpush1.bf16.xpose.msra.mxu0 0
      %533 = vmatprep.subr.bf16.mxu0 0
      %534 = vmatpush1.bf16.xpose.msra.mxu0 0
      %535 = vmatprep.subr.bf16.mxu0 0
      %536 = vmatpush1.bf16.xpose.msra.mxu0 0
      %537 = vmatprep.subr.bf16.mxu0 0
      %538 = vmatpush1.bf16.xpose.msra.mxu0 0
      %539 = vmatprep.subr.bf16.mxu0 0
      %540 = vmatpush1.bf16.xpose.msra.mxu0 0
      %541 = vmatprep.subr.bf16.mxu0 0
      %542 = vmatpush1.bf16.xpose.msra.mxu0 0
      %543 = vmatprep.subr.bf16.mxu0 0
      %544 = vmatpush1.bf16.xpose.msra.mxu0 0
      %545 = vmatprep.mubr.bf16.mxu0 0
      %546 = vmatmul.mubr.bf16.gmra.mrb[0].mxu0 %v508
      %v547 = vpop.f32.mrb[0].mxu0
      %v548 = vadd.f32 0.0, %v547
      %v549 = vpop.f32.mrb[0].mxu0
      %v550 = vpop.f32.mrb[0].mxu0
      %v551 = vadd.f32 0.0, %v550
      %v552 = vpop.f32.mrb[0].mxu0
      %553 = vdwg.mxu0
      %v555 = vsel %vm318, %v267, 0
      %v558 = vsel %vm318, %v291, 0
      %560 = vmatprep.subr.bf16.mxu0 0
      %561 = vmatpush1.bf16.xpose.msra.mxu0 %v558
      %562 = vmatprep.subr.bf16.mxu0 0
      %563 = vmatpush1.bf16.xpose.msra.mxu0 0
      %564 = vmatprep.subr.bf16.mxu0 0
      %565 = vmatpush1.bf16.xpose.msra.mxu0 0
      %566 = vmatprep.subr.bf16.mxu0 0
      %567 = vmatpush1.bf16.xpose.msra.mxu0 0
      %568 = vmatprep.subr.bf16.mxu0 0
      %569 = vmatpush1.bf16.xpose.msra.mxu0 0
      %570 = vmatprep.subr.bf16.mxu0 0
      %571 = vmatpush1.bf16.xpose.msra.mxu0 0
      %572 = vmatprep.subr.bf16.mxu0 0
      %573 = vmatpush1.bf16.xpose.msra.mxu0 0
      %574 = vmatprep.subr.bf16.mxu0 0
      %575 = vmatpush1.bf16.xpose.msra.mxu0 0
      %576 = vmatprep.subr.bf16.mxu0 0
      %577 = vmatpush1.bf16.xpose.msra.mxu0 0
      %578 = vmatprep.subr.bf16.mxu0 0
      %579 = vmatpush1.bf16.xpose.msra.mxu0 0
      %580 = vmatprep.subr.bf16.mxu0 0
      %581 = vmatpush1.bf16.xpose.msra.mxu0 0
      %582 = vmatprep.subr.bf16.mxu0 0
      %583 = vmatpush1.bf16.xpose.msra.mxu0 0
      %584 = vmatprep.subr.bf16.mxu0 0
      %585 = vmatpush1.bf16.xpose.msra.mxu0 0
      %586 = vmatprep.subr.bf16.mxu0 0
      %587 = vmatpush1.bf16.xpose.msra.mxu0 0
      %588 = vmatprep.subr.bf16.mxu0 0
      %589 = vmatpush1.bf16.xpose.msra.mxu0 0
      %590 = vmatprep.subr.bf16.mxu0 0
      %591 = vmatpush1.bf16.xpose.msra.mxu0 0
      %592 = vmatprep.mubr.bf16.mxu0 0
      %593 = vmatmul.mubr.bf16.gmra.mrb[0].mxu0 %v555
      %v594 = vpop.f32.mrb[0].mxu0
      %v595 = vadd.f32 0.0, %v594
      %v596 = vpop.f32.mrb[0].mxu0
      %v597 = vpop.f32.mrb[0].mxu0
      %v598 = vadd.f32 0.0, %v597
      %v599 = vpop.f32.mrb[0].mxu0
      %600 = vdwg.mxu0
      %v602 = vsel %vm318, %v268, 0
      %v605 = vsel %vm318, %v292, 0
      %607 = vmatprep.subr.bf16.mxu0 0
      %608 = vmatpush1.bf16.xpose.msra.mxu0 %v605
      %609 = vmatprep.subr.bf16.mxu0 0
      %610 = vmatpush1.bf16.xpose.msra.mxu0 0
      %611 = vmatprep.subr.bf16.mxu0 0
      %612 = vmatpush1.bf16.xpose.msra.mxu0 0
      %613 = vmatprep.subr.bf16.mxu0 0
      %614 = vmatpush1.bf16.xpose.msra.mxu0 0
      %615 = vmatprep.subr.bf16.mxu0 0
      %616 = vmatpush1.bf16.xpose.msra.mxu0 0
      %617 = vmatprep.subr.bf16.mxu0 0
      %618 = vmatpush1.bf16.xpose.msra.mxu0 0
      %619 = vmatprep.subr.bf16.mxu0 0
      %620 = vmatpush1.bf16.xpose.msra.mxu0 0
      %621 = vmatprep.subr.bf16.mxu0 0
      %622 = vmatpush1.bf16.xpose.msra.mxu0 0
      %623 = vmatprep.subr.bf16.mxu0 0
      %624 = vmatpush1.bf16.xpose.msra.mxu0 0
      %625 = vmatprep.subr.bf16.mxu0 0
      %626 = vmatpush1.bf16.xpose.msra.mxu0 0
      %627 = vmatprep.subr.bf16.mxu0 0
      %628 = vmatpush1.bf16.xpose.msra.mxu0 0
      %629 = vmatprep.subr.bf16.mxu0 0
      %630 = vmatpush1.bf16.xpose.msra.mxu0 0
      %631 = vmatprep.subr.bf16.mxu0 0
      %632 = vmatpush1.bf16.xpose.msra.mxu0 0
      %633 = vmatprep.subr.bf16.mxu0 0
      %634 = vmatpush1.bf16.xpose.msra.mxu0 0
      %635 = vmatprep.subr.bf16.mxu0 0
      %636 = vmatpush1.bf16.xpose.msra.mxu0 0
      %637 = vmatprep.subr.bf16.mxu0 0
      %638 = vmatpush1.bf16.xpose.msra.mxu0 0
      %639 = vmatprep.mubr.bf16.mxu0 0
      %640 = vmatmul.mubr.bf16.gmra.mrb[0].mxu0 %v602
      %v641 = vpop.f32.mrb[0].mxu0
      %v642 = vadd.f32 0.0, %v641
      %v643 = vpop.f32.mrb[0].mxu0
      %v644 = vpop.f32.mrb[0].mxu0
      %v645 = vadd.f32 0.0, %v644
      %v646 = vpop.f32.mrb[0].mxu0
      %647 = vdwg.mxu0
      %v649 = vsel %vm318, %v269, 0
      %v652 = vsel %vm318, %v293, 0
      %654 = vmatprep.subr.bf16.mxu0 0
      %655 = vmatpush1.bf16.xpose.msra.mxu0 %v652
      %656 = vmatprep.subr.bf16.mxu0 0
      %657 = vmatpush1.bf16.xpose.msra.mxu0 0
      %658 = vmatprep.subr.bf16.mxu0 0
      %659 = vmatpush1.bf16.xpose.msra.mxu0 0
      %660 = vmatprep.subr.bf16.mxu0 0
      %661 = vmatpush1.bf16.xpose.msra.mxu0 0
      %662 = vmatprep.subr.bf16.mxu0 0
      %663 = vmatpush1.bf16.xpose.msra.mxu0 0
      %664 = vmatprep.subr.bf16.mxu0 0
      %665 = vmatpush1.bf16.xpose.msra.mxu0 0
      %666 = vmatprep.subr.bf16.mxu0 0
      %667 = vmatpush1.bf16.xpose.msra.mxu0 0
      %668 = vmatprep.subr.bf16.mxu0 0
      %669 = vmatpush1.bf16.xpose.msra.mxu0 0
      %670 = vmatprep.subr.bf16.mxu0 0
      %671 = vmatpush1.bf16.xpose.msra.mxu0 0
      %672 = vmatprep.subr.bf16.mxu0 0
      %673 = vmatpush1.bf16.xpose.msra.mxu0 0
      %674 = vmatprep.subr.bf16.mxu0 0
      %675 = vmatpush1.bf16.xpose.msra.mxu0 0
      %676 = vmatprep.subr.bf16.mxu0 0
      %677 = vmatpush1.bf16.xpose.msra.mxu0 0
      %678 = vmatprep.subr.bf16.mxu0 0
      %679 = vmatpush1.bf16.xpose.msra.mxu0 0
      %680 = vmatprep.subr.bf16.mxu0 0
      %681 = vmatpush1.bf16.xpose.msra.mxu0 0
      %682 = vmatprep.subr.bf16.mxu0 0
      %683 = vmatpush1.bf16.xpose.msra.mxu0 0
      %684 = vmatprep.subr.bf16.mxu0 0
      %685 = vmatpush1.bf16.xpose.msra.mxu0 0
      %686 = vmatprep.mubr.bf16.mxu0 0
      %687 = vmatmul.mubr.bf16.gmra.mrb[0].mxu0 %v649
      %v688 = vpop.f32.mrb[0].mxu0
      %v689 = vadd.f32 0.0, %v688
      %v690 = vpop.f32.mrb[0].mxu0
      %v691 = vpop.f32.mrb[0].mxu0
      %v692 = vadd.f32 0.0, %v691
      %v693 = vpop.f32.mrb[0].mxu0
      %694 = vdwg.mxu0
      %vm695 = vcmask 130048
      %v696 = vsel %vm695, %v360, -inf
      %697 = vmax.xlane.f32.xlu0 %v696
      %v698 = vpop.xlane.xlu0 %697
      %v699 = vsel %vm695, %v363, -inf
      %700 = vmax.xlane.f32.xlu0 %v699
      %v701 = vpop.xlane.xlu0 %700
      %v702 = vsel %vm695, %v407, -inf
      %703 = vmax.xlane.f32.xlu0 %v702
      %v704 = vpop.xlane.xlu0 %703
      %v705 = vsel %vm695, %v410, -inf
      %706 = vmax.xlane.f32.xlu0 %v705
      %v707 = vpop.xlane.xlu0 %706
      %v708 = vsel %vm695, %v454, -inf
      %709 = vmax.xlane.f32.xlu0 %v708
      %v710 = vpop.xlane.xlu0 %709
      %v711 = vsel %vm695, %v457, -inf
      %712 = vmax.xlane.f32.xlu0 %v711
      %v713 = vpop.xlane.xlu0 %712
      %v714 = vsel %vm695, %v501, -inf
      %715 = vmax.xlane.f32.xlu0 %v714
      %v716 = vpop.xlane.xlu0 %715
      %v717 = vsel %vm695, %v504, -inf
      %718 = vmax.xlane.f32.xlu0 %v717
      %v719 = vpop.xlane.xlu0 %718
      %v720 = vsel %vm695, %v548, -inf
      %721 = vmax.xlane.f32.xlu0 %v720
      %v722 = vpop.xlane.xlu0 %721
      %v723 = vsel %vm695, %v551, -inf
      %724 = vmax.xlane.f32.xlu0 %v723
      %v725 = vpop.xlane.xlu0 %724
      %v726 = vsel %vm695, %v595, -inf
      %727 = vmax.xlane.f32.xlu0 %v726
      %v728 = vpop.xlane.xlu0 %727
      %v729 = vsel %vm695, %v598, -inf
      %730 = vmax.xlane.f32.xlu0 %v729
      %v731 = vpop.xlane.xlu0 %730
      %v732 = vsel %vm695, %v642, -inf
      %733 = vmax.xlane.f32.xlu0 %v732
      %v734 = vpop.xlane.xlu0 %733
      %v735 = vsel %vm695, %v645, -inf
      %736 = vmax.xlane.f32.xlu0 %v735
      %v737 = vpop.xlane.xlu0 %736
      %v738 = vsel %vm695, %v689, -inf
      %739 = vmax.xlane.f32.xlu0 %v738
      %v740 = vpop.xlane.xlu0 %739
      %v741 = vsel %vm695, %v692, -inf
      %742 = vmax.xlane.f32.xlu0 %v741
      %v743 = vpop.xlane.xlu0 %742
      %v744 = vsub.f32 %v360, %v698
      %v745 = vsub.f32 %v363, %v701
      %v746 = vsub.f32 %v407, %v704
      %v747 = vsub.f32 %v410, %v707
      %v748 = vsub.f32 %v454, %v710
      %v749 = vsub.f32 %v457, %v713
      %v750 = vsub.f32 %v501, %v716
      %v751 = vsub.f32 %v504, %v719
      %v752 = vsub.f32 %v548, %v722
      %v753 = vsub.f32 %v551, %v725
      %v754 = vsub.f32 %v595, %v728
      %v755 = vsub.f32 %v598, %v731
      %v756 = vsub.f32 %v642, %v734
      %v757 = vsub.f32 %v645, %v737
      %v758 = vsub.f32 %v689, %v740
      %v759 = vsub.f32 %v692, %v743
      %v760 = vmul.f32 %v744, 1.442695
      %v761 = vpow.pop %v760
      %v762 = vmul.f32 %v745, 1.442695
      %v763 = vpow.pop %v762
      %v764 = vmul.f32 %v746, 1.442695
      %v765 = vpow.pop %v764
      %v766 = vmul.f32 %v747, 1.442695
      %v767 = vpow.pop %v766
      %v768 = vmul.f32 %v748, 1.442695
      %v769 = vpow.pop %v768
      %v770 = vmul.f32 %v749, 1.442695
      %v771 = vpow.pop %v770
      %v772 = vmul.f32 %v750, 1.442695
      %v773 = vpow.pop %v772
      %v774 = vmul.f32 %v751, 1.442695
      %v775 = vpow.pop %v774
      %v776 = vmul.f32 %v752, 1.442695
      %v777 = vpow.pop %v776
      %v778 = vmul.f32 %v753, 1.442695
      %v779 = vpow.pop %v778
      %v780 = vmul.f32 %v754, 1.442695
      %v781 = vpow.pop %v780
      %v782 = vmul.f32 %v755, 1.442695
      %v783 = vpow.pop %v782
      %v784 = vmul.f32 %v756, 1.442695
      %v785 = vpow.pop %v784
      %v786 = vmul.f32 %v757, 1.442695
      %v787 = vpow.pop %v786
      %v788 = vmul.f32 %v758, 1.442695
      %v789 = vpow.pop %v788
      %v790 = vmul.f32 %v759, 1.442695
      %v791 = vpow.pop %v790
      %v792 = vsel %vm695, %v761, 0.0
      %793 = vadd.xlane.f32.xlu0 %v792
      %v794 = vpop.xlane.xlu0 %793
      %v795 = vsel %vm695, %v763, 0.0
      %796 = vadd.xlane.f32.xlu0 %v795
      %v797 = vpop.xlane.xlu0 %796
      %v798 = vsel %vm695, %v765, 0.0
      %799 = vadd.xlane.f32.xlu0 %v798
      %v800 = vpop.xlane.xlu0 %799
      %v801 = vsel %vm695, %v767, 0.0
      %802 = vadd.xlane.f32.xlu0 %v801
      %v803 = vpop.xlane.xlu0 %802
      %v804 = vsel %vm695, %v769, 0.0
      %805 = vadd.xlane.f32.xlu0 %v804
      %v806 = vpop.xlane.xlu0 %805
      %v807 = vsel %vm695, %v771, 0.0
      %808 = vadd.xlane.f32.xlu0 %v807
      %v809 = vpop.xlane.xlu0 %808
      %v810 = vsel %vm695, %v773, 0.0
      %811 = vadd.xlane.f32.xlu0 %v810
      %v812 = vpop.xlane.xlu0 %811
      %v813 = vsel %vm695, %v775, 0.0
      %814 = vadd.xlane.f32.xlu0 %v813
      %v815 = vpop.xlane.xlu0 %814
      %v816 = vsel %vm695, %v777, 0.0
      %817 = vadd.xlane.f32.xlu0 %v816
      %v818 = vpop.xlane.xlu0 %817
      %v819 = vsel %vm695, %v779, 0.0
      %820 = vadd.xlane.f32.xlu0 %v819
      %v821 = vpop.xlane.xlu0 %820
      %v822 = vsel %vm695, %v781, 0.0
      %823 = vadd.xlane.f32.xlu0 %v822
      %v824 = vpop.xlane.xlu0 %823
      %v825 = vsel %vm695, %v783, 0.0
      %826 = vadd.xlane.f32.xlu0 %v825
      %v827 = vpop.xlane.xlu0 %826
      %v828 = vsel %vm695, %v785, 0.0
      %829 = vadd.xlane.f32.xlu0 %v828
      %v830 = vpop.xlane.xlu0 %829
      %v831 = vsel %vm695, %v787, 0.0
      %832 = vadd.xlane.f32.xlu0 %v831
      %v833 = vpop.xlane.xlu0 %832
      %v834 = vsel %vm695, %v789, 0.0
      %835 = vadd.xlane.f32.xlu0 %v834
      %v836 = vpop.xlane.xlu0 %835
      %v837 = vsel %vm695, %v791, 0.0
      %838 = vadd.xlane.f32.xlu0 %v837
      %v839 = vpop.xlane.xlu0 %838
      %v840 = vpack.c.bf16 %v763, %v761
      %v841 = vpack.c.bf16 %v767, %v765
      %v842 = vpack.c.bf16 %v771, %v769
      %v843 = vpack.c.bf16 %v775, %v773
      %v844 = vpack.c.bf16 %v779, %v777
      %v845 = vpack.c.bf16 %v783, %v781
      %v846 = vpack.c.bf16 %v787, %v785
      %v847 = vpack.c.bf16 %v791, %v789
      %v849 = vsel %vm695, %v840, 0
      %851 = vmatprep.subr.bf16.mxu0 0
      %852 = vmatpush1.bf16.msra.mxu0 %v310
      %853 = vmatprep.subr.bf16.mxu0 0
      %854 = vmatpush1.bf16.msra.mxu0 0
      %855 = vmatprep.subr.bf16.mxu0 0
      %856 = vmatpush1.bf16.msra.mxu0 0
      %857 = vmatprep.subr.bf16.mxu0 0
      %858 = vmatpush1.bf16.msra.mxu0 0
      %859 = vmatprep.subr.bf16.mxu0 0
      %860 = vmatpush1.bf16.msra.mxu0 0
      %861 = vmatprep.subr.bf16.mxu0 0
      %862 = vmatpush1.bf16.msra.mxu0 0
      %863 = vmatprep.subr.bf16.mxu0 0
      %864 = vmatpush1.bf16.msra.mxu0 0
      %865 = vmatprep.subr.bf16.mxu0 0
      %866 = vmatpush1.bf16.msra.mxu0 0
      %867 = vmatprep.subr.bf16.mxu0 0
      %868 = vmatpush1.bf16.msra.mxu0 0
      %869 = vmatprep.subr.bf16.mxu0 0
      %870 = vmatpush1.bf16.msra.mxu0 0
      %871 = vmatprep.subr.bf16.mxu0 0
      %872 = vmatpush1.bf16.msra.mxu0 0
      %873 = vmatprep.subr.bf16.mxu0 0
      %874 = vmatpush1.bf16.msra.mxu0 0
      %875 = vmatprep.subr.bf16.mxu0 0
      %876 = vmatpush1.bf16.msra.mxu0 0
      %877 = vmatprep.subr.bf16.mxu0 0
      %878 = vmatpush1.bf16.msra.mxu0 0
      %879 = vmatprep.subr.bf16.mxu0 0
      %880 = vmatpush1.bf16.msra.mxu0 0
      %881 = vmatprep.subr.bf16.mxu0 0
      %882 = vmatpush1.bf16.msra.mxu0 0
      %883 = vmatprep.mubr.bf16.mxu0 0
      %884 = vmatmul.mubr.bf16.gmra.mrb[0].mxu0 %v849
      %v885 = vpop.f32.mrb[0].mxu0
      %v886 = vadd.f32 0.0, %v885
      %v887 = vpop.f32.mrb[0].mxu0
      %v888 = vpop.f32.mrb[0].mxu0
      %v889 = vadd.f32 0.0, %v888
      %v890 = vpop.f32.mrb[0].mxu0
      %891 = vdwg.mxu0
      %v893 = vsel %vm695, %v841, 0
      %895 = vmatprep.subr.bf16.mxu0 0
      %896 = vmatpush1.bf16.msra.mxu0 %v311
      %897 = vmatprep.subr.bf16.mxu0 0
      %898 = vmatpush1.bf16.msra.mxu0 0
      %899 = vmatprep.subr.bf16.mxu0 0
      %900 = vmatpush1.bf16.msra.mxu0 0
      %901 = vmatprep.subr.bf16.mxu0 0
      %902 = vmatpush1.bf16.msra.mxu0 0
      %903 = vmatprep.subr.bf16.mxu0 0
      %904 = vmatpush1.bf16.msra.mxu0 0
      %905 = vmatprep.subr.bf16.mxu0 0
      %906 = vmatpush1.bf16.msra.mxu0 0
      %907 = vmatprep.subr.bf16.mxu0 0
      %908 = vmatpush1.bf16.msra.mxu0 0
      %909 = vmatprep.subr.bf16.mxu0 0
      %910 = vmatpush1.bf16.msra.mxu0 0
      %911 = vmatprep.subr.bf16.mxu0 0
      %912 = vmatpush1.bf16.msra.mxu0 0
      %913 = vmatprep.subr.bf16.mxu0 0
      %914 = vmatpush1.bf16.msra.mxu0 0
      %915 = vmatprep.subr.bf16.mxu0 0
      %916 = vmatpush1.bf16.msra.mxu0 0
      %917 = vmatprep.subr.bf16.mxu0 0
      %918 = vmatpush1.bf16.msra.mxu0 0
      %919 = vmatprep.subr.bf16.mxu0 0
      %920 = vmatpush1.bf16.msra.mxu0 0
      %921 = vmatprep.subr.bf16.mxu0 0
      %922 = vmatpush1.bf16.msra.mxu0 0
      %923 = vmatprep.subr.bf16.mxu0 0
      %924 = vmatpush1.bf16.msra.mxu0 0
      %925 = vmatprep.subr.bf16.mxu0 0
      %926 = vmatpush1.bf16.msra.mxu0 0
      %927 = vmatprep.mubr.bf16.mxu0 0
      %928 = vmatmul.mubr.bf16.gmra.mrb[0].mxu0 %v893
      %v929 = vpop.f32.mrb[0].mxu0
      %v930 = vadd.f32 0.0, %v929
      %v931 = vpop.f32.mrb[0].mxu0
      %v932 = vpop.f32.mrb[0].mxu0
      %v933 = vadd.f32 0.0, %v932
      %v934 = vpop.f32.mrb[0].mxu0
      %935 = vdwg.mxu0
      %v937 = vsel %vm695, %v842, 0
      %939 = vmatprep.subr.bf16.mxu0 0
      %940 = vmatpush1.bf16.msra.mxu0 %v312
      %941 = vmatprep.subr.bf16.mxu0 0
      %942 = vmatpush1.bf16.msra.mxu0 0
      %943 = vmatprep.subr.bf16.mxu0 0
      %944 = vmatpush1.bf16.msra.mxu0 0
      %945 = vmatprep.subr.bf16.mxu0 0
      %946 = vmatpush1.bf16.msra.mxu0 0
      %947 = vmatprep.subr.bf16.mxu0 0
      %948 = vmatpush1.bf16.msra.mxu0 0
      %949 = vmatprep.subr.bf16.mxu0 0
      %950 = vmatpush1.bf16.msra.mxu0 0
      %951 = vmatprep.subr.bf16.mxu0 0
      %952 = vmatpush1.bf16.msra.mxu0 0
      %953 = vmatprep.subr.bf16.mxu0 0
      %954 = vmatpush1.bf16.msra.mxu0 0
      %955 = vmatprep.subr.bf16.mxu0 0
      %956 = vmatpush1.bf16.msra.mxu0 0
      %957 = vmatprep.subr.bf16.mxu0 0
      %958 = vmatpush1.bf16.msra.mxu0 0
      %959 = vmatprep.subr.bf16.mxu0 0
      %960 = vmatpush1.bf16.msra.mxu0 0
      %961 = vmatprep.subr.bf16.mxu0 0
      %962 = vmatpush1.bf16.msra.mxu0 0
      %963 = vmatprep.subr.bf16.mxu0 0
      %964 = vmatpush1.bf16.msra.mxu0 0
      %965 = vmatprep.subr.bf16.mxu0 0
      %966 = vmatpush1.bf16.msra.mxu0 0
      %967 = vmatprep.subr.bf16.mxu0 0
      %968 = vmatpush1.bf16.msra.mxu0 0
      %969 = vmatprep.subr.bf16.mxu0 0
      %970 = vmatpush1.bf16.msra.mxu0 0
      %971 = vmatprep.mubr.bf16.mxu0 0
      %972 = vmatmul.mubr.bf16.gmra.mrb[0].mxu0 %v937
      %v973 = vpop.f32.mrb[0].mxu0
      %v974 = vadd.f32 0.0, %v973
      %v975 = vpop.f32.mrb[0].mxu0
      %v976 = vpop.f32.mrb[0].mxu0
      %v977 = vadd.f32 0.0, %v976
      %v978 = vpop.f32.mrb[0].mxu0
      %979 = vdwg.mxu0
      %v981 = vsel %vm695, %v843, 0
      %983 = vmatprep.subr.bf16.mxu0 0
      %984 = vmatpush1.bf16.msra.mxu0 %v313
      %985 = vmatprep.subr.bf16.mxu0 0
      %986 = vmatpush1.bf16.msra.mxu0 0
      %987 = vmatprep.subr.bf16.mxu0 0
      %988 = vmatpush1.bf16.msra.mxu0 0
      %989 = vmatprep.subr.bf16.mxu0 0
      %990 = vmatpush1.bf16.msra.mxu0 0
      %991 = vmatprep.subr.bf16.mxu0 0
      %992 = vmatpush1.bf16.msra.mxu0 0
      %993 = vmatprep.subr.bf16.mxu0 0
      %994 = vmatpush1.bf16.msra.mxu0 0
      %995 = vmatprep.subr.bf16.mxu0 0
      %996 = vmatpush1.bf16.msra.mxu0 0
      %997 = vmatprep.subr.bf16.mxu0 0
      %998 = vmatpush1.bf16.msra.mxu0 0
      %999 = vmatprep.subr.bf16.mxu0 0
      %1000 = vmatpush1.bf16.msra.mxu0 0
      %1001 = vmatprep.subr.bf16.mxu0 0
      %1002 = vmatpush1.bf16.msra.mxu0 0
      %1003 = vmatprep.subr.bf16.mxu0 0
      %1004 = vmatpush1.bf16.msra.mxu0 0
      %1005 = vmatprep.subr.bf16.mxu0 0
      %1006 = vmatpush1.bf16.msra.mxu0 0
      %1007 = vmatprep.subr.bf16.mxu0 0
      %1008 = vmatpush1.bf16.msra.mxu0 0
      %1009 = vmatprep.subr.bf16.mxu0 0
      %1010 = vmatpush1.bf16.msra.mxu0 0
      %1011 = vmatprep.subr.bf16.mxu0 0
      %1012 = vmatpush1.bf16.msra.mxu0 0
      %1013 = vmatprep.subr.bf16.mxu0 0
      %1014 = vmatpush1.bf16.msra.mxu0 0
      %1015 = vmatprep.mubr.bf16.mxu0 0
      %1016 = vmatmul.mubr.bf16.gmra.mrb[0].mxu0 %v981
      %v1017 = vpop.f32.mrb[0].mxu0
      %v1018 = vadd.f32 0.0, %v1017
      %v1019 = vpop.f32.mrb[0].mxu0
      %v1020 = vpop.f32.mrb[0].mxu0
      %v1021 = vadd.f32 0.0, %v1020
      %v1022 = vpop.f32.mrb[0].mxu0
      %1023 = vdwg.mxu0
      %v1025 = vsel %vm695, %v844, 0
      %1027 = vmatprep.subr.bf16.mxu0 0
      %1028 = vmatpush1.bf16.msra.mxu0 %v314
      %1029 = vmatprep.subr.bf16.mxu0 0
      %1030 = vmatpush1.bf16.msra.mxu0 0
      %1031 = vmatprep.subr.bf16.mxu0 0
      %1032 = vmatpush1.bf16.msra.mxu0 0
      %1033 = vmatprep.subr.bf16.mxu0 0
      %1034 = vmatpush1.bf16.msra.mxu0 0
      %1035 = vmatprep.subr.bf16.mxu0 0
      %1036 = vmatpush1.bf16.msra.mxu0 0
      %1037 = vmatprep.subr.bf16.mxu0 0
      %1038 = vmatpush1.bf16.msra.mxu0 0
      %1039 = vmatprep.subr.bf16.mxu0 0
      %1040 = vmatpush1.bf16.msra.mxu0 0
      %1041 = vmatprep.subr.bf16.mxu0 0
      %1042 = vmatpush1.bf16.msra.mxu0 0
      %1043 = vmatprep.subr.bf16.mxu0 0
      %1044 = vmatpush1.bf16.msra.mxu0 0
      %1045 = vmatprep.subr.bf16.mxu0 0
      %1046 = vmatpush1.bf16.msra.mxu0 0
      %1047 = vmatprep.subr.bf16.mxu0 0
      %1048 = vmatpush1.bf16.msra.mxu0 0
      %1049 = vmatprep.subr.bf16.mxu0 0
      %1050 = vmatpush1.bf16.msra.mxu0 0
      %1051 = vmatprep.subr.bf16.mxu0 0
      %1052 = vmatpush1.bf16.msra.mxu0 0
      %1053 = vmatprep.subr.bf16.mxu0 0
      %1054 = vmatpush1.bf16.msra.mxu0 0
      %1055 = vmatprep.subr.bf16.mxu0 0
      %1056 = vmatpush1.bf16.msra.mxu0 0
      %1057 = vmatprep.subr.bf16.mxu0 0
      %1058 = vmatpush1.bf16.msra.mxu0 0
      %1059 = vmatprep.mubr.bf16.mxu0 0
      %1060 = vmatmul.mubr.bf16.gmra.mrb[0].mxu0 %v1025
      %v1061 = vpop.f32.mrb[0].mxu0
      %v1062 = vadd.f32 0.0, %v1061
      %v1063 = vpop.f32.mrb[0].mxu0
      %v1064 = vpop.f32.mrb[0].mxu0
      %v1065 = vadd.f32 0.0, %v1064
      %v1066 = vpop.f32.mrb[0].mxu0
      %1067 = vdwg.mxu0
      %v1069 = vsel %vm695, %v845, 0
      %1071 = vmatprep.subr.bf16.mxu0 0
      %1072 = vmatpush1.bf16.msra.mxu0 %v315
      %1073 = vmatprep.subr.bf16.mxu0 0
      %1074 = vmatpush1.bf16.msra.mxu0 0
      %1075 = vmatprep.subr.bf16.mxu0 0
      %1076 = vmatpush1.bf16.msra.mxu0 0
      %1077 = vmatprep.subr.bf16.mxu0 0
      %1078 = vmatpush1.bf16.msra.mxu0 0
      %1079 = vmatprep.subr.bf16.mxu0 0
      %1080 = vmatpush1.bf16.msra.mxu0 0
      %1081 = vmatprep.subr.bf16.mxu0 0
      %1082 = vmatpush1.bf16.msra.mxu0 0
      %1083 = vmatprep.subr.bf16.mxu0 0
      %1084 = vmatpush1.bf16.msra.mxu0 0
      %1085 = vmatprep.subr.bf16.mxu0 0
      %1086 = vmatpush1.bf16.msra.mxu0 0
      %1087 = vmatprep.subr.bf16.mxu0 0
      %1088 = vmatpush1.bf16.msra.mxu0 0
      %1089 = vmatprep.subr.bf16.mxu0 0
      %1090 = vmatpush1.bf16.msra.mxu0 0
      %1091 = vmatprep.subr.bf16.mxu0 0
      %1092 = vmatpush1.bf16.msra.mxu0 0
      %1093 = vmatprep.subr.bf16.mxu0 0
      %1094 = vmatpush1.bf16.msra.mxu0 0
      %1095 = vmatprep.subr.bf16.mxu0 0
      %1096 = vmatpush1.bf16.msra.mxu0 0
      %1097 = vmatprep.subr.bf16.mxu0 0
      %1098 = vmatpush1.bf16.msra.mxu0 0
      %1099 = vmatprep.subr.bf16.mxu0 0
      %1100 = vmatpush1.bf16.msra.mxu0 0
      %1101 = vmatprep.subr.bf16.mxu0 0
      %1102 = vmatpush1.bf16.msra.mxu0 0
      %1103 = vmatprep.mubr.bf16.mxu0 0
      %1104 = vmatmul.mubr.bf16.gmra.mrb[0].mxu0 %v1069
      %v1105 = vpop.f32.mrb[0].mxu0
      %v1106 = vadd.f32 0.0, %v1105
      %v1107 = vpop.f32.mrb[0].mxu0
      %v1108 = vpop.f32.mrb[0].mxu0
      %v1109 = vadd.f32 0.0, %v1108
      %v1110 = vpop.f32.mrb[0].mxu0
      %1111 = vdwg.mxu0
      %v1113 = vsel %vm695, %v846, 0
      %1115 = vmatprep.subr.bf16.mxu0 0
      %1116 = vmatpush1.bf16.msra.mxu0 %v316
      %1117 = vmatprep.subr.bf16.mxu0 0
      %1118 = vmatpush1.bf16.msra.mxu0 0
      %1119 = vmatprep.subr.bf16.mxu0 0
      %1120 = vmatpush1.bf16.msra.mxu0 0
      %1121 = vmatprep.subr.bf16.mxu0 0
      %1122 = vmatpush1.bf16.msra.mxu0 0
      %1123 = vmatprep.subr.bf16.mxu0 0
      %1124 = vmatpush1.bf16.msra.mxu0 0
      %1125 = vmatprep.subr.bf16.mxu0 0
      %1126 = vmatpush1.bf16.msra.mxu0 0
      %1127 = vmatprep.subr.bf16.mxu0 0
      %1128 = vmatpush1.bf16.msra.mxu0 0
      %1129 = vmatprep.subr.bf16.mxu0 0
      %1130 = vmatpush1.bf16.msra.mxu0 0
      %1131 = vmatprep.subr.bf16.mxu0 0
      %1132 = vmatpush1.bf16.msra.mxu0 0
      %1133 = vmatprep.subr.bf16.mxu0 0
      %1134 = vmatpush1.bf16.msra.mxu0 0
      %1135 = vmatprep.subr.bf16.mxu0 0
      %1136 = vmatpush1.bf16.msra.mxu0 0
      %1137 = vmatprep.subr.bf16.mxu0 0
      %1138 = vmatpush1.bf16.msra.mxu0 0
      %1139 = vmatprep.subr.bf16.mxu0 0
      %1140 = vmatpush1.bf16.msra.mxu0 0
      %1141 = vmatprep.subr.bf16.mxu0 0
      %1142 = vmatpush1.bf16.msra.mxu0 0
      %1143 = vmatprep.subr.bf16.mxu0 0
      %1144 = vmatpush1.bf16.msra.mxu0 0
      %1145 = vmatprep.subr.bf16.mxu0 0
      %1146 = vmatpush1.bf16.msra.mxu0 0
      %1147 = vmatprep.mubr.bf16.mxu0 0
      %1148 = vmatmul.mubr.bf16.gmra.mrb[0].mxu0 %v1113
      %v1149 = vpop.f32.mrb[0].mxu0
      %v1150 = vadd.f32 0.0, %v1149
      %v1151 = vpop.f32.mrb[0].mxu0
      %v1152 = vpop.f32.mrb[0].mxu0
      %v1153 = vadd.f32 0.0, %v1152
      %v1154 = vpop.f32.mrb[0].mxu0
      %1155 = vdwg.mxu0
      %v1157 = vsel %vm695, %v847, 0
      %1159 = vmatprep.subr.bf16.mxu0 0
      %1160 = vmatpush1.bf16.msra.mxu0 %v317
      %1161 = vmatprep.subr.bf16.mxu0 0
      %1162 = vmatpush1.bf16.msra.mxu0 0
      %1163 = vmatprep.subr.bf16.mxu0 0
      %1164 = vmatpush1.bf16.msra.mxu0 0
      %1165 = vmatprep.subr.bf16.mxu0 0
      %1166 = vmatpush1.bf16.msra.mxu0 0
      %1167 = vmatprep.subr.bf16.mxu0 0
      %1168 = vmatpush1.bf16.msra.mxu0 0
      %1169 = vmatprep.subr.bf16.mxu0 0
      %1170 = vmatpush1.bf16.msra.mxu0 0
      %1171 = vmatprep.subr.bf16.mxu0 0
      %1172 = vmatpush1.bf16.msra.mxu0 0
      %1173 = vmatprep.subr.bf16.mxu0 0
      %1174 = vmatpush1.bf16.msra.mxu0 0
      %1175 = vmatprep.subr.bf16.mxu0 0
      %1176 = vmatpush1.bf16.msra.mxu0 0
      %1177 = vmatprep.subr.bf16.mxu0 0
      %1178 = vmatpush1.bf16.msra.mxu0 0
      %1179 = vmatprep.subr.bf16.mxu0 0
      %1180 = vmatpush1.bf16.msra.mxu0 0
      %1181 = vmatprep.subr.bf16.mxu0 0
      %1182 = vmatpush1.bf16.msra.mxu0 0
      %1183 = vmatprep.subr.bf16.mxu0 0
      %1184 = vmatpush1.bf16.msra.mxu0 0
      %1185 = vmatprep.subr.bf16.mxu0 0
      %1186 = vmatpush1.bf16.msra.mxu0 0
      %1187 = vmatprep.subr.bf16.mxu0 0
      %1188 = vmatpush1.bf16.msra.mxu0 0
      %1189 = vmatprep.subr.bf16.mxu0 0
      %1190 = vmatpush1.bf16.msra.mxu0 0
      %1191 = vmatprep.mubr.bf16.mxu0 0
      %1192 = vmatmul.mubr.bf16.gmra.mrb[0].mxu0 %v1157
      %v1193 = vpop.f32.mrb[0].mxu0
      %v1194 = vadd.f32 0.0, %v1193
      %v1195 = vpop.f32.mrb[0].mxu0
      %v1196 = vpop.f32.mrb[0].mxu0
      %v1197 = vadd.f32 0.0, %v1196
      %v1198 = vpop.f32.mrb[0].mxu0
      %1199 = vdwg.mxu0
      %v1200 = vrcp.pop %v794
      %v1201 = vrcp.pop %v797
      %v1202 = vrcp.pop %v800
      %v1203 = vrcp.pop %v803
      %v1204 = vrcp.pop %v806
      %v1205 = vrcp.pop %v809
      %v1206 = vrcp.pop %v812
      %v1207 = vrcp.pop %v815
      %v1208 = vrcp.pop %v818
      %v1209 = vrcp.pop %v821
      %v1210 = vrcp.pop %v824
      %v1211 = vrcp.pop %v827
      %v1212 = vrcp.pop %v830
      %v1213 = vrcp.pop %v833
      %v1214 = vrcp.pop %v836
      %v1215 = vrcp.pop %v839
      %v1216 = vmul.f32 %v886, %v1200
      %v1217 = vmul.f32 %v889, %v1201
      %v1218 = vmul.f32 %v930, %v1202
      %v1219 = vmul.f32 %v933, %v1203
      %v1220 = vmul.f32 %v974, %v1204
      %v1221 = vmul.f32 %v977, %v1205
      %v1222 = vmul.f32 %v1018, %v1206
      %v1223 = vmul.f32 %v1021, %v1207
      %v1224 = vmul.f32 %v1062, %v1208
      %v1225 = vmul.f32 %v1065, %v1209
      %v1226 = vmul.f32 %v1106, %v1210
      %v1227 = vmul.f32 %v1109, %v1211
      %v1228 = vmul.f32 %v1150, %v1212
      %v1229 = vmul.f32 %v1153, %v1213
      %v1230 = vmul.f32 %v1194, %v1214
      %v1231 = vmul.f32 %v1197, %v1215
      %1232 = vst.msk [vmem:[%s227] sm:$0xff] %vm318, %v1216
      %1233 = vst.msk [vmem:[%s227 + $0x8] sm:$0xff] %vm318, %v1217
      %1234 = vst.msk [vmem:[%s227 + $0x10] sm:$0xff] %vm318, %v1218
      %1235 = vst.msk [vmem:[%s227 + $0x18] sm:$0xff] %vm318, %v1219
      %1236 = vst.msk [vmem:[%s227 + $0x20] sm:$0xff] %vm318, %v1220
      %1237 = vst.msk [vmem:[%s227 + $0x28] sm:$0xff] %vm318, %v1221
      %1238 = vst.msk [vmem:[%s227 + $0x30] sm:$0xff] %vm318, %v1222
      %1239 = vst.msk [vmem:[%s227 + $0x38] sm:$0xff] %vm318, %v1223
      %1240 = vst.msk [vmem:[%s227 + $0x40] sm:$0xff] %vm318, %v1224
      %1241 = vst.msk [vmem:[%s227 + $0x48] sm:$0xff] %vm318, %v1225
      %1242 = vst.msk [vmem:[%s227 + $0x50] sm:$0xff] %vm318, %v1226
      %1243 = vst.msk [vmem:[%s227 + $0x58] sm:$0xff] %vm318, %v1227
      %1244 = vst.msk [vmem:[%s227 + $0x60] sm:$0xff] %vm318, %v1228
      %1245 = vst.msk [vmem:[%s227 + $0x68] sm:$0xff] %vm318, %v1229
      %1246 = vst.msk [vmem:[%s227 + $0x70] sm:$0xff] %vm318, %v1230
      %1247 = vst.msk [vmem:[%s227 + $0x78] sm:$0xff] %vm318, %v1231
      %s1248 = smul.u32 8, %s14
      %p1249 = scmp.lt.s32.totalorder %s1248, 15
      %s1250 = scalar_select %p1249, %s1248, 15
      %s1251 = smul.addr %s1250, 2
      %s1252 = smul.addr %s1251, 8
      %s1253 = scalar_lea.vmem %s3, %s1252
      // Predicated region
      $region33: #{transformer_decoder_forward.20} parent=31 // pred_check
        %p1254 = pneg %p110
      $region34: #{transformer_decoder_forward.20} parent=31 // pred_check_branch
        %1256 = sbr.rel (%p1254) target = $region36
      $region35: #{transformer_decoder_forward.20} parent=31 // pred_region
        %s1257 = smul.u32 8, %s14
      $region36: #{transformer_decoder_forward.20} parent=31 // pred_fallthru
        _
    $region32: #{transformer_decoder_forward.20} parent=5 // pred_fallthru
      _
    %p1258 = scmp.le.s32.totalorder 2, %s9
    // Predicated region
    $region37: #{transformer_decoder_forward.20} parent=5 // pred_check
      %p1259 = pneg %p1258
    $region38: #{transformer_decoder_forward.20} parent=5 // pred_check_branch
      %1261 = sbr.rel (%p1259) target = $region40
    $region39: #{transformer_decoder_forward.20} parent=5 // pred_region
      %s1262 = ssub.s32 %s9, 2
      // Predicated region
      $region41: #{transformer_decoder_forward.20} parent=39 // pred_check
        %p1263 = pneg %p116
      $region42: #{transformer_decoder_forward.20} parent=39 // pred_check_branch
        %1265 = sbr.rel (%p1263) target = $region44
      $region43: #{transformer_decoder_forward.20} parent=39 // pred_region
        %s1266 = smul.u32 8, %s15
        %p1267 = scmp.lt.s32.totalorder %s1266, 15
        %s1268 = scalar_select %p1267, %s1266, 15
        %s1269 = smul.addr %s1268, 2
        %s1270 = smul.addr %s1269, 8
        %s1271 = scalar_lea.vmem %s3, %s1270
      $region44: #{transformer_decoder_forward.20} parent=39 // pred_fallthru
        _
    $region40: #{transformer_decoder_forward.20} parent=5 // pred_fallthru
      _
  $region6: #{transformer_decoder_forward.20} parent=0 // loop_footer
    %s13 = sadd.s32 1, %s9
  $region7: #{transformer_decoder_forward.20} parent=0 // loop_footer_branch
    %8 = sbr.rel target = $region3
  $region8: #{transformer_decoder_forward.20} parent=0 // loop_exit
    _

// kernel: transformer_decoder_forward.24
$region0: #{transformer_decoder_forward.24}
  #allocation0 [shape = 'u32[]', space=smem, size = 0x4, offset = 0x4, fixed_abs, tag = 'smem constant byte address 0x4 - core index']
  #allocation1 [shape = 'u32[144,128]{1,0:T(1,128)}', space=vmem, size = 0x12000, scoped, tag = 'internal scratch']
  #allocation2 [shape = 'f32[16,64]{1,0:T(8,128)}', space=vmem, size = 0x2000, scoped, tag = 'scratch operand']
  %s0 = inlined_call_operand.vmem [shape: f32[32,128], index: 0, kind: input, shape index: {}]
  %s1 = inlined_call_operand.vmem [shape: bf16[128,64], index: 1, kind: input, shape index: {}]
  %s2 = inlined_call_operand.vmem [shape: f32[1,64], index: 2, kind: input, shape index: {}]
  %s3 = inlined_call_operand.vmem [shape: f32[32,64], index: 3, kind: input, shape index: {}]
  %s4 = inlined_call_operand.vmem [shape: f32[32,64], index: 4, kind: output, shape index: {}]
  %s5 = sld [smem:[#allocation0]]
  $region57: #{transformer_decoder_forward.24} parent=0
    _
  %s7 = ssub.s32 1, %s5
  %s8 = scalar_select 0, %s7, %s5
  loop: start=0, step=1, limit=4
  $region2: #{transformer_decoder_forward.24} parent=0 // loop_pre_header
    _
  $region3: #{transformer_decoder_forward.24} parent=0 // loop_header
    %s10 = sphi 0, %s14
    %p11 = scmp.ge.s32.totalorder %s10, 4
    %s17 = sphi 0, %s36
    %s18 = sphi 0, %s32
    %s19 = sphi 0, %s28
    %s20 = sphi 0, %s17
    %s21 = sphi 0, %s18
    %s22 = sphi 0, %s19
    %s23 = sphi 0, %s20
    %s24 = sphi 0, %s21
    %s25 = sphi 0, %s22
    %s41 = sphi 0, %s43
    %s44 = sphi 0, %s41
    %s45 = sphi 0, %s44
    %s61 = sphi 0, %s45
    %s69 = sphi 0, %s71
    %s72 = sphi 0, %s69
    %s73 = sphi 0, %s72
    %s89 = sphi 0, %s73
    %s95 = sphi 0, %s97
    %s98 = sphi 0, %s95
    %s99 = sphi 0, %s98
    %s115 = sphi 0, %s99
    %s123 = sphi 0, %s125
    %s126 = sphi 0, %s123
    %s127 = sphi 0, %s126
    %s143 = sphi 0, %s127
    %s151 = sphi 0, %s153
    %s154 = sphi 0, %s151
    %s155 = sphi 0, %s154
    %s171 = sphi 0, %s155
  $region4: #{transformer_decoder_forward.24} parent=0 // loop_header_branch
    %13 = sbr.rel (%p11) target = $region8
  $region5: #{transformer_decoder_forward.24} parent=0 // loop_body
    %s15 = ssub.s32 %s10, 1
    %s16 = ssub.s32 %s10, 2
    %s26 = sadd.s32 1, %s19
    %p27 = scmp.ge.s32.totalorder %s26, 1
    %s28 = scalar_select %p27, 0, %s26
    %s29 = sadd.s32 1, %s18
    %s30 = scalar_select %p27, %s29, %s18
    %p31 = scmp.ge.s32.totalorder %s30, 1
    %s32 = scalar_select %p31, 0, %s30
    %s33 = sadd.s32 1, %s17
    %s34 = scalar_select %p31, %s33, %s17
    %p35 = scmp.ge.s32.totalorder %s34, 2
    %s36 = scalar_select %p35, 0, %s34
    %s37 = ssub.s32 %s17, %s36
    %s38 = ssub.s32 %s19, %s28
    %s39 = sor.u32 %s37, %s38
    %p40 = scmp.eq.s32.totalorder %s39, 0
    %s42 = sadd.s32 %s41, 1
    %s43 = scalar_select %p40, %s41, %s42
    %p46 = pneg %p40
    %p47 = scmp.eq.s32.totalorder %s10, 1
    %p48 = por %p46, %p47
    %p49 = scmp.ne.s32.totalorder %s41, %s44
    %p50 = scmp.eq.s32.totalorder %s10, 0
    %p51 = por %p49, %p50
    %p52 = scmp.ne.s32.totalorder %s41, %s44
    %p53 = scmp.eq.s32.totalorder %s15, 1
    %p54 = por %p52, %p53
    %p55 = scmp.ne.s32.totalorder %s44, %s45
    %p56 = scmp.eq.s32.totalorder %s15, 0
    %p57 = por %p55, %p56
    %p58 = scmp.ne.s32.totalorder %s44, %s45
    %p59 = scmp.eq.s32.totalorder %s16, 1
    %p60 = por %p58, %p59
    %p62 = scmp.ne.s32.totalorder %s45, %s61
    %p63 = scmp.eq.s32.totalorder %s16, 0
    %p64 = por %p62, %p63
    %s65 = ssub.s32 %s19, %s28
    %s66 = ssub.s32 %s18, %s32
    %s67 = sor.u32 %s65, %s66
    %p68 = scmp.eq.s32.totalorder %s67, 0
    %s70 = sadd.s32 %s69, 1
    %s71 = scalar_select %p68, %s69, %s70
    %p74 = pneg %p68
    %p75 = scmp.eq.s32.totalorder %s10, 1
    %p76 = por %p74, %p75
    %p77 = scmp.ne.s32.totalorder %s69, %s72
    %p78 = scmp.eq.s32.totalorder %s10, 0
    %p79 = por %p77, %p78
    %p80 = scmp.ne.s32.totalorder %s69, %s72
    %p81 = scmp.eq.s32.totalorder %s15, 1
    %p82 = por %p80, %p81
    %p83 = scmp.ne.s32.totalorder %s72, %s73
    %p84 = scmp.eq.s32.totalorder %s15, 0
    %p85 = por %p83, %p84
    %p86 = scmp.ne.s32.totalorder %s72, %s73
    %p87 = scmp.eq.s32.totalorder %s16, 1
    %p88 = por %p86, %p87
    %p90 = scmp.ne.s32.totalorder %s73, %s89
    %p91 = scmp.eq.s32.totalorder %s16, 0
    %p92 = por %p90, %p91
    %s93 = ssub.s32 %s18, %s32
    %p94 = scmp.eq.s32.totalorder %s93, 0
    %s96 = sadd.s32 %s95, 1
    %s97 = scalar_select %p94, %s95, %s96
    %p100 = pneg %p94
    %p101 = scmp.eq.s32.totalorder %s10, 1
    %p102 = por %p100, %p101
    %p103 = scmp.ne.s32.totalorder %s95, %s98
    %p104 = scmp.eq.s32.totalorder %s10, 0
    %p105 = por %p103, %p104
    %p106 = scmp.ne.s32.totalorder %s95, %s98
    %p107 = scmp.eq.s32.totalorder %s15, 1
    %p108 = por %p106, %p107
    %p109 = scmp.ne.s32.totalorder %s98, %s99
    %p110 = scmp.eq.s32.totalorder %s15, 0
    %p111 = por %p109, %p110
    %p112 = scmp.ne.s32.totalorder %s98, %s99
    %p113 = scmp.eq.s32.totalorder %s16, 1
    %p114 = por %p112, %p113
    %p116 = scmp.ne.s32.totalorder %s99, %s115
    %p117 = scmp.eq.s32.totalorder %s16, 0
    %p118 = por %p116, %p117
    %s119 = ssub.s32 %s17, %s36
    %s120 = ssub.s32 %s18, %s32
    %s121 = sor.u32 %s119, %s120
    %p122 = scmp.eq.s32.totalorder %s121, 0
    %s124 = sadd.s32 %s123, 1
    %s125 = scalar_select %p122, %s123, %s124
    %p128 = pneg %p122
    %p129 = scmp.eq.s32.totalorder %s10, 1
    %p130 = por %p128, %p129
    %p131 = scmp.ne.s32.totalorder %s123, %s126
    %p132 = scmp.eq.s32.totalorder %s10, 0
    %p133 = por %p131, %p132
    %p134 = scmp.ne.s32.totalorder %s123, %s126
    %p135 = scmp.eq.s32.totalorder %s15, 1
    %p136 = por %p134, %p135
    %p137 = scmp.ne.s32.totalorder %s126, %s127
    %p138 = scmp.eq.s32.totalorder %s15, 0
    %p139 = por %p137, %p138
    %p140 = scmp.ne.s32.totalorder %s126, %s127
    %p141 = scmp.eq.s32.totalorder %s16, 1
    %p142 = por %p140, %p141
    %p144 = scmp.ne.s32.totalorder %s127, %s143
    %p145 = scmp.eq.s32.totalorder %s16, 0
    %p146 = por %p144, %p145
    %s147 = ssub.s32 %s17, %s36
    %s148 = ssub.s32 %s18, %s32
    %s149 = sor.u32 %s147, %s148
    %p150 = scmp.eq.s32.totalorder %s149, 0
    %s152 = sadd.s32 %s151, 1
    %s153 = scalar_select %p150, %s151, %s152
    %p156 = pneg %p150
    %p157 = scmp.eq.s32.totalorder %s10, 1
    %p158 = por %p156, %p157
    %p159 = scmp.ne.s32.totalorder %s151, %s154
    %p160 = scmp.eq.s32.totalorder %s10, 0
    %p161 = por %p159, %p160
    %p162 = scmp.ne.s32.totalorder %s151, %s154
    %p163 = scmp.eq.s32.totalorder %s15, 1
    %p164 = por %p162, %p163
    %p165 = scmp.ne.s32.totalorder %s154, %s155
    %p166 = scmp.eq.s32.totalorder %s15, 0
    %p167 = por %p165, %p166
    %p168 = scmp.ne.s32.totalorder %s154, %s155
    %p169 = scmp.eq.s32.totalorder %s16, 1
    %p170 = por %p168, %p169
    %p172 = scmp.ne.s32.totalorder %s155, %s171
    %p173 = scmp.eq.s32.totalorder %s16, 0
    %p174 = por %p172, %p173
    %p175 = scmp.le.s32.totalorder 1, %s10
    %p176 = scmp.lt.s32.totalorder %s10, 3
    %p177 = pnand %p175, %p176
    %p178 = pneg %p177
    // Predicated region
    $region9: #{transformer_decoder_forward.24} parent=5 // pred_check
      _
    $region10: #{transformer_decoder_forward.24} parent=5 // pred_check_branch
      %180 = sbr.rel (%p177) target = $region12
    $region11: #{transformer_decoder_forward.24} parent=5 // pred_region
      %s181 = ssub.s32 %s10, 1
      // Predicated region
      $region13: #{transformer_decoder_forward.24} parent=11 // pred_check
        %p182 = pneg %p85
      $region14: #{transformer_decoder_forward.24} parent=11 // pred_check_branch
        %184 = sbr.rel (%p182) target = $region16
      $region15: #{transformer_decoder_forward.24} parent=11 // pred_region
        %s185 = smul.u32 16, %s22
        %p186 = scmp.lt.s32.totalorder %s185, 15
        %s187 = scalar_select %p186, %s185, 15
        %p188 = scmp.lt.s32.totalorder %s21, 0
        %s189 = scalar_select %p188, %s21, 0
        %s190 = sadd.s32 %s189, %s187
        %s191 = smul.addr %s190, 4
        %s192 = scalar_lea.vmem %s1, %s191
        %s193 = smul.u32 16, %s22
      $region16: #{transformer_decoder_forward.24} parent=11 // pred_fallthru
        _
      // Predicated region
      $region17: #{transformer_decoder_forward.24} parent=11 // pred_check
        %p194 = pneg %p111
      $region18: #{transformer_decoder_forward.24} parent=11 // pred_check_branch
        %196 = sbr.rel (%p194) target = $region20
      $region19: #{transformer_decoder_forward.24} parent=11 // pred_region
        %p197 = scmp.lt.s32.totalorder %s21, 0
        %s198 = scalar_select %p197, %s21, 0
        %s199 = scalar_lea.vmem %s2, %s198
      $region20: #{transformer_decoder_forward.24} parent=11 // pred_fallthru
        _
    $region12: #{transformer_decoder_forward.24} parent=5 // pred_fallthru
      _
    %p200 = scmp.lt.s32.totalorder %s10, 2
    // Predicated region
    $region21: #{transformer_decoder_forward.24} parent=5 // pred_check
      %p201 = pneg %p200
    $region22: #{transformer_decoder_forward.24} parent=5 // pred_check_branch
      %203 = sbr.rel (%p201) target = $region24
    $region23: #{transformer_decoder_forward.24} parent=5 // pred_region
      // Predicated region
      $region25: #{transformer_decoder_forward.24} parent=23 // pred_check
        %p204 = pneg %p51
      $region26: #{transformer_decoder_forward.24} parent=23 // pred_check_branch
        %206 = sbr.rel (%p204) target = $region28
      $region27: #{transformer_decoder_forward.24} parent=23 // pred_region
        %s207 = smul.u32 2, %s17
        %p208 = scmp.lt.s32.totalorder %s207, 3
        %s209 = scalar_select %p208, %s207, 3
        %p210 = scmp.lt.s32.totalorder %s19, 0
        %s211 = scalar_select %p210, %s19, 0
        %s212 = sadd.s32 %s211, %s209
        %s213 = smul.addr %s212, 8
        %s214 = scalar_lea.vmem %s0, %s213
        %s215 = smul.u32 2, %s17
      $region28: #{transformer_decoder_forward.24} parent=23 // pred_fallthru
        _
      // Predicated region
      $region29: #{transformer_decoder_forward.24} parent=23 // pred_check
        %p216 = pneg %p133
      $region30: #{transformer_decoder_forward.24} parent=23 // pred_check_branch
        %218 = sbr.rel (%p216) target = $region32
      $region31: #{transformer_decoder_forward.24} parent=23 // pred_region
        %s219 = smul.u32 2, %s17
        %p220 = scmp.lt.s32.totalorder %s219, 3
        %s221 = scalar_select %p220, %s219, 3
        %p222 = scmp.lt.s32.totalorder %s18, 0
        %s223 = scalar_select %p222, %s18, 0
        %s224 = sadd.s32 %s223, %s221
        %s225 = smul.addr %s224, 8
        %s226 = scalar_lea.vmem %s3, %s225
        %s227 = smul.u32 2, %s17
      $region32: #{transformer_decoder_forward.24} parent=23 // pred_fallthru
        _
    $region24: #{transformer_decoder_forward.24} parent=5 // pred_fallthru
      _
    %p228 = scmp.le.s32.totalorder 1, %s10
    %p229 = scmp.lt.s32.totalorder %s10, 3
    %p230 = pnand %p228, %p229
    %p231 = pneg %p230
    // Predicated region
    $region33: #{transformer_decoder_forward.24} parent=5 // pred_check
      _
    $region34: #{transformer_decoder_forward.24} parent=5 // pred_check_branch
      %233 = sbr.rel (%p230) target = $region36
    $region35: #{transformer_decoder_forward.24} parent=5 // pred_region
      %s234 = ssub.s32 %s10, 1
      %s235 = smul.u32 2, %s20
      %p236 = scmp.lt.s32.totalorder %s235, 3
      %s237 = scalar_select %p236, %s235, 3
      %p238 = scmp.lt.s32.totalorder %s22, 0
      %s239 = scalar_select %p238, %s22, 0
      %s240 = sadd.s32 %s239, %s237
      %s241 = smul.addr %s240, 8
      %s242 = scalar_lea.vmem %s0, %s241
      %p243 = pneg %p57
      %p244 = pneg %p54
      %s245 = smul.u32 16, %s22
      %p246 = scmp.lt.s32.totalorder %s245, 15
      %s247 = scalar_select %p246, %s245, 15
      %p248 = scmp.lt.s32.totalorder %s21, 0
      %s249 = scalar_select %p248, %s21, 0
      %s250 = sadd.s32 %s249, %s247
      %s251 = smul.addr %s250, 4
      %s252 = scalar_lea.vmem %s1, %s251
      %p253 = pneg %p85
      %p254 = pneg %p82
      %p255 = scmp.lt.s32.totalorder %s21, 0
      %s256 = scalar_select %p255, %s21, 0
      %s257 = scalar_lea.vmem %s2, %s256
      %p258 = pneg %p111
      %p259 = pneg %p108
      %s260 = smul.u32 2, %s20
      %p261 = scmp.lt.s32.totalorder %s260, 3
      %s262 = scalar_select %p261, %s260, 3
      %p263 = scmp.lt.s32.totalorder %s21, 0
      %s264 = scalar_select %p263, %s21, 0
      %s265 = sadd.s32 %s264, %s262
      %s266 = smul.addr %s265, 8
      %s267 = scalar_lea.vmem %s3, %s266
      %p268 = pneg %p139
      %p269 = pneg %p136
      %p270 = pneg %p167
      %p271 = pneg %p164
      %s272 = smul.u32 2, %s20
      %p273 = scmp.lt.s32.totalorder %s272, 3
      %s274 = scalar_select %p273, %s272, 3
      %p275 = scmp.lt.s32.totalorder %s21, 0
      %s276 = scalar_select %p275, %s21, 0
      %s277 = sadd.s32 %s276, %s274
      %s278 = smul.addr %s277, 8
      %s279 = scalar_lea.vmem %s4, %s278
      %s280 = smul.u32 2, %s20
      %p281 = scmp.lt.s32.totalorder %s280, 3
      %s282 = scalar_select %p281, %s280, 3
      %p283 = scmp.lt.s32.totalorder %s22, 0
      %s284 = scalar_select %p283, %s22, 0
      %s285 = sadd.s32 %s284, %s282
      %s286 = smul.addr %s285, 8
      %s287 = scalar_lea.vmem %s0, %s286
      %s288 = smul.u32 2, %s20
      %s289 = smul.u32 16, %s22
      %p290 = scmp.lt.s32.totalorder %s289, 15
      %s291 = scalar_select %p290, %s289, 15
      %p292 = scmp.lt.s32.totalorder %s21, 0
      %s293 = scalar_select %p292, %s21, 0
      %s294 = sadd.s32 %s293, %s291
      %s295 = smul.addr %s294, 4
      %s296 = scalar_lea.vmem %s1, %s295
      %s297 = smul.u32 16, %s22
      %p298 = scmp.lt.s32.totalorder %s21, 0
      %s299 = scalar_select %p298, %s21, 0
      %s300 = scalar_lea.vmem %s2, %s299
      %s301 = smul.u32 2, %s20
      %p302 = scmp.lt.s32.totalorder %s301, 3
      %s303 = scalar_select %p302, %s301, 3
      %p304 = scmp.lt.s32.totalorder %s21, 0
      %s305 = scalar_select %p304, %s21, 0
      %s306 = sadd.s32 %s305, %s303
      %s307 = smul.addr %s306, 8
      %s308 = scalar_lea.vmem %s3, %s307
      %s309 = smul.u32 2, %s20
      %s310 = smul.u32 2, %s20
      %p311 = scmp.lt.s32.totalorder %s310, 3
      %s312 = scalar_select %p311, %s310, 3
      %p313 = scmp.lt.s32.totalorder %s21, 0
      %s314 = scalar_select %p313, %s21, 0
      %s315 = sadd.s32 %s314, %s312
      %s316 = smul.addr %s315, 8
      %s317 = scalar_lea.vmem %s4, %s316
      %s318 = smul.u32 2, %s20
      %p320 = scmp.eq.s32.totalorder %s22, 0
      // Predicated region
      $region37: #{transformer_decoder_forward.24} parent=35 // pred_check
        %p321 = pneg %p320
      $region38: #{transformer_decoder_forward.24} parent=35 // pred_check_branch
        %323 = sbr.rel (%p321) target = $region40
      $region39: #{transformer_decoder_forward.24} parent=35 // pred_region
        %vm324 = vcmask 523264
        %325 = vst.msk [vmem:[#allocation2] sm:$0xff] %vm324, 0.0
        %326 = vst.msk [vmem:[#allocation2 + $0x8] sm:$0xff] %vm324, 0.0
      $region40: #{transformer_decoder_forward.24} parent=35 // pred_fallthru
        _
      %v327 = vld [vmem:[#allocation2] sm:$0xff]
      %v328 = vld [vmem:[#allocation2 + $0x8] sm:$0xff]
      %v329 = vld [vmem:[%s287] sm:$0xff]
      %v330 = vld [vmem:[%s287 + $0x8] sm:$0xff]
      %v331 = vpack.c.bf16 %v330, %v329
      %v332 = vld [vmem:[%s296] sm:$0xf]
      %v333 = vld [vmem:[%s296 + $0x4] sm:$0xf]
      %v334 = vld [vmem:[%s296 + $0x8] sm:$0xf]
      %v335 = vld [vmem:[%s296 + $0xc] sm:$0xf]
      %v336 = vld [vmem:[%s296 + $0x10] sm:$0xf]
      %v337 = vld [vmem:[%s296 + $0x14] sm:$0xf]
      %v338 = vld [vmem:[%s296 + $0x18] sm:$0xf]
      %v339 = vld [vmem:[%s296 + $0x1c] sm:$0xf]
      %v340 = vld [vmem:[%s296 + $0x20] sm:$0xf]
      %v341 = vld [vmem:[%s296 + $0x24] sm:$0xf]
      %v342 = vld [vmem:[%s296 + $0x28] sm:$0xf]
      %v343 = vld [vmem:[%s296 + $0x2c] sm:$0xf]
      %v344 = vld [vmem:[%s296 + $0x30] sm:$0xf]
      %v345 = vld [vmem:[%s296 + $0x34] sm:$0xf]
      %v346 = vld [vmem:[%s296 + $0x38] sm:$0xf]
      %v347 = vld [vmem:[%s296 + $0x3c] sm:$0xf]
      %v364 = vunpack.c.l.b16 %v332
      %v365 = vunpack.c.l.b16 %v333
      %v366 = vunpack.c.l.b16 %v334
      %v367 = vunpack.c.l.b16 %v335
      %v368 = vunpack.c.l.b16 %v336
      %v369 = vunpack.c.l.b16 %v337
      %v370 = vunpack.c.l.b16 %v338
      %v371 = vunpack.c.l.b16 %v339
      %v372 = vunpack.c.l.b16 %v340
      %v373 = vunpack.c.l.b16 %v341
      %v374 = vunpack.c.l.b16 %v342
      %v375 = vunpack.c.l.b16 %v343
      %v376 = vunpack.c.l.b16 %v344
      %v377 = vunpack.c.l.b16 %v345
      %v378 = vunpack.c.l.b16 %v346
      %v379 = vunpack.c.l.b16 %v347
      %v380 = vpack.c.b16 %v365, %v364
      %v381 = vpack.c.b16 %v367, %v366
      %v382 = vpack.c.b16 %v369, %v368
      %v383 = vpack.c.b16 %v371, %v370
      %v384 = vpack.c.b16 %v373, %v372
      %v385 = vpack.c.b16 %v375, %v374
      %v386 = vpack.c.b16 %v377, %v376
      %v387 = vpack.c.b16 %v379, %v378
      %396 = vmatprep.subr.bf16.mxu0 0
      %397 = vmatpush1.bf16.msra.mxu0 %v380
      %398 = vmatprep.subr.bf16.mxu0 0
      %399 = vmatpush1.bf16.msra.mxu0 %v381
      %400 = vmatprep.subr.bf16.mxu0 0
      %401 = vmatpush1.bf16.msra.mxu0 %v382
      %402 = vmatprep.subr.bf16.mxu0 0
      %403 = vmatpush1.bf16.msra.mxu0 %v383
      %404 = vmatprep.subr.bf16.mxu0 0
      %405 = vmatpush1.bf16.msra.mxu0 %v384
      %406 = vmatprep.subr.bf16.mxu0 0
      %407 = vmatpush1.bf16.msra.mxu0 %v385
      %408 = vmatprep.subr.bf16.mxu0 0
      %409 = vmatpush1.bf16.msra.mxu0 %v386
      %410 = vmatprep.subr.bf16.mxu0 0
      %411 = vmatpush1.bf16.msra.mxu0 %v387
      %412 = vmatprep.subr.bf16.mxu0 0
      %413 = vmatpush1.bf16.msra.mxu0 0
      %414 = vmatprep.subr.bf16.mxu0 0
      %415 = vmatpush1.bf16.msra.mxu0 0
      %416 = vmatprep.subr.bf16.mxu0 0
      %417 = vmatpush1.bf16.msra.mxu0 0
      %418 = vmatprep.subr.bf16.mxu0 0
      %419 = vmatpush1.bf16.msra.mxu0 0
      %420 = vmatprep.subr.bf16.mxu0 0
      %421 = vmatpush1.bf16.msra.mxu0 0
      %422 = vmatprep.subr.bf16.mxu0 0
      %423 = vmatpush1.bf16.msra.mxu0 0
      %424 = vmatprep.subr.bf16.mxu0 0
      %425 = vmatpush1.bf16.msra.mxu0 0
      %426 = vmatprep.subr.bf16.mxu0 0
      %427 = vmatpush1.bf16.msra.mxu0 0
      %428 = vmatprep.mubr.bf16.mxu0 0
      %429 = vmatmul.mubr.bf16.gmra.mrb[0].mxu0 %v331
      %v430 = vpop.f32.mrb[0].mxu0
      %v431 = vadd.f32 0.0, %v430
      %v432 = vpop.f32.mrb[0].mxu0
      %v433 = vpop.f32.mrb[0].mxu0
      %v434 = vadd.f32 0.0, %v433
      %v435 = vpop.f32.mrb[0].mxu0
      %436 = vdwg.mxu0
      %v437 = vadd.f32 %v327, %v431
      %v438 = vadd.f32 %v328, %v434
      %vm439 = vcmask 523264
      %440 = vst.msk [vmem:[#allocation2] sm:$0xff] %vm439, %v437
      %441 = vst.msk [vmem:[#allocation2 + $0x8] sm:$0xff] %vm439, %v438
      // Predicated region
      $region41: #{transformer_decoder_forward.24} parent=35 // pred_check
        %p442 = pneg %p320
      $region42: #{transformer_decoder_forward.24} parent=35 // pred_check_branch
        %444 = sbr.rel (%p442) target = $region44
      $region43: #{transformer_decoder_forward.24} parent=35 // pred_region
        %v445 = vld [vmem:[#allocation2] sm:$0xff]
        %v446 = vld [vmem:[#allocation2 + $0x8] sm:$0xff]
        %v447 = vld [vmem:[%s300] sm:$0x1]
        %v449 = vlaneseq
        %v450 = vshrl.u32 %v449, 7
        %v451 = vsub.s32 0, %v450
        %v452 = vrot.slane %v447, %v451
        %v454 = vadd.f32 %v445, %v452
        %v455 = vadd.f32 %v446, %v452
        %v456 = vld [vmem:[%s308] sm:$0xff]
        %v457 = vld [vmem:[%s308 + $0x8] sm:$0xff]
        %v458 = vadd.f32 %v454, %v456
        %v459 = vadd.f32 %v455, %v457
        %460 = vst.msk [vmem:[%s317] sm:$0xff] %vm439, %v458
        %461 = vst.msk [vmem:[%s317 + $0x8] sm:$0xff] %vm439, %v459
      $region44: #{transformer_decoder_forward.24} parent=35 // pred_fallthru
        _
      %s462 = smul.u32 2, %s20
      %p463 = scmp.lt.s32.totalorder %s462, 3
      %s464 = scalar_select %p463, %s462, 3
      %p465 = scmp.lt.s32.totalorder %s21, 0
      %s466 = scalar_select %p465, %s21, 0
      %s467 = sadd.s32 %s466, %s464
      %s468 = smul.addr %s467, 8
      %s469 = scalar_lea.vmem %s4, %s468
      // Predicated region
      $region45: #{transformer_decoder_forward.24} parent=35 // pred_check
        %p470 = pneg %p164
      $region46: #{transformer_decoder_forward.24} parent=35 // pred_check_branch
        %472 = sbr.rel (%p470) target = $region48
      $region47: #{transformer_decoder_forward.24} parent=35 // pred_region
        %s473 = smul.u32 2, %s20
      $region48: #{transformer_decoder_forward.24} parent=35 // pred_fallthru
        _
    $region36: #{transformer_decoder_forward.24} parent=5 // pred_fallthru
      _
    %p474 = scmp.le.s32.totalorder 2, %s10
    // Predicated region
    $region49: #{transformer_decoder_forward.24} parent=5 // pred_check
      %p475 = pneg %p474
    $region50: #{transformer_decoder_forward.24} parent=5 // pred_check_branch
      %477 = sbr.rel (%p475) target = $region52
    $region51: #{transformer_decoder_forward.24} parent=5 // pred_region
      %s478 = ssub.s32 %s10, 2
      // Predicated region
      $region53: #{transformer_decoder_forward.24} parent=51 // pred_check
        %p479 = pneg %p170
      $region54: #{transformer_decoder_forward.24} parent=51 // pred_check_branch
        %481 = sbr.rel (%p479) target = $region56
      $region55: #{transformer_decoder_forward.24} parent=51 // pred_region
        %s482 = smul.u32 2, %s23
        %p483 = scmp.lt.s32.totalorder %s482, 3
        %s484 = scalar_select %p483, %s482, 3
        %p485 = scmp.lt.s32.totalorder %s24, 0
        %s486 = scalar_select %p485, %s24, 0
        %s487 = sadd.s32 %s486, %s484
        %s488 = smul.addr %s487, 8
        %s489 = scalar_lea.vmem %s4, %s488
      $region56: #{transformer_decoder_forward.24} parent=51 // pred_fallthru
        _
    $region52: #{transformer_decoder_forward.24} parent=5 // pred_fallthru
      _
  $region6: #{transformer_decoder_forward.24} parent=0 // loop_footer
    %s14 = sadd.s32 1, %s10
  $region7: #{transformer_decoder_forward.24} parent=0 // loop_footer_branch
    %9 = sbr.rel target = $region3
  $region8: #{transformer_decoder_forward.24} parent=0 // loop_exit
    _

// kernel: transformer_decoder_forward.33
$region0: #{transformer_decoder_forward.33}
  #allocation0 [shape = 'u32[]', space=smem, size = 0x4, offset = 0x4, fixed_abs, tag = 'smem constant byte address 0x4 - core index']
  #allocation1 [shape = 'u32[144,128]{1,0:T(1,128)}', space=vmem, size = 0x12000, scoped, tag = 'internal scratch']
  %s0 = inlined_call_operand.vmem [shape: f32[32,64], index: 0, kind: input, shape index: {}]
  %s1 = inlined_call_operand.vmem [shape: f32[1,64], index: 1, kind: input, shape index: {}]
  %s2 = inlined_call_operand.vmem [shape: f32[1,64], index: 2, kind: input, shape index: {}]
  %s3 = inlined_call_operand.hbm [shape: f32[32,64], index: 3, kind: output, shape index: {}]
  %s4 = sld [smem:[#allocation0]]
  $region45: #{transformer_decoder_forward.33} parent=0
    _
  %s6 = ssub.s32 1, %s4
  %s7 = scalar_select 0, %s6, %s4
  $region1: #{transformer_decoder_forward.33} parent=0
    #allocation2 [shape = 'u8[16384]{0}', space=vmem, size = 0x4000, scoped, tag = 'output window, operand 0']
    #allocation3 [shape = 's32[2]{0}', space=sflag, size = 0x8, scoped, tag = 'scoped memory for transformer_decoder_forward.33']
    %8 = vsyncpa [#allocation3], 0
    %s9 = scalar_lea.sflag [#allocation3], 1
    %10 = vsyncpa %s9, 0
    loop: start=0, step=1, limit=4
    $region2: #{transformer_decoder_forward.33} parent=1 // loop_pre_header
      _
    $region3: #{transformer_decoder_forward.33} parent=1 // loop_header
      %s12 = sphi 0, %s16
      %p13 = scmp.ge.s32.totalorder %s12, 4
      %s22 = sphi 0, %s24
      %s25 = sphi 0, %s22
      %s26 = sphi 0, %s25
      %s42 = sphi 0, %s26
      %s46 = sphi 0, %s46
      %s48 = sphi 0, %s46
      %s49 = sphi 0, %s48
      %s63 = sphi 0, %s49
      %s67 = sphi 0, %s67
      %s69 = sphi 0, %s67
      %s70 = sphi 0, %s69
      %s84 = sphi 0, %s70
      %s90 = sphi 0, %s92
      %s93 = sphi 0, %s90
      %s94 = sphi 0, %s93
      %s110 = sphi 0, %s94
    $region4: #{transformer_decoder_forward.33} parent=1 // loop_header_branch
      %15 = sbr.rel (%p13) target = $region8
    $region5: #{transformer_decoder_forward.33} parent=1 // loop_body
      %s17 = ssub.s32 %s12, 1
      %s18 = ssub.s32 %s12, 2
      %s19 = sadd.s32 %s12, 1
      %s20 = ssub.s32 %s12, %s19
      %p21 = scmp.eq.s32.totalorder %s20, 0
      %s23 = sadd.s32 %s22, 1
      %s24 = scalar_select %p21, %s22, %s23
      %p27 = pneg %p21
      %p28 = scmp.eq.s32.totalorder %s12, 1
      %p29 = por %p27, %p28
      %p30 = scmp.ne.s32.totalorder %s22, %s25
      %p31 = scmp.eq.s32.totalorder %s12, 0
      %p32 = por %p30, %p31
      %p33 = scmp.ne.s32.totalorder %s22, %s25
      %p34 = scmp.eq.s32.totalorder %s17, 1
      %p35 = por %p33, %p34
      %p36 = scmp.ne.s32.totalorder %s25, %s26
      %p37 = scmp.eq.s32.totalorder %s17, 0
      %p38 = por %p36, %p37
      %p39 = scmp.ne.s32.totalorder %s25, %s26
      %p40 = scmp.eq.s32.totalorder %s18, 1
      %p41 = por %p39, %p40
      %p43 = scmp.ne.s32.totalorder %s26, %s42
      %p44 = scmp.eq.s32.totalorder %s18, 0
      %p45 = por %p43, %p44
      %s47 = sadd.s32 %s46, 1
      %p50 = scmp.eq.s32.totalorder %s12, 1
      %p51 = scmp.ne.s32.totalorder %s46, %s48
      %p52 = scmp.eq.s32.totalorder %s12, 0
      %p53 = por %p51, %p52
      %p54 = scmp.ne.s32.totalorder %s46, %s48
      %p55 = scmp.eq.s32.totalorder %s17, 1
      %p56 = por %p54, %p55
      %p57 = scmp.ne.s32.totalorder %s48, %s49
      %p58 = scmp.eq.s32.totalorder %s17, 0
      %p59 = por %p57, %p58
      %p60 = scmp.ne.s32.totalorder %s48, %s49
      %p61 = scmp.eq.s32.totalorder %s18, 1
      %p62 = por %p60, %p61
      %p64 = scmp.ne.s32.totalorder %s49, %s63
      %p65 = scmp.eq.s32.totalorder %s18, 0
      %p66 = por %p64, %p65
      %s68 = sadd.s32 %s67, 1
      %p71 = scmp.eq.s32.totalorder %s12, 1
      %p72 = scmp.ne.s32.totalorder %s67, %s69
      %p73 = scmp.eq.s32.totalorder %s12, 0
      %p74 = por %p72, %p73
      %p75 = scmp.ne.s32.totalorder %s67, %s69
      %p76 = scmp.eq.s32.totalorder %s17, 1
      %p77 = por %p75, %p76
      %p78 = scmp.ne.s32.totalorder %s69, %s70
      %p79 = scmp.eq.s32.totalorder %s17, 0
      %p80 = por %p78, %p79
      %p81 = scmp.ne.s32.totalorder %s69, %s70
      %p82 = scmp.eq.s32.totalorder %s18, 1
      %p83 = por %p81, %p82
      %p85 = scmp.ne.s32.totalorder %s70, %s84
      %p86 = scmp.eq.s32.totalorder %s18, 0
      %p87 = por %p85, %p86
      %s88 = ssub.s32 %s12, %s19
      %p89 = scmp.eq.s32.totalorder %s88, 0
      %s91 = sadd.s32 %s90, 1
      %s92 = scalar_select %p89, %s90, %s91
      %p95 = pneg %p89
      %p96 = scmp.eq.s32.totalorder %s12, 1
      %p97 = por %p95, %p96
      %p98 = scmp.ne.s32.totalorder %s90, %s93
      %p99 = scmp.eq.s32.totalorder %s12, 0
      %p100 = por %p98, %p99
      %p101 = scmp.ne.s32.totalorder %s90, %s93
      %p102 = scmp.eq.s32.totalorder %s17, 1
      %p103 = por %p101, %p102
      %p104 = scmp.ne.s32.totalorder %s93, %s94
      %p105 = scmp.eq.s32.totalorder %s17, 0
      %p106 = por %p104, %p105
      %p107 = scmp.ne.s32.totalorder %s93, %s94
      %p108 = scmp.eq.s32.totalorder %s18, 1
      %p109 = por %p107, %p108
      %p111 = scmp.ne.s32.totalorder %s94, %s110
      %p112 = scmp.eq.s32.totalorder %s18, 0
      %p113 = por %p111, %p112
      %p114 = scmp.le.s32.totalorder 1, %s12
      %p115 = scmp.lt.s32.totalorder %s12, 3
      %p116 = pnand %p114, %p115
      %p117 = pneg %p116
      // Predicated region
      $region9: #{transformer_decoder_forward.33} parent=5 // pred_check
        _
      $region10: #{transformer_decoder_forward.33} parent=5 // pred_check_branch
        %119 = sbr.rel (%p116) target = $region12
      $region11: #{transformer_decoder_forward.33} parent=5 // pred_region
        %s120 = ssub.s32 %s12, 1
        // Predicated region
        $region13: #{transformer_decoder_forward.33} parent=11 // pred_check
          %p121 = pneg %p59
        $region14: #{transformer_decoder_forward.33} parent=11 // pred_check_branch
          %123 = sbr.rel (%p121) target = $region16
        $region15: #{transformer_decoder_forward.33} parent=11 // pred_region
          _
        $region16: #{transformer_decoder_forward.33} parent=11 // pred_fallthru
          _
        // Predicated region
        $region17: #{transformer_decoder_forward.33} parent=11 // pred_check
          %p124 = pneg %p80
        $region18: #{transformer_decoder_forward.33} parent=11 // pred_check_branch
          %126 = sbr.rel (%p124) target = $region20
        $region19: #{transformer_decoder_forward.33} parent=11 // pred_region
          _
        $region20: #{transformer_decoder_forward.33} parent=11 // pred_fallthru
          _
      $region12: #{transformer_decoder_forward.33} parent=5 // pred_fallthru
        _
      %p127 = scmp.lt.s32.totalorder %s12, 2
      // Predicated region
      $region21: #{transformer_decoder_forward.33} parent=5 // pred_check
        %p128 = pneg %p127
      $region22: #{transformer_decoder_forward.33} parent=5 // pred_check_branch
        %130 = sbr.rel (%p128) target = $region24
      $region23: #{transformer_decoder_forward.33} parent=5 // pred_region
        // Predicated region
        $region25: #{transformer_decoder_forward.33} parent=23 // pred_check
          %p131 = pneg %p32
        $region26: #{transformer_decoder_forward.33} parent=23 // pred_check_branch
          %133 = sbr.rel (%p131) target = $region28
        $region27: #{transformer_decoder_forward.33} parent=23 // pred_region
          %s134 = smul.u32 2, %s12
          %p135 = scmp.lt.s32.totalorder %s134, 3
          %s136 = scalar_select %p135, %s134, 3
          %s137 = smul.addr %s136, 8
          %s138 = scalar_lea.vmem %s0, %s137
          %s139 = smul.u32 2, %s12
        $region28: #{transformer_decoder_forward.33} parent=23 // pred_fallthru
          _
      $region24: #{transformer_decoder_forward.33} parent=5 // pred_fallthru
        _
      %p140 = scmp.le.s32.totalorder 1, %s12
      %p141 = scmp.lt.s32.totalorder %s12, 3
      %p142 = pnand %p140, %p141
      %p143 = pneg %p142
      // Predicated region
      $region29: #{transformer_decoder_forward.33} parent=5 // pred_check
        _
      $region30: #{transformer_decoder_forward.33} parent=5 // pred_check_branch
        %145 = sbr.rel (%p142) target = $region32
      $region31: #{transformer_decoder_forward.33} parent=5 // pred_region
        %s146 = ssub.s32 %s12, 1
        %s147 = smul.u32 2, %s17
        %p148 = scmp.lt.s32.totalorder %s147, 3
        %s149 = scalar_select %p148, %s147, 3
        %s150 = smul.addr %s149, 8
        %s151 = scalar_lea.vmem %s0, %s150
        %p152 = pneg %p38
        %p153 = pneg %p35
        %p154 = pneg %p59
        %p155 = pneg %p56
        %p156 = pneg %p80
        %p157 = pneg %p77
        %p158 = pneg %p106
        %p159 = pneg %p103
        %s160 = sand.u32 %s93, 1
        %s161 = scalar_lea.sflag [#allocation3], %s160
        %s162 = sand.u32 %s93, 1
        %s163 = smul.addr %s162, 16
        %s164 = scalar_lea.vmem [#allocation2], %s163
        %s165 = smul.u32 2, %s17
        %p166 = scmp.lt.s32.totalorder %s165, 3
        %s167 = scalar_select %p166, %s165, 3
        %s168 = smul.addr %s167, 8
        %s169 = scalar_lea.vmem %s0, %s168
        %s170 = smul.u32 2, %s17
        %s171 = smul.u32 2, %s17
        %v172 = vld [vmem:[%s169] sm:$0xff]
        %v173 = vld [vmem:[%s169 + $0x8] sm:$0xff]
        %vm174 = vcmask 523264
        %v175 = vsel %vm174, %v172, 0.0
        %176 = vadd.xlane.f32.xlu0 %v175
        %v177 = vpop.xlane.xlu0 %176
        %v178 = vsel %vm174, %v173, 0.0
        %179 = vadd.xlane.f32.xlu0 %v178
        %v180 = vpop.xlane.xlu0 %179
        %v181 = vrcp.pop 64.0
        %v182 = vmul.f32 %v177, %v181
        %v183 = vmul.f32 %v180, %v181
        %v184 = vsub.f32 %v172, %v182
        %v185 = vsub.f32 %v173, %v183
        %v186 = vmul.f32 %v184, %v184
        %v187 = vmul.f32 %v185, %v185
        %v188 = vsel %vm174, %v186, 0.0
        %189 = vadd.xlane.f32.xlu0 %v188
        %v190 = vpop.xlane.xlu0 %189
        %v191 = vsel %vm174, %v187, 0.0
        %192 = vadd.xlane.f32.xlu0 %v191
        %v193 = vpop.xlane.xlu0 %192
        %v194 = vmul.f32 %v190, %v181
        %v195 = vmul.f32 %v193, %v181
        %v196 = vadd.f32 %v194, 1e-05
        %v197 = vadd.f32 %v195, 1e-05
        %v198 = vrsqrt.pop %v196
        %v199 = vrsqrt.pop %v197
        %v200 = vmul.f32 %v184, %v198
        %v201 = vmul.f32 %v185, %v199
        %v202 = vld [vmem:[%s1] sm:$0x1]
        %v204 = vlaneseq
        %v205 = vshrl.u32 %v204, 7
        %v206 = vsub.s32 0, %v205
        %v207 = vrot.slane %v202, %v206
        %v209 = vmul.f32 %v200, %v207
        %v210 = vmul.f32 %v201, %v207
        %v211 = vld [vmem:[%s2] sm:$0x1]
        %v213 = vlaneseq
        %v214 = vshrl.u32 %v213, 7
        %v215 = vsub.s32 0, %v214
        %v216 = vrot.slane %v211, %v215
        %v218 = vadd.f32 %v209, %v216
        %v219 = vadd.f32 %v210, %v216
        %220 = vst.msk [vmem:[%s164] sm:$0xff] %vm174, %v218
        %221 = vst.msk [vmem:[%s164 + $0x8] sm:$0xff] %vm174, %v219
        %s222 = sand.u32 %s93, 1
        %s223 = scalar_lea.sflag [#allocation3], %s222
        %s224 = sand.u32 %s93, 1
        %s225 = smul.addr %s224, 16
        %s226 = scalar_lea.vmem [#allocation2], %s225
        // Predicated region
        $region33: #{transformer_decoder_forward.33} parent=31 // pred_check
          %p227 = pneg %p103
        $region34: #{transformer_decoder_forward.33} parent=31 // pred_check_branch
          %229 = sbr.rel (%p227) target = $region36
        $region35: #{transformer_decoder_forward.33} parent=31 // pred_region
          %s230 = smul.u32 2, %s17
          %s232 = ssub.s32 256, 256
          %233 = vsyncadd %s223, %s232
          %s234 = smul.addr %s230, 128
          %s235 = scalar_lea.hbm %s3, %s234
          %s236 = sshll.u32 %s226, 4
          %s237 = int_to_ptr.vmem [resolvable:$true] %s236
          %242 = dma.vmem_to_hbm [thread:$0]  %s237, 256, %s235, %s223, 128, 128, 8
        $region36: #{transformer_decoder_forward.33} parent=31 // pred_fallthru
          _
      $region32: #{transformer_decoder_forward.33} parent=5 // pred_fallthru
        _
      %p243 = scmp.le.s32.totalorder 2, %s12
      // Predicated region
      $region37: #{transformer_decoder_forward.33} parent=5 // pred_check
        %p244 = pneg %p243
      $region38: #{transformer_decoder_forward.33} parent=5 // pred_check_branch
        %246 = sbr.rel (%p244) target = $region40
      $region39: #{transformer_decoder_forward.33} parent=5 // pred_region
        %s247 = ssub.s32 %s12, 2
        // Predicated region
        $region41: #{transformer_decoder_forward.33} parent=39 // pred_check
          %p248 = pneg %p109
        $region42: #{transformer_decoder_forward.33} parent=39 // pred_check_branch
          %250 = sbr.rel (%p248) target = $region44
        $region43: #{transformer_decoder_forward.33} parent=39 // pred_region
          %s251 = sand.u32 %s94, 1
          %s252 = scalar_lea.sflag [#allocation3], %s251
          %s253 = sand.u32 %s94, 1
          %s254 = smul.addr %s253, 16
          %s255 = scalar_lea.vmem [#allocation2], %s254
          %256 = dma.done %s252, 256
        $region44: #{transformer_decoder_forward.33} parent=39 // pred_fallthru
          _
      $region40: #{transformer_decoder_forward.33} parent=5 // pred_fallthru
        _
    $region6: #{transformer_decoder_forward.33} parent=1 // loop_footer
      %s16 = sadd.s32 1, %s12
    $region7: #{transformer_decoder_forward.33} parent=1 // loop_footer_branch
      %11 = sbr.rel target = $region3
    $region8: #{transformer_decoder_forward.33} parent=1 // loop_exit
      _
    %257 = vsyncpa [#allocation3], 1
    %s258 = scalar_lea.sflag [#allocation3], 1
    %259 = vsyncpa %s258, 1

</llo_original>
